<compile_context>
chip_gen: v6e
topology: v6e:2x2x1
jax: 0.10.0
libtpu: 0.0.40
codegen_flags: <defaults>
</compile_context>

<pallas_src>
import jax
import jax.numpy as jnp
import numpy as np
from jax.experimental import pallas as pl
from jax.experimental.pallas import tpu as pltpu

# ---------------- model hyperparameters (small, consistent with __init__) ----------------
NUM_CLASSES = 10
FLOWSTATS_IN = 16
PPI_C = 4
PPI_LEN = 30                # fixed by the architecture
CNN_PPI_OUTPUT_LEN = 10     # fixed by the architecture
C1, C2, C3 = 32, 32, 32     # cnn_ppi_channels1/2/3
NUM_BLOCKS = 3              # cnn_ppi_num_blocks
M1, M2 = 32, 32             # mlp_flowstats_size1/2
MLP_FLOWSTATS_HIDDEN = 2    # mlp_flowstats_num_hidden
SHARED = 64                 # mlp_shared_size
GEM_P = 3.0
GEM_EPS = 1e-6
BN_EPS = 1e-5
BATCH = 2

# Lane-packing width: NB samples share the lane (channel) axis via block-diag
# weights.  Use 4 on v5e / 8 on v6e+ for larger batches; here B=2 -> NB=2.
NB = 2
CLS_PAD = 64                # per-sample class padding -> NB*CLS_PAD = 128 lane-dense output

# bf16 matmul operands (f32 accumulate) -- native MXU dtype on v6e/v7x, fine on v5e.
MATMUL_DTYPE = jnp.bfloat16
REL_TOL = 5e-2 if MATMUL_DTYPE == jnp.bfloat16 else 2e-3

# conv stack: Conv(k7,p3)+ReLU+BN, 3x[Conv(k5,p2)+ReLU+BN], Conv(k5)+ReLU+BN,
#             Conv(k5)+ReLU+BN, Conv(k4,s2)+ReLU     (lengths 30->30->30->26->22->10)
CONV_CFG = (
    [dict(c_in=PPI_C, c_out=C1, k=7, stride=1, pad=3, bn=True)]
    + [dict(c_in=C1, c_out=C1, k=5, stride=1, pad=2, bn=True) for _ in range(NUM_BLOCKS)]
    + [dict(c_in=C1, c_out=C2, k=5, stride=1, pad=0, bn=True),
       dict(c_in=C2, c_out=C2, k=5, stride=1, pad=0, bn=True),
       dict(c_in=C2, c_out=C3, k=4, stride=2, pad=0, bn=False)]
)
N_CONV = len(CONV_CFG)                  # 7
N_FS = 1 + MLP_FLOWSTATS_HIDDEN + 1     # 4 flowstats MLP layers


def _final_conv_stride1_len():
    L = PPI_LEN
    lf = L
    for cfg in CONV_CFG:
        lf = L + 2 * cfg["pad"] - cfg["k"] + 1
        L = lf if cfg["stride"] == 1 else (lf - 1) // cfg["stride"] + 1
    assert L == CNN_PPI_OUTPUT_LEN
    return lf


L_FULL_LAST = _final_conv_stride1_len()             # 19 stride-1 rows of the last conv
IM2COL0_W = CONV_CFG[0]["k"] * NB * PPI_C            # 56

# row layout of the packed (V_ROWS, NB*32) per-layer vector table
V_CB = 0                      # conv bias            rows  0..6
V_CS = V_CB + N_CONV          # conv BN scale        rows  7..13
V_CT = V_CS + N_CONV          # conv BN shift        rows 14..20
V_PS = V_CT + N_CONV          # pool BN scale        row  21
V_PT = V_PS + 1               # pool BN shift        row  22
V_GP = V_PT + 1               # GeM p                row  23
V_GIP = V_GP + 1              # GeM 1/p (exact)      row  24
V_FB = V_GIP + 1              # flowstats bias       rows 25..28
V_FSC = V_FB + N_FS           # flowstats BN scale   rows 29..32
V_FSH = V_FSC + N_FS          # flowstats BN shift   rows 33..36
V_ROWS = V_FSH + N_FS         # 37


# ---------------- the fused Pallas kernel (NB lane-packed samples per grid step) ----------------
def _cesnet_kernel(ppi_ref, flow_ref,
                   w0_ref, wmid_ref, wlast_ref, sel_ref, veca_ref,
                   fw0_ref, fwr_ref, shw_ref, vecsh_ref, clw_ref, clb_ref,
                   out_ref):
    f32 = jnp.float32
    mm = MATMUL_DTYPE

    def row(r):                                   # (1, NB*32) f32 per-layer vector
        return veca_ref[r:r + 1, :]

    # ---- cnn_ppi layer 0: im2col prebuilt at data-prep time -> one matmul ----
    acc = jnp.dot(ppi_ref[0].astype(mm), w0_ref[...], preferred_element_type=f32)
    x = jnp.maximum(acc + row(V_CB), 0.0) * row(V_CS) + row(V_CT)      # (30, NB*C1)

    # ---- cnn_ppi layers 1..6: fused-tap im2col -> ONE matmul per conv layer ----
    for li in range(1, N_CONV):
        cfg = CONV_CFG[li]
        k, pad = cfg["k"], cfg["pad"]
        if pad:                                   # zero-pad along length, in VMEM
            z = jnp.zeros((pad, x.shape[1]), f32)
            x = jnp.concatenate([z, x, z], axis=0)
        l_full = x.shape[0] - k + 1
        # lane-concatenate the k shifted slices; cast to bf16 ONCE per layer
        lhs = jnp.concatenate([x[kk:kk + l_full, :] for kk in range(k)],
                              axis=-1).astype(mm)            # (l_full, k*NB*C_in)
        if cfg["stride"] > 1:
            # stride-2: exact 0/1 row-select packed once at prep time (bf16)
            lhs = jnp.dot(sel_ref[...], lhs, preferred_element_type=f32).astype(mm)
        w = wmid_ref[li - 1] if li < N_CONV - 1 else wlast_ref[...]
        acc = jnp.dot(lhs, w, preferred_element_type=f32)
        y = jnp.maximum(acc + row(V_CB + li), 0.0)           # bias + ReLU
        if cfg["bn"]:                                        # eval-mode BN affine
            y = y * row(V_CS + li) + row(V_CT + li)
        x = y                                                # (l_out, NB*C_out) f32

    # ---- cnn_global_pooling: GeM (p and 1/p precomputed) + BatchNorm affine ----
    xp = jnp.exp(jnp.log(jnp.maximum(x, GEM_EPS)) * row(V_GP))   # clamp(min=eps) ** p
    m = jnp.mean(xp, axis=0, keepdims=True)                      # (1, NB*C3)
    g = jnp.exp(jnp.log(m) * row(V_GIP))                         # ** (1/p), exact 1/p
    g = g * row(V_PS) + row(V_PT)                                # pool BatchNorm1d

    # ---- mlp_flowstats: 4x (Linear -> ReLU -> BatchNorm) on lane-packed rows ----
    f = flow_ref[0]                                              # (1, NB*F) f32
    for j in range(N_FS):
        w = fw0_ref[...] if j == 0 else fwr_ref[j - 1]
        y = jnp.dot(f.astype(mm), w, preferred_element_type=f32)
        y = jnp.maximum(y + row(V_FB + j), 0.0)
        f = y * row(V_FSC + j) + row(V_FSH + j)

    # ---- mlp_shared: torch column_stack == lane concat (block-diag packed weight) ----
    hin = jnp.concatenate([g, f], axis=-1).astype(mm)            # (1, NB*(C3+M2)) = (1,128)
    pre = jnp.dot(hin, shw_ref[...], preferred_element_type=f32) + vecsh_ref[0:1, :]
    h = jnp.maximum(pre, 0.0) * vecsh_ref[1:2, :] + vecsh_ref[2:3, :]

    # ---- classifier; class dim padded per sample -> lane-dense (1, 128) store ----
    logits = jnp.dot(h.astype(mm), clw_ref[...], preferred_element_type=f32) + clb_ref[...]
    out_ref[0] = logits


def _bcast_spec(shape):
    """Full-array block, same block for every grid step (fetched once)."""
    nd = len(shape)
    return pl.BlockSpec(shape, lambda g, _nd=nd: (0,) * _nd)


def pallas_forward(packed, ppi_im2col, flow_packed):
    G = ppi_im2col.shape[0]                      # batch groups of NB lane-packed samples
    out = pl.pallas_call(
        _cesnet_kernel,
        out_shape=jax.ShapeDtypeStruct((G, 1, NB * CLS_PAD), jnp.float32),
        grid_spec=pltpu.PrefetchScalarGridSpec(
            num_scalar_prefetch=0,
            grid=(G,),
            in_specs=[
                pl.BlockSpec((1, PPI_LEN, IM2COL0_W), lambda g: (g, 0, 0)),
                pl.BlockSpec((1, 1, NB * FLOWSTATS_IN), lambda g: (g, 0, 0)),
                _bcast_spec(packed["w0"].shape),
                _bcast_spec(packed["wmid"].shape),
                _bcast_spec(packed["wlast"].shape),
                _bcast_spec(packed["sel"].shape),
                _bcast_spec(packed["veca"].shape),
                _bcast_spec(packed["fw0"].shape),
                _bcast_spec(packed["fwr"].shape),
                _bcast_spec(packed["shw"].shape),
                _bcast_spec(packed["vecsh"].shape),
                _bcast_spec(packed["clw"].shape),
                _bcast_spec(packed["clb"].shape),
            ],
            out_specs=pl.BlockSpec((1, 1, NB * CLS_PAD), lambda g: (g, 0, 0)),
        ),
        compiler_params=pltpu.CompilerParams(
            dimension_semantics=("parallel",)),   # megacore split across groups on v7x
    )(ppi_im2col, flow_packed, packed["w0"], packed["wmid"], packed["wlast"],
      packed["sel"], packed["veca"], packed["fw0"], packed["fwr"],
      packed["shw"], packed["vecsh"], packed["clw"], packed["clb"])
    # unpack lanes -> (B, CLS_PAD) and drop the class padding
    return out.reshape(G * NB, CLS_PAD)[:, :NUM_CLASSES]


# ---------------- one-time DATA-PREP (layout only) ----------------
def prepare_inputs(ppi_ncl, flowstats):
    """Lane-pack NB samples into the channel axis and prebuild the first conv's
    im2col so the kernel's input DMA is dense and conv-0 is a single matmul."""
    B = ppi_ncl.shape[0]
    assert B % NB == 0, "BATCH must be a multiple of the lane-pack width NB"
    G = B // NB
    k0, pad0 = CONV_CFG[0]["k"], CONV_CFG[0]["pad"]
    x = jnp.transpose(ppi_ncl, (0, 2, 1))                        # (B, L, C) channels-last
    x = x.reshape(G, NB, PPI_LEN, PPI_C)
    x = jnp.transpose(x, (0, 2, 1, 3)).reshape(G, PPI_LEN, NB * PPI_C)   # lane index = b*C + c
    z = jnp.zeros((G, pad0, NB * PPI_C), x.dtype)
    xp = jnp.concatenate([z, x, z], axis=1)                      # (G, L + 2*pad, NB*C)
    im2col0 = jnp.concatenate([xp[:, kk:kk + PPI_LEN, :] for kk in range(k0)], axis=-1)
    flow_p = flowstats.reshape(G, NB * FLOWSTATS_IN)[:, None, :]  # (G, 1, NB*F)
    return im2col0, flow_p


# ---------------- parameter prep (done ONCE, not per forward) ----------------
def bn_affine(bn):
    scale = bn["gamma"] / jnp.sqrt(bn["var"] + BN_EPS)
    shift = bn["beta"] - bn["mean"] * scale
    return scale, shift


def _blockdiag_conv_weight(w_oik, nb):
    """torch Conv1d weight (O, I, K) -> lane-packed im2col weight (K*nb*I, nb*O)."""
    w = np.asarray(w_oik, np.float32)
    O, I, K = w.shape
    wt = np.transpose(w, (2, 1, 0))                              # (K, I, O)
    wp = np.zeros((K * nb * I, nb * O), np.float32)
    for kk in range(K):
        for b in range(nb):
            r0 = kk * nb * I + b * I
            wp[r0:r0 + I, b * O:(b + 1) * O] = wt[kk]
    return wp


def _blockdiag_linear_weight(w_oi, nb):
    """torch Linear weight (O, I) -> block-diagonal (nb*I, nb*O)."""
    w = np.asarray(w_oi, np.float32)
    O, I = w.shape
    wp = np.zeros((nb * I, nb * O), np.float32)
    for b in range(nb):
        wp[b * I:(b + 1) * I, b * O:(b + 1) * O] = w.T
    return wp


def _blockdiag_shared_weight(w_oi, nb, c_cnn, c_fs):
    """Shared-MLP weight for input = lane_concat([cnn packed, flowstats packed])."""
    w = np.asarray(w_oi, np.float32)                             # (O, c_cnn + c_fs)
    O = w.shape[0]
    wp = np.zeros((nb * (c_cnn + c_fs), nb * O), np.float32)
    for b in range(nb):
        wp[b * c_cnn:(b + 1) * c_cnn, b * O:(b + 1) * O] = w[:, :c_cnn].T
        wp[nb * c_cnn + b * c_fs: nb * c_cnn + (b + 1) * c_fs, b * O:(b + 1) * O] = w[:, c_cnn:].T
    return wp


def _blockdiag_classifier(w_oi, b_o, nb, out_pad):
    w = np.asarray(w_oi, np.float32)
    b = np.asarray(b_o, np.float32)
    O, I = w.shape
    wp = np.zeros((nb * I, nb * out_pad), np.float32)
    bp = np.zeros((1, nb * out_pad), np.float32)
    for bb in range(nb):
        wp[bb * I:(bb + 1) * I, bb * out_pad:bb * out_pad + O] = w.T
        bp[0, bb * out_pad:bb * out_pad + O] = b
    return wp, bp


def pack_params(params):
    mm = MATMUL_DTYPE
    nb = NB

    def tile(v):                                                 # (C,) -> (nb*C,), [b*C + c] = v[c]
        return np.tile(np.asarray(v, np.float32), nb)

    cnn = params["cnn"]
    w0 = jnp.asarray(_blockdiag_conv_weight(cnn[0]["w"], nb), mm)                  # (56, 64)
    wmid = jnp.stack([jnp.asarray(_blockdiag_conv_weight(cnn[i]["w"], nb), mm)
                      for i in range(1, N_CONV - 1)])                              # (5, 320, 64)
    wlast = jnp.asarray(_blockdiag_conv_weight(cnn[N_CONV - 1]["w"], nb), mm)      # (256, 64)

    conv_b = [tile(cnn[i]["b"]) for i in range(N_CONV)]
    conv_s, conv_t = [], []
    for i, cfg in enumerate(CONV_CFG):
        if cfg["bn"]:
            s, t = bn_affine(cnn[i])
        else:  # last conv has no BN; rows present but never applied in the kernel
            s = np.ones((cfg["c_out"],), np.float32)
            t = np.zeros((cfg["c_out"],), np.float32)
        conv_s.append(tile(s))
        conv_t.append(tile(t))

    pool_s, pool_t = bn_affine(params["pool_bn"])
    p_val = float(params["gem_p"][0])

    fs = params["mlp_flowstats"]
    fs_b = [tile(fs[j]["b"]) for j in range(N_FS)]
    fs_s = [tile(bn_affine(fs[j])[0]) for j in range(N_FS)]
    fs_t = [tile(bn_affine(fs[j])[1]) for j in range(N_FS)]

    veca = np.stack(
        conv_b + conv_s + conv_t
        + [tile(pool_s), tile(pool_t),
           np.full((nb * C3,), p_val, np.float32),
           np.full((nb * C3,), 1.0 / p_val, np.float32)]   # exact 1/p, no approx reciprocal
        + fs_b + fs_s + fs_t).astype(np.float32)
    assert veca.shape == (V_ROWS, nb * C1)

    fw0 = jnp.asarray(_blockdiag_linear_weight(fs[0]["w"], nb), mm)                # (32, 64)
    fwr = jnp.stack([jnp.asarray(_blockdiag_linear_weight(fs[j]["w"], nb), mm)
                     for j in range(1, N_FS)])                                     # (3, 64, 64)

    sh = params["mlp_shared"][0]
    shw = jnp.asarray(_blockdiag_shared_weight(sh["w"], nb, C3, M2), mm)           # (128, 128)
    sh_s, sh_t = bn_affine(sh)
    vecsh = np.stack([tile(sh["b"]), tile(sh_s), tile(sh_t)]).astype(np.float32)   # (3, 128)

    cls = params["classifier"]
    clw_np, clb_np = _blockdiag_classifier(cls["w"], cls["b"], nb, CLS_PAD)
    clw = jnp.asarray(clw_np, mm)                                                  # (128, 128)
    clb = jnp.asarray(clb_np, jnp.float32)                                         # (1, 128)

    # exact 0/1 row-select for the stride-2 conv, packed once (bf16, not per-step iota/where)
    sel_np = np.zeros((CNN_PPI_OUTPUT_LEN, L_FULL_LAST), np.float32)
    sel_np[np.arange(CNN_PPI_OUTPUT_LEN), 2 * np.arange(CNN_PPI_OUTPUT_LEN)] = 1.0
    sel = jnp.asarray(sel_np, mm)

    return dict(w0=w0, wmid=wmid, wlast=wlast, sel=sel,
                veca=jnp.asarray(veca), fw0=fw0, fwr=fwr,
                shw=shw, vecsh=jnp.asarray(vecsh), clw=clw, clb=clb)


# ---------------- deterministic parameter init ----------------
def _make_bn(key, n):
    k1, k2, k3, k4 = jax.random.split(key, 4)
    return dict(
        gamma=1.0 + 0.1 * jax.random.normal(k1, (n,), jnp.float32),
        beta=0.1 * jax.random.normal(k2, (n,), jnp.float32),
        mean=0.1 * jax.random.normal(k3, (n,), jnp.float32),
        var=1.0 + 0.1 * jax.random.uniform(k4, (n,), jnp.float32),
    )


def _make_conv(key, c_in, c_out, k, bn):
    kw, kb, kn = jax.random.split(key, 3)
    std = float(np.sqrt(2.0 / (c_in * k)))
    p = dict(
        w=std * jax.random.normal(kw, (c_out, c_in, k), jnp.float32),   # torch layout (O, I, K)
        b=0.05 * jax.random.normal(kb, (c_out,), jnp.float32),
    )
    if bn:
        p.update(_make_bn(kn, c_out))
    return p


def _make_linear(key, fin, fout, bn):
    kw, kb, kn = jax.random.split(key, 3)
    std = float(np.sqrt(2.0 / fin))
    p = dict(
        w=std * jax.random.normal(kw, (fout, fin), jnp.float32),        # torch layout (out, in)
        b=0.05 * jax.random.normal(kb, (fout,), jnp.float32),
    )
    if bn:
        p.update(_make_bn(kn, fout))
    return p


def init_params(key):
    keys = iter(jax.random.split(key, 64))
    params = {}
    params["cnn"] = [_make_conv(next(keys), c["c_in"], c["c_out"], c["k"], c["bn"])
                     for c in CONV_CFG]
    params["gem_p"] = jnp.array([GEM_P], jnp.float32)
    params["pool_bn"] = _make_bn(next(keys), C3)
    fs_dims = [(FLOWSTATS_IN, M1)] + [(M1, M1)] * MLP_FLOWSTATS_HIDDEN + [(M1, M2)]
    params["mlp_flowstats"] = [_make_linear(next(keys), a, b, True) for a, b in fs_dims]
    params["mlp_shared"] = [_make_linear(next(keys), C3 + M2, SHARED, True)]
    params["classifier"] = _make_linear(next(keys), SHARED, NUM_CLASSES, False)
    return params


# ---------------- pure-JAX f32 reference (NCL, like PyTorch) for checking ----------------
def reference_forward(params, ppi_ncl, flowstats):
    x = ppi_ncl
    for cfg, pr in zip(CONV_CFG, params["cnn"]):
        x = jax.lax.conv_general_dilated(
            x, pr["w"], window_strides=(cfg["stride"],),
            padding=[(cfg["pad"], cfg["pad"])],
            dimension_numbers=("NCH", "OIH", "NCH")) + pr["b"][None, :, None]
        x = jnp.maximum(x, 0.0)
        if cfg["bn"]:
            sc, sh = bn_affine(pr)
            x = x * sc[None, :, None] + sh[None, :, None]
    p = params["gem_p"][0]
    g = jnp.mean(jnp.power(jnp.maximum(x, GEM_EPS), p), axis=2) ** (1.0 / p)
    sc, sh = bn_affine(params["pool_bn"])
    g = g * sc + sh
    f = flowstats
    for pr in params["mlp_flowstats"]:
        sc, sh = bn_affine(pr)
        f = jnp.maximum(f @ pr["w"].T + pr["b"], 0.0) * sc + sh
    h = jnp.concatenate([g, f], axis=1)
    for pr in params["mlp_shared"]:
        sc, sh = bn_affine(pr)
        h = jnp.maximum(h @ pr["w"].T + pr["b"], 0.0) * sc + sh
    cls = params["classifier"]
    return h @ cls["w"].T + cls["b"]


if __name__ == "__main__":
    key = jax.random.PRNGKey(0)
    kp, ki1, ki2 = jax.random.split(key, 3)
    params = init_params(kp)
    packed = pack_params(params)                                  # one-time weight prep
    ppi = jax.random.normal(ki1, (BATCH, PPI_C, PPI_LEN), jnp.float32)   # NCL like PyTorch
    flowstats = jax.random.normal(ki2, (BATCH, FLOWSTATS_IN), jnp.float32)

    # one-time input layout prep (lane-packing + conv-0 im2col), outside the hot path
    ppi_p, flow_p = prepare_inputs(ppi, flowstats)

    fwd = jax.jit(pallas_forward)
    out = jax.block_until_ready(fwd(packed, ppi_p, flow_p))
    assert out.shape == (BATCH, NUM_CLASSES)
    assert bool(jnp.all(jnp.isfinite(out)))

    # correctness vs an f32 pure-JAX reference; tolerance sized for bf16 MXU operands
    ref = reference_forward(params, ppi, flowstats)
    rel_err = float(jnp.max(jnp.abs(out - ref)) / (jnp.max(jnp.abs(ref)) + 1e-9))
    assert rel_err < REL_TOL, f"relative error too large: {rel_err}"

    print("KERNEL_OK")
</pallas_src>

<mosaic_0001>
module attributes {stable_mosaic.version = 11 : i64} {
  func.func @_cesnet_kernel(%arg0: i32, %arg1: memref<1x30x56xf32, #tpu.memory_space<vmem>>, %arg2: memref<1x1x32xf32, #tpu.memory_space<vmem>>, %arg3: memref<56x64xbf16, #tpu.memory_space<vmem>>, %arg4: memref<5x320x64xbf16, #tpu.memory_space<vmem>>, %arg5: memref<256x64xbf16, #tpu.memory_space<vmem>>, %arg6: memref<10x19xbf16, #tpu.memory_space<vmem>>, %arg7: memref<37x64xf32, #tpu.memory_space<vmem>>, %arg8: memref<32x64xbf16, #tpu.memory_space<vmem>>, %arg9: memref<3x64x64xbf16, #tpu.memory_space<vmem>>, %arg10: memref<128x128xbf16, #tpu.memory_space<vmem>>, %arg11: memref<3x128xf32, #tpu.memory_space<vmem>>, %arg12: memref<128x128xbf16, #tpu.memory_space<vmem>>, %arg13: memref<1x128xf32, #tpu.memory_space<vmem>>, %arg14: memref<1x1x128xf32, #tpu.memory_space<vmem>>) attributes {dimension_semantics = [#tpu.dimension_semantics<parallel>], iteration_bounds = array<i64: 1>, scalar_prefetch = 0 : i64, scratch_operands = 0 : i64, tpu.core_type = #tpu.core_type<tc>, window_params = [{transform_indices = @transform_0, window_bounds = array<i64: 1, 30, 56>}, {transform_indices = @transform_1, window_bounds = array<i64: 1, 1, 32>}, {pipeline_mode = #tpu.pipeline_mode<synchronous>, transform_indices = @transform_2, window_bounds = array<i64: 56, 64>}, {pipeline_mode = #tpu.pipeline_mode<synchronous>, transform_indices = @transform_3, window_bounds = array<i64: 5, 320, 64>}, {pipeline_mode = #tpu.pipeline_mode<synchronous>, transform_indices = @transform_4, window_bounds = array<i64: 256, 64>}, {pipeline_mode = #tpu.pipeline_mode<synchronous>, transform_indices = @transform_5, window_bounds = array<i64: 10, 19>}, {pipeline_mode = #tpu.pipeline_mode<synchronous>, transform_indices = @transform_6, window_bounds = array<i64: 37, 64>}, {pipeline_mode = #tpu.pipeline_mode<synchronous>, transform_indices = @transform_7, window_bounds = array<i64: 32, 64>}, {pipeline_mode = #tpu.pipeline_mode<synchronous>, transform_indices = @transform_8, window_bounds = array<i64: 3, 64, 64>}, {pipeline_mode = #tpu.pipeline_mode<synchronous>, transform_indices = @transform_9, window_bounds = array<i64: 128, 128>}, {pipeline_mode = #tpu.pipeline_mode<synchronous>, transform_indices = @transform_10, window_bounds = array<i64: 3, 128>}, {pipeline_mode = #tpu.pipeline_mode<synchronous>, transform_indices = @transform_11, window_bounds = array<i64: 128, 128>}, {pipeline_mode = #tpu.pipeline_mode<synchronous>, transform_indices = @transform_12, window_bounds = array<i64: 1, 128>}, {transform_indices = @transform_13, window_bounds = array<i64: 1, 1, 128>}]} {
    %c0 = arith.constant 0 : index
    %c0_0 = arith.constant 0 : index
    %c0_1 = arith.constant 0 : index
    %0 = vector.load %arg1[%c0, %c0_0, %c0_1] : memref<1x30x56xf32, #tpu.memory_space<vmem>>, vector<1x30x56xf32>
    %1 = vector.shape_cast %0 : vector<1x30x56xf32> to vector<30x56xf32>
    %2 = arith.truncf %1 : vector<30x56xf32> to vector<30x56xbf16>
    %c0_2 = arith.constant 0 : index
    %c0_3 = arith.constant 0 : index
    %3 = vector.load %arg3[%c0_2, %c0_3] : memref<56x64xbf16, #tpu.memory_space<vmem>>, vector<56x64xbf16>
    %cst = arith.constant dense<0.000000e+00> : vector<30x64xf32>
    %4 = tpu.matmul %2, %3, %cst {dimension_numbers = #tpu.dot_dimension_numbers<[1], [0], [0], [1], [0, 0, 1, 1], [], []>} : vector<30x56xbf16>, vector<56x64xbf16>, vector<30x64xf32> -> vector<30x64xf32>
    %c0_4 = arith.constant 0 : index
    %c0_5 = arith.constant 0 : index
    %5 = vector.load %arg7[%c0_4, %c0_5] : memref<37x64xf32, #tpu.memory_space<vmem>>, vector<1x64xf32>
    %6 = vector.broadcast %5 : vector<1x64xf32> to vector<30x64xf32>
    %7 = arith.addf %4, %6 : vector<30x64xf32>
    %cst_6 = arith.constant 0.000000e+00 : f32
    %8 = vector.broadcast %cst_6 : f32 to vector<30x64xf32>
    %9 = arith.maximumf %7, %8 : vector<30x64xf32>
    %c7 = arith.constant 7 : index
    %c0_7 = arith.constant 0 : index
    %10 = vector.load %arg7[%c7, %c0_7] : memref<37x64xf32, #tpu.memory_space<vmem>>, vector<1x64xf32>
    %11 = vector.broadcast %10 : vector<1x64xf32> to vector<30x64xf32>
    %12 = arith.mulf %9, %11 : vector<30x64xf32>
    %c14 = arith.constant 14 : index
    %c0_8 = arith.constant 0 : index
    %13 = vector.load %arg7[%c14, %c0_8] : memref<37x64xf32, #tpu.memory_space<vmem>>, vector<1x64xf32>
    %14 = vector.broadcast %13 : vector<1x64xf32> to vector<30x64xf32>
    %15 = arith.addf %12, %14 : vector<30x64xf32>
    %cst_9 = arith.constant 0.000000e+00 : f32
    %16 = vector.broadcast %cst_9 : f32 to vector<2x64xf32>
    %17 = tpu.concatenate %16, %15, %16 in 0 : vector<2x64xf32>, vector<30x64xf32>, vector<2x64xf32> -> vector<34x64xf32>
    %18 = vector.extract_strided_slice %17 {offsets = [0, 0], sizes = [30, 64], strides = [1, 1]} : vector<34x64xf32> to vector<30x64xf32>
    %19 = vector.extract_strided_slice %17 {offsets = [1, 0], sizes = [30, 64], strides = [1, 1]} : vector<34x64xf32> to vector<30x64xf32>
    %20 = vector.extract_strided_slice %17 {offsets = [2, 0], sizes = [30, 64], strides = [1, 1]} : vector<34x64xf32> to vector<30x64xf32>
    %21 = vector.extract_strided_slice %17 {offsets = [3, 0], sizes = [30, 64], strides = [1, 1]} : vector<34x64xf32> to vector<30x64xf32>
    %22 = vector.extract_strided_slice %17 {offsets = [4, 0], sizes = [30, 64], strides = [1, 1]} : vector<34x64xf32> to vector<30x64xf32>
    %23 = tpu.concatenate %18, %19, %20, %21, %22 in 1 : vector<30x64xf32>, vector<30x64xf32>, vector<30x64xf32>, vector<30x64xf32>, vector<30x64xf32> -> vector<30x320xf32>
    %24 = arith.truncf %23 : vector<30x320xf32> to vector<30x320xbf16>
    %c0_10 = arith.constant 0 : index
    %c0_11 = arith.constant 0 : index
    %c0_12 = arith.constant 0 : index
    %25 = vector.load %arg4[%c0_10, %c0_11, %c0_12] : memref<5x320x64xbf16, #tpu.memory_space<vmem>>, vector<1x320x64xbf16>
    %26 = vector.shape_cast %25 : vector<1x320x64xbf16> to vector<320x64xbf16>
    %cst_13 = arith.constant dense<0.000000e+00> : vector<30x64xf32>
    %27 = tpu.matmul %24, %26, %cst_13 {dimension_numbers = #tpu.dot_dimension_numbers<[1], [0], [0], [1], [0, 0, 1, 1], [], []>} : vector<30x320xbf16>, vector<320x64xbf16>, vector<30x64xf32> -> vector<30x64xf32>
    %c1 = arith.constant 1 : index
    %c0_14 = arith.constant 0 : index
    %28 = vector.load %arg7[%c1, %c0_14] : memref<37x64xf32, #tpu.memory_space<vmem>>, vector<1x64xf32>
    %29 = vector.broadcast %28 : vector<1x64xf32> to vector<30x64xf32>
    %30 = arith.addf %27, %29 : vector<30x64xf32>
    %cst_15 = arith.constant 0.000000e+00 : f32
    %31 = vector.broadcast %cst_15 : f32 to vector<30x64xf32>
    %32 = arith.maximumf %30, %31 : vector<30x64xf32>
    %c8 = arith.constant 8 : index
    %c0_16 = arith.constant 0 : index
    %33 = vector.load %arg7[%c8, %c0_16] : memref<37x64xf32, #tpu.memory_space<vmem>>, vector<1x64xf32>
    %34 = vector.broadcast %33 : vector<1x64xf32> to vector<30x64xf32>
    %35 = arith.mulf %32, %34 : vector<30x64xf32>
    %c15 = arith.constant 15 : index
    %c0_17 = arith.constant 0 : index
    %36 = vector.load %arg7[%c15, %c0_17] : memref<37x64xf32, #tpu.memory_space<vmem>>, vector<1x64xf32>
    %37 = vector.broadcast %36 : vector<1x64xf32> to vector<30x64xf32>
    %38 = arith.addf %35, %37 : vector<30x64xf32>
    %cst_18 = arith.constant 0.000000e+00 : f32
    %39 = vector.broadcast %cst_18 : f32 to vector<2x64xf32>
    %40 = tpu.concatenate %39, %38, %39 in 0 : vector<2x64xf32>, vector<30x64xf32>, vector<2x64xf32> -> vector<34x64xf32>
    %41 = vector.extract_strided_slice %40 {offsets = [0, 0], sizes = [30, 64], strides = [1, 1]} : vector<34x64xf32> to vector<30x64xf32>
    %42 = vector.extract_strided_slice %40 {offsets = [1, 0], sizes = [30, 64], strides = [1, 1]} : vector<34x64xf32> to vector<30x64xf32>
    %43 = vector.extract_strided_slice %40 {offsets = [2, 0], sizes = [30, 64], strides = [1, 1]} : vector<34x64xf32> to vector<30x64xf32>
    %44 = vector.extract_strided_slice %40 {offsets = [3, 0], sizes = [30, 64], strides = [1, 1]} : vector<34x64xf32> to vector<30x64xf32>
    %45 = vector.extract_strided_slice %40 {offsets = [4, 0], sizes = [30, 64], strides = [1, 1]} : vector<34x64xf32> to vector<30x64xf32>
    %46 = tpu.concatenate %41, %42, %43, %44, %45 in 1 : vector<30x64xf32>, vector<30x64xf32>, vector<30x64xf32>, vector<30x64xf32>, vector<30x64xf32> -> vector<30x320xf32>
    %47 = arith.truncf %46 : vector<30x320xf32> to vector<30x320xbf16>
    %c1_19 = arith.constant 1 : index
    %c0_20 = arith.constant 0 : index
    %c0_21 = arith.constant 0 : index
    %48 = vector.load %arg4[%c1_19, %c0_20, %c0_21] : memref<5x320x64xbf16, #tpu.memory_space<vmem>>, vector<1x320x64xbf16>
    %49 = vector.shape_cast %48 : vector<1x320x64xbf16> to vector<320x64xbf16>
    %cst_22 = arith.constant dense<0.000000e+00> : vector<30x64xf32>
    %50 = tpu.matmul %47, %49, %cst_22 {dimension_numbers = #tpu.dot_dimension_numbers<[1], [0], [0], [1], [0, 0, 1, 1], [], []>} : vector<30x320xbf16>, vector<320x64xbf16>, vector<30x64xf32> -> vector<30x64xf32>
    %c2 = arith.constant 2 : index
    %c0_23 = arith.constant 0 : index
    %51 = vector.load %arg7[%c2, %c0_23] : memref<37x64xf32, #tpu.memory_space<vmem>>, vector<1x64xf32>
    %52 = vector.broadcast %51 : vector<1x64xf32> to vector<30x64xf32>
    %53 = arith.addf %50, %52 : vector<30x64xf32>
    %cst_24 = arith.constant 0.000000e+00 : f32
    %54 = vector.broadcast %cst_24 : f32 to vector<30x64xf32>
    %55 = arith.maximumf %53, %54 : vector<30x64xf32>
    %c9 = arith.constant 9 : index
    %c0_25 = arith.constant 0 : index
    %56 = vector.load %arg7[%c9, %c0_25] : memref<37x64xf32, #tpu.memory_space<vmem>>, vector<1x64xf32>
    %57 = vector.broadcast %56 : vector<1x64xf32> to vector<30x64xf32>
    %58 = arith.mulf %55, %57 : vector<30x64xf32>
    %c16 = arith.constant 16 : index
    %c0_26 = arith.constant 0 : index
    %59 = vector.load %arg7[%c16, %c0_26] : memref<37x64xf32, #tpu.memory_space<vmem>>, vector<1x64xf32>
    %60 = vector.broadcast %59 : vector<1x64xf32> to vector<30x64xf32>
    %61 = arith.addf %58, %60 : vector<30x64xf32>
    %cst_27 = arith.constant 0.000000e+00 : f32
    %62 = vector.broadcast %cst_27 : f32 to vector<2x64xf32>
    %63 = tpu.concatenate %62, %61, %62 in 0 : vector<2x64xf32>, vector<30x64xf32>, vector<2x64xf32> -> vector<34x64xf32>
    %64 = vector.extract_strided_slice %63 {offsets = [0, 0], sizes = [30, 64], strides = [1, 1]} : vector<34x64xf32> to vector<30x64xf32>
    %65 = vector.extract_strided_slice %63 {offsets = [1, 0], sizes = [30, 64], strides = [1, 1]} : vector<34x64xf32> to vector<30x64xf32>
    %66 = vector.extract_strided_slice %63 {offsets = [2, 0], sizes = [30, 64], strides = [1, 1]} : vector<34x64xf32> to vector<30x64xf32>
    %67 = vector.extract_strided_slice %63 {offsets = [3, 0], sizes = [30, 64], strides = [1, 1]} : vector<34x64xf32> to vector<30x64xf32>
    %68 = vector.extract_strided_slice %63 {offsets = [4, 0], sizes = [30, 64], strides = [1, 1]} : vector<34x64xf32> to vector<30x64xf32>
    %69 = tpu.concatenate %64, %65, %66, %67, %68 in 1 : vector<30x64xf32>, vector<30x64xf32>, vector<30x64xf32>, vector<30x64xf32>, vector<30x64xf32> -> vector<30x320xf32>
    %70 = arith.truncf %69 : vector<30x320xf32> to vector<30x320xbf16>
    %c2_28 = arith.constant 2 : index
    %c0_29 = arith.constant 0 : index
    %c0_30 = arith.constant 0 : index
    %71 = vector.load %arg4[%c2_28, %c0_29, %c0_30] : memref<5x320x64xbf16, #tpu.memory_space<vmem>>, vector<1x320x64xbf16>
    %72 = vector.shape_cast %71 : vector<1x320x64xbf16> to vector<320x64xbf16>
    %cst_31 = arith.constant dense<0.000000e+00> : vector<30x64xf32>
    %73 = tpu.matmul %70, %72, %cst_31 {dimension_numbers = #tpu.dot_dimension_numbers<[1], [0], [0], [1], [0, 0, 1, 1], [], []>} : vector<30x320xbf16>, vector<320x64xbf16>, vector<30x64xf32> -> vector<30x64xf32>
    %c3 = arith.constant 3 : index
    %c0_32 = arith.constant 0 : index
    %74 = vector.load %arg7[%c3, %c0_32] : memref<37x64xf32, #tpu.memory_space<vmem>>, vector<1x64xf32>
    %75 = vector.broadcast %74 : vector<1x64xf32> to vector<30x64xf32>
    %76 = arith.addf %73, %75 : vector<30x64xf32>
    %cst_33 = arith.constant 0.000000e+00 : f32
    %77 = vector.broadcast %cst_33 : f32 to vector<30x64xf32>
    %78 = arith.maximumf %76, %77 : vector<30x64xf32>
    %c10 = arith.constant 10 : index
    %c0_34 = arith.constant 0 : index
    %79 = vector.load %arg7[%c10, %c0_34] : memref<37x64xf32, #tpu.memory_space<vmem>>, vector<1x64xf32>
    %80 = vector.broadcast %79 : vector<1x64xf32> to vector<30x64xf32>
    %81 = arith.mulf %78, %80 : vector<30x64xf32>
    %c17 = arith.constant 17 : index
    %c0_35 = arith.constant 0 : index
    %82 = vector.load %arg7[%c17, %c0_35] : memref<37x64xf32, #tpu.memory_space<vmem>>, vector<1x64xf32>
    %83 = vector.broadcast %82 : vector<1x64xf32> to vector<30x64xf32>
    %84 = arith.addf %81, %83 : vector<30x64xf32>
    %85 = vector.extract_strided_slice %84 {offsets = [0, 0], sizes = [26, 64], strides = [1, 1]} : vector<30x64xf32> to vector<26x64xf32>
    %86 = vector.extract_strided_slice %84 {offsets = [1, 0], sizes = [26, 64], strides = [1, 1]} : vector<30x64xf32> to vector<26x64xf32>
    %87 = vector.extract_strided_slice %84 {offsets = [2, 0], sizes = [26, 64], strides = [1, 1]} : vector<30x64xf32> to vector<26x64xf32>
    %88 = vector.extract_strided_slice %84 {offsets = [3, 0], sizes = [26, 64], strides = [1, 1]} : vector<30x64xf32> to vector<26x64xf32>
    %89 = vector.extract_strided_slice %84 {offsets = [4, 0], sizes = [26, 64], strides = [1, 1]} : vector<30x64xf32> to vector<26x64xf32>
    %90 = tpu.concatenate %85, %86, %87, %88, %89 in 1 : vector<26x64xf32>, vector<26x64xf32>, vector<26x64xf32>, vector<26x64xf32>, vector<26x64xf32> -> vector<26x320xf32>
    %91 = arith.truncf %90 : vector<26x320xf32> to vector<26x320xbf16>
    %c3_36 = arith.constant 3 : index
    %c0_37 = arith.constant 0 : index
    %c0_38 = arith.constant 0 : index
    %92 = vector.load %arg4[%c3_36, %c0_37, %c0_38] : memref<5x320x64xbf16, #tpu.memory_space<vmem>>, vector<1x320x64xbf16>
    %93 = vector.shape_cast %92 : vector<1x320x64xbf16> to vector<320x64xbf16>
    %cst_39 = arith.constant dense<0.000000e+00> : vector<26x64xf32>
    %94 = tpu.matmul %91, %93, %cst_39 {dimension_numbers = #tpu.dot_dimension_numbers<[1], [0], [0], [1], [0, 0, 1, 1], [], []>} : vector<26x320xbf16>, vector<320x64xbf16>, vector<26x64xf32> -> vector<26x64xf32>
    %c4 = arith.constant 4 : index
    %c0_40 = arith.constant 0 : index
    %95 = vector.load %arg7[%c4, %c0_40] : memref<37x64xf32, #tpu.memory_space<vmem>>, vector<1x64xf32>
    %96 = vector.broadcast %95 : vector<1x64xf32> to vector<26x64xf32>
    %97 = arith.addf %94, %96 : vector<26x64xf32>
    %cst_41 = arith.constant 0.000000e+00 : f32
    %98 = vector.broadcast %cst_41 : f32 to vector<26x64xf32>
    %99 = arith.maximumf %97, %98 : vector<26x64xf32>
    %c11 = arith.constant 11 : index
    %c0_42 = arith.constant 0 : index
    %100 = vector.load %arg7[%c11, %c0_42] : memref<37x64xf32, #tpu.memory_space<vmem>>, vector<1x64xf32>
    %101 = vector.broadcast %100 : vector<1x64xf32> to vector<26x64xf32>
    %102 = arith.mulf %99, %101 : vector<26x64xf32>
    %c18 = arith.constant 18 : index
    %c0_43 = arith.constant 0 : index
    %103 = vector.load %arg7[%c18, %c0_43] : memref<37x64xf32, #tpu.memory_space<vmem>>, vector<1x64xf32>
    %104 = vector.broadcast %103 : vector<1x64xf32> to vector<26x64xf32>
    %105 = arith.addf %102, %104 : vector<26x64xf32>
    %106 = vector.extract_strided_slice %105 {offsets = [0, 0], sizes = [22, 64], strides = [1, 1]} : vector<26x64xf32> to vector<22x64xf32>
    %107 = vector.extract_strided_slice %105 {offsets = [1, 0], sizes = [22, 64], strides = [1, 1]} : vector<26x64xf32> to vector<22x64xf32>
    %108 = vector.extract_strided_slice %105 {offsets = [2, 0], sizes = [22, 64], strides = [1, 1]} : vector<26x64xf32> to vector<22x64xf32>
    %109 = vector.extract_strided_slice %105 {offsets = [3, 0], sizes = [22, 64], strides = [1, 1]} : vector<26x64xf32> to vector<22x64xf32>
    %110 = vector.extract_strided_slice %105 {offsets = [4, 0], sizes = [22, 64], strides = [1, 1]} : vector<26x64xf32> to vector<22x64xf32>
    %111 = tpu.concatenate %106, %107, %108, %109, %110 in 1 : vector<22x64xf32>, vector<22x64xf32>, vector<22x64xf32>, vector<22x64xf32>, vector<22x64xf32> -> vector<22x320xf32>
    %112 = arith.truncf %111 : vector<22x320xf32> to vector<22x320xbf16>
    %c4_44 = arith.constant 4 : index
    %c0_45 = arith.constant 0 : index
    %c0_46 = arith.constant 0 : index
    %113 = vector.load %arg4[%c4_44, %c0_45, %c0_46] : memref<5x320x64xbf16, #tpu.memory_space<vmem>>, vector<1x320x64xbf16>
    %114 = vector.shape_cast %113 : vector<1x320x64xbf16> to vector<320x64xbf16>
    %cst_47 = arith.constant dense<0.000000e+00> : vector<22x64xf32>
    %115 = tpu.matmul %112, %114, %cst_47 {dimension_numbers = #tpu.dot_dimension_numbers<[1], [0], [0], [1], [0, 0, 1, 1], [], []>} : vector<22x320xbf16>, vector<320x64xbf16>, vector<22x64xf32> -> vector<22x64xf32>
    %c5 = arith.constant 5 : index
    %c0_48 = arith.constant 0 : index
    %116 = vector.load %arg7[%c5, %c0_48] : memref<37x64xf32, #tpu.memory_space<vmem>>, vector<1x64xf32>
    %117 = vector.broadcast %116 : vector<1x64xf32> to vector<22x64xf32>
    %118 = arith.addf %115, %117 : vector<22x64xf32>
    %cst_49 = arith.constant 0.000000e+00 : f32
    %119 = vector.broadcast %cst_49 : f32 to vector<22x64xf32>
    %120 = arith.maximumf %118, %119 : vector<22x64xf32>
    %c12 = arith.constant 12 : index
    %c0_50 = arith.constant 0 : index
    %121 = vector.load %arg7[%c12, %c0_50] : memref<37x64xf32, #tpu.memory_space<vmem>>, vector<1x64xf32>
    %122 = vector.broadcast %121 : vector<1x64xf32> to vector<22x64xf32>
    %123 = arith.mulf %120, %122 : vector<22x64xf32>
    %c19 = arith.constant 19 : index
    %c0_51 = arith.constant 0 : index
    %124 = vector.load %arg7[%c19, %c0_51] : memref<37x64xf32, #tpu.memory_space<vmem>>, vector<1x64xf32>
    %125 = vector.broadcast %124 : vector<1x64xf32> to vector<22x64xf32>
    %126 = arith.addf %123, %125 : vector<22x64xf32>
    %127 = vector.extract_strided_slice %126 {offsets = [0, 0], sizes = [19, 64], strides = [1, 1]} : vector<22x64xf32> to vector<19x64xf32>
    %128 = vector.extract_strided_slice %126 {offsets = [1, 0], sizes = [19, 64], strides = [1, 1]} : vector<22x64xf32> to vector<19x64xf32>
    %129 = vector.extract_strided_slice %126 {offsets = [2, 0], sizes = [19, 64], strides = [1, 1]} : vector<22x64xf32> to vector<19x64xf32>
    %130 = vector.extract_strided_slice %126 {offsets = [3, 0], sizes = [19, 64], strides = [1, 1]} : vector<22x64xf32> to vector<19x64xf32>
    %131 = tpu.concatenate %127, %128, %129, %130 in 1 : vector<19x64xf32>, vector<19x64xf32>, vector<19x64xf32>, vector<19x64xf32> -> vector<19x256xf32>
    %132 = arith.truncf %131 : vector<19x256xf32> to vector<19x256xbf16>
    %c0_52 = arith.constant 0 : index
    %c0_53 = arith.constant 0 : index
    %133 = vector.load %arg6[%c0_52, %c0_53] : memref<10x19xbf16, #tpu.memory_space<vmem>>, vector<10x19xbf16>
    %cst_54 = arith.constant dense<0.000000e+00> : vector<10x256xf32>
    %134 = tpu.matmul %133, %132, %cst_54 {dimension_numbers = #tpu.dot_dimension_numbers<[1], [0], [0], [1], [0, 0, 1, 1], [], []>} : vector<10x19xbf16>, vector<19x256xbf16>, vector<10x256xf32> -> vector<10x256xf32>
    %135 = arith.truncf %134 : vector<10x256xf32> to vector<10x256xbf16>
    %c0_55 = arith.constant 0 : index
    %c0_56 = arith.constant 0 : index
    %136 = vector.load %arg5[%c0_55, %c0_56] : memref<256x64xbf16, #tpu.memory_space<vmem>>, vector<256x64xbf16>
    %cst_57 = arith.constant dense<0.000000e+00> : vector<10x64xf32>
    %137 = tpu.matmul %135, %136, %cst_57 {dimension_numbers = #tpu.dot_dimension_numbers<[1], [0], [0], [1], [0, 0, 1, 1], [], []>} : vector<10x256xbf16>, vector<256x64xbf16>, vector<10x64xf32> -> vector<10x64xf32>
    %c6 = arith.constant 6 : index
    %c0_58 = arith.constant 0 : index
    %138 = vector.load %arg7[%c6, %c0_58] : memref<37x64xf32, #tpu.memory_space<vmem>>, vector<1x64xf32>
    %139 = vector.broadcast %138 : vector<1x64xf32> to vector<10x64xf32>
    %140 = arith.addf %137, %139 : vector<10x64xf32>
    %cst_59 = arith.constant 0.000000e+00 : f32
    %141 = vector.broadcast %cst_59 : f32 to vector<10x64xf32>
    %142 = arith.maximumf %140, %141 : vector<10x64xf32>
    %cst_60 = arith.constant 9.99999997E-7 : f32
    %143 = vector.broadcast %cst_60 : f32 to vector<10x64xf32>
    %144 = arith.maximumf %142, %143 : vector<10x64xf32>
    %145 = math.log %144 : vector<10x64xf32>
    %c23 = arith.constant 23 : index
    %c0_61 = arith.constant 0 : index
    %146 = vector.load %arg7[%c23, %c0_61] : memref<37x64xf32, #tpu.memory_space<vmem>>, vector<1x64xf32>
    %147 = vector.broadcast %146 : vector<1x64xf32> to vector<10x64xf32>
    %148 = arith.mulf %145, %147 : vector<10x64xf32>
    %149 = math.exp %148 : vector<10x64xf32>
    %cst_62 = arith.constant dense<0.000000e+00> : vector<64xf32>
    %150 = vector.multi_reduction <add>, %149, %cst_62 [0] : vector<10x64xf32> to vector<64xf32>
    %151 = vector.shape_cast %150 : vector<64xf32> to vector<1x64xf32>
    %cst_63 = arith.constant 1.000000e+01 : f32
    %152 = vector.broadcast %cst_63 : f32 to vector<1x64xf32>
    %153 = arith.divf %151, %152 : vector<1x64xf32>
    %154 = math.log %153 : vector<1x64xf32>
    %c24 = arith.constant 24 : index
    %c0_64 = arith.constant 0 : index
    %155 = vector.load %arg7[%c24, %c0_64] : memref<37x64xf32, #tpu.memory_space<vmem>>, vector<1x64xf32>
    %156 = arith.mulf %154, %155 : vector<1x64xf32>
    %157 = math.exp %156 : vector<1x64xf32>
    %c21 = arith.constant 21 : index
    %c0_65 = arith.constant 0 : index
    %158 = vector.load %arg7[%c21, %c0_65] : memref<37x64xf32, #tpu.memory_space<vmem>>, vector<1x64xf32>
    %159 = arith.mulf %157, %158 : vector<1x64xf32>
    %c22 = arith.constant 22 : index
    %c0_66 = arith.constant 0 : index
    %160 = vector.load %arg7[%c22, %c0_66] : memref<37x64xf32, #tpu.memory_space<vmem>>, vector<1x64xf32>
    %161 = arith.addf %159, %160 : vector<1x64xf32>
    %c0_67 = arith.constant 0 : index
    %c0_68 = arith.constant 0 : index
    %c0_69 = arith.constant 0 : index
    %162 = vector.load %arg2[%c0_67, %c0_68, %c0_69] : memref<1x1x32xf32, #tpu.memory_space<vmem>>, vector<1x1x32xf32>
    %163 = vector.shape_cast %162 : vector<1x1x32xf32> to vector<1x32xf32>
    %c0_70 = arith.constant 0 : index
    %c0_71 = arith.constant 0 : index
    %164 = vector.load %arg8[%c0_70, %c0_71] : memref<32x64xbf16, #tpu.memory_space<vmem>>, vector<32x64xbf16>
    %165 = arith.truncf %163 : vector<1x32xf32> to vector<1x32xbf16>
    %cst_72 = arith.constant dense<0.000000e+00> : vector<1x64xf32>
    %166 = tpu.matmul %165, %164, %cst_72 {dimension_numbers = #tpu.dot_dimension_numbers<[1], [0], [0], [1], [0, 0, 1, 1], [], []>} : vector<1x32xbf16>, vector<32x64xbf16>, vector<1x64xf32> -> vector<1x64xf32>
    %c25 = arith.constant 25 : index
    %c0_73 = arith.constant 0 : index
    %167 = vector.load %arg7[%c25, %c0_73] : memref<37x64xf32, #tpu.memory_space<vmem>>, vector<1x64xf32>
    %168 = arith.addf %166, %167 : vector<1x64xf32>
    %cst_74 = arith.constant 0.000000e+00 : f32
    %169 = vector.broadcast %cst_74 : f32 to vector<1x64xf32>
    %170 = arith.maximumf %168, %169 : vector<1x64xf32>
    %c29 = arith.constant 29 : index
    %c0_75 = arith.constant 0 : index
    %171 = vector.load %arg7[%c29, %c0_75] : memref<37x64xf32, #tpu.memory_space<vmem>>, vector<1x64xf32>
    %172 = arith.mulf %170, %171 : vector<1x64xf32>
    %c33 = arith.constant 33 : index
    %c0_76 = arith.constant 0 : index
    %173 = vector.load %arg7[%c33, %c0_76] : memref<37x64xf32, #tpu.memory_space<vmem>>, vector<1x64xf32>
    %174 = arith.addf %172, %173 : vector<1x64xf32>
    %c0_77 = arith.constant 0 : index
    %c0_78 = arith.constant 0 : index
    %c0_79 = arith.constant 0 : index
    %175 = vector.load %arg9[%c0_77, %c0_78, %c0_79] : memref<3x64x64xbf16, #tpu.memory_space<vmem>>, vector<1x64x64xbf16>
    %176 = vector.shape_cast %175 : vector<1x64x64xbf16> to vector<64x64xbf16>
    %177 = arith.truncf %174 : vector<1x64xf32> to vector<1x64xbf16>
    %cst_80 = arith.constant dense<0.000000e+00> : vector<1x64xf32>
    %178 = tpu.matmul %177, %176, %cst_80 {dimension_numbers = #tpu.dot_dimension_numbers<[1], [0], [0], [1], [0, 0, 1, 1], [], []>} : vector<1x64xbf16>, vector<64x64xbf16>, vector<1x64xf32> -> vector<1x64xf32>
    %c26 = arith.constant 26 : index
    %c0_81 = arith.constant 0 : index
    %179 = vector.load %arg7[%c26, %c0_81] : memref<37x64xf32, #tpu.memory_space<vmem>>, vector<1x64xf32>
    %180 = arith.addf %178, %179 : vector<1x64xf32>
    %cst_82 = arith.constant 0.000000e+00 : f32
    %181 = vector.broadcast %cst_82 : f32 to vector<1x64xf32>
    %182 = arith.maximumf %180, %181 : vector<1x64xf32>
    %c30 = arith.constant 30 : index
    %c0_83 = arith.constant 0 : index
    %183 = vector.load %arg7[%c30, %c0_83] : memref<37x64xf32, #tpu.memory_space<vmem>>, vector<1x64xf32>
    %184 = arith.mulf %182, %183 : vector<1x64xf32>
    %c34 = arith.constant 34 : index
    %c0_84 = arith.constant 0 : index
    %185 = vector.load %arg7[%c34, %c0_84] : memref<37x64xf32, #tpu.memory_space<vmem>>, vector<1x64xf32>
    %186 = arith.addf %184, %185 : vector<1x64xf32>
    %c1_85 = arith.constant 1 : index
    %c0_86 = arith.constant 0 : index
    %c0_87 = arith.constant 0 : index
    %187 = vector.load %arg9[%c1_85, %c0_86, %c0_87] : memref<3x64x64xbf16, #tpu.memory_space<vmem>>, vector<1x64x64xbf16>
    %188 = vector.shape_cast %187 : vector<1x64x64xbf16> to vector<64x64xbf16>
    %189 = arith.truncf %186 : vector<1x64xf32> to vector<1x64xbf16>
    %cst_88 = arith.constant dense<0.000000e+00> : vector<1x64xf32>
    %190 = tpu.matmul %189, %188, %cst_88 {dimension_numbers = #tpu.dot_dimension_numbers<[1], [0], [0], [1], [0, 0, 1, 1], [], []>} : vector<1x64xbf16>, vector<64x64xbf16>, vector<1x64xf32> -> vector<1x64xf32>
    %c27 = arith.constant 27 : index
    %c0_89 = arith.constant 0 : index
    %191 = vector.load %arg7[%c27, %c0_89] : memref<37x64xf32, #tpu.memory_space<vmem>>, vector<1x64xf32>
    %192 = arith.addf %190, %191 : vector<1x64xf32>
    %cst_90 = arith.constant 0.000000e+00 : f32
    %193 = vector.broadcast %cst_90 : f32 to vector<1x64xf32>
    %194 = arith.maximumf %192, %193 : vector<1x64xf32>
    %c31 = arith.constant 31 : index
    %c0_91 = arith.constant 0 : index
    %195 = vector.load %arg7[%c31, %c0_91] : memref<37x64xf32, #tpu.memory_space<vmem>>, vector<1x64xf32>
    %196 = arith.mulf %194, %195 : vector<1x64xf32>
    %c35 = arith.constant 35 : index
    %c0_92 = arith.constant 0 : index
    %197 = vector.load %arg7[%c35, %c0_92] : memref<37x64xf32, #tpu.memory_space<vmem>>, vector<1x64xf32>
    %198 = arith.addf %196, %197 : vector<1x64xf32>
    %c2_93 = arith.constant 2 : index
    %c0_94 = arith.constant 0 : index
    %c0_95 = arith.constant 0 : index
    %199 = vector.load %arg9[%c2_93, %c0_94, %c0_95] : memref<3x64x64xbf16, #tpu.memory_space<vmem>>, vector<1x64x64xbf16>
    %200 = vector.shape_cast %199 : vector<1x64x64xbf16> to vector<64x64xbf16>
    %201 = arith.truncf %198 : vector<1x64xf32> to vector<1x64xbf16>
    %cst_96 = arith.constant dense<0.000000e+00> : vector<1x64xf32>
    %202 = tpu.matmul %201, %200, %cst_96 {dimension_numbers = #tpu.dot_dimension_numbers<[1], [0], [0], [1], [0, 0, 1, 1], [], []>} : vector<1x64xbf16>, vector<64x64xbf16>, vector<1x64xf32> -> vector<1x64xf32>
    %c28 = arith.constant 28 : index
    %c0_97 = arith.constant 0 : index
    %203 = vector.load %arg7[%c28, %c0_97] : memref<37x64xf32, #tpu.memory_space<vmem>>, vector<1x64xf32>
    %204 = arith.addf %202, %203 : vector<1x64xf32>
    %cst_98 = arith.constant 0.000000e+00 : f32
    %205 = vector.broadcast %cst_98 : f32 to vector<1x64xf32>
    %206 = arith.maximumf %204, %205 : vector<1x64xf32>
    %c32 = arith.constant 32 : index
    %c0_99 = arith.constant 0 : index
    %207 = vector.load %arg7[%c32, %c0_99] : memref<37x64xf32, #tpu.memory_space<vmem>>, vector<1x64xf32>
    %208 = arith.mulf %206, %207 : vector<1x64xf32>
    %c36 = arith.constant 36 : index
    %c0_100 = arith.constant 0 : index
    %209 = vector.load %arg7[%c36, %c0_100] : memref<37x64xf32, #tpu.memory_space<vmem>>, vector<1x64xf32>
    %210 = arith.addf %208, %209 : vector<1x64xf32>
    %211 = tpu.concatenate %161, %210 in 1 : vector<1x64xf32>, vector<1x64xf32> -> vector<1x128xf32>
    %212 = arith.truncf %211 : vector<1x128xf32> to vector<1x128xbf16>
    %c0_101 = arith.constant 0 : index
    %c0_102 = arith.constant 0 : index
    %213 = vector.load %arg10[%c0_101, %c0_102] : memref<128x128xbf16, #tpu.memory_space<vmem>>, vector<128x128xbf16>
    %cst_103 = arith.constant dense<0.000000e+00> : vector<1x128xf32>
    %214 = tpu.matmul %212, %213, %cst_103 {dimension_numbers = #tpu.dot_dimension_numbers<[1], [0], [0], [1], [0, 0, 1, 1], [], []>} : vector<1x128xbf16>, vector<128x128xbf16>, vector<1x128xf32> -> vector<1x128xf32>
    %c0_104 = arith.constant 0 : index
    %c0_105 = arith.constant 0 : index
    %215 = vector.load %arg11[%c0_104, %c0_105] : memref<3x128xf32, #tpu.memory_space<vmem>>, vector<1x128xf32>
    %216 = arith.addf %214, %215 : vector<1x128xf32>
    %cst_106 = arith.constant 0.000000e+00 : f32
    %217 = vector.broadcast %cst_106 : f32 to vector<1x128xf32>
    %218 = arith.maximumf %216, %217 : vector<1x128xf32>
    %c1_107 = arith.constant 1 : index
    %c0_108 = arith.constant 0 : index
    %219 = vector.load %arg11[%c1_107, %c0_108] : memref<3x128xf32, #tpu.memory_space<vmem>>, vector<1x128xf32>
    %220 = arith.mulf %218, %219 : vector<1x128xf32>
    %c2_109 = arith.constant 2 : index
    %c0_110 = arith.constant 0 : index
    %221 = vector.load %arg11[%c2_109, %c0_110] : memref<3x128xf32, #tpu.memory_space<vmem>>, vector<1x128xf32>
    %222 = arith.addf %220, %221 : vector<1x128xf32>
    %223 = arith.truncf %222 : vector<1x128xf32> to vector<1x128xbf16>
    %c0_111 = arith.constant 0 : index
    %c0_112 = arith.constant 0 : index
    %224 = vector.load %arg12[%c0_111, %c0_112] : memref<128x128xbf16, #tpu.memory_space<vmem>>, vector<128x128xbf16>
    %cst_113 = arith.constant dense<0.000000e+00> : vector<1x128xf32>
    %225 = tpu.matmul %223, %224, %cst_113 {dimension_numbers = #tpu.dot_dimension_numbers<[1], [0], [0], [1], [0, 0, 1, 1], [], []>} : vector<1x128xbf16>, vector<128x128xbf16>, vector<1x128xf32> -> vector<1x128xf32>
    %c0_114 = arith.constant 0 : index
    %c0_115 = arith.constant 0 : index
    %226 = vector.load %arg13[%c0_114, %c0_115] : memref<1x128xf32, #tpu.memory_space<vmem>>, vector<1x128xf32>
    %227 = arith.addf %225, %226 : vector<1x128xf32>
    %c0_116 = arith.constant 0 : index
    %c0_117 = arith.constant 0 : index
    %c0_118 = arith.constant 0 : index
    %228 = vector.load %arg14[%c0_116, %c0_117, %c0_118] : memref<1x1x128xf32, #tpu.memory_space<vmem>>, vector<1x1x128xf32>
    %229 = vector.shape_cast %228 : vector<1x1x128xf32> to vector<1x128xf32>
    %230 = vector.shape_cast %227 : vector<1x128xf32> to vector<1x1x128xf32>
    tpu.vector_store %arg14[%c0_116, %c0_117, %c0_118], %230 {strides = array<i32>} : memref<1x1x128xf32, #tpu.memory_space<vmem>>, vector<1x1x128xf32>,
    return
  }
  func.func @transform_0(%arg0: i32) -> (i32, i32, i32) {
    %c0_i32 = arith.constant 0 : i32
    %c0_i32_0 = arith.constant 0 : i32
    %c0_i32_1 = arith.constant 0 : i32
    return %arg0, %c0_i32, %c0_i32_0 : i32, i32, i32
  }
  func.func @transform_1(%arg0: i32) -> (i32, i32, i32) {
    %c0_i32 = arith.constant 0 : i32
    %c0_i32_0 = arith.constant 0 : i32
    %c0_i32_1 = arith.constant 0 : i32
    return %arg0, %c0_i32, %c0_i32_0 : i32, i32, i32
  }
  func.func @transform_2(%arg0: i32) -> (i32, i32) {
    %c0_i32 = arith.constant 0 : i32
    %c0_i32_0 = arith.constant 0 : i32
    %c0_i32_1 = arith.constant 0 : i32
    return %c0_i32, %c0_i32_0 : i32, i32
  }
  func.func @transform_3(%arg0: i32) -> (i32, i32, i32) {
    %c0_i32 = arith.constant 0 : i32
    %c0_i32_0 = arith.constant 0 : i32
    %c0_i32_1 = arith.constant 0 : i32
    %c0_i32_2 = arith.constant 0 : i32
    return %c0_i32, %c0_i32_0, %c0_i32_1 : i32, i32, i32
  }
  func.func @transform_4(%arg0: i32) -> (i32, i32) {
    %c0_i32 = arith.constant 0 : i32
    %c0_i32_0 = arith.constant 0 : i32
    %c0_i32_1 = arith.constant 0 : i32
    return %c0_i32, %c0_i32_0 : i32, i32
  }
  func.func @transform_5(%arg0: i32) -> (i32, i32) {
    %c0_i32 = arith.constant 0 : i32
    %c0_i32_0 = arith.constant 0 : i32
    %c0_i32_1 = arith.constant 0 : i32
    return %c0_i32, %c0_i32_0 : i32, i32
  }
  func.func @transform_6(%arg0: i32) -> (i32, i32) {
    %c0_i32 = arith.constant 0 : i32
    %c0_i32_0 = arith.constant 0 : i32
    %c0_i32_1 = arith.constant 0 : i32
    return %c0_i32, %c0_i32_0 : i32, i32
  }
  func.func @transform_7(%arg0: i32) -> (i32, i32) {
    %c0_i32 = arith.constant 0 : i32
    %c0_i32_0 = arith.constant 0 : i32
    %c0_i32_1 = arith.constant 0 : i32
    return %c0_i32, %c0_i32_0 : i32, i32
  }
  func.func @transform_8(%arg0: i32) -> (i32, i32, i32) {
    %c0_i32 = arith.constant 0 : i32
    %c0_i32_0 = arith.constant 0 : i32
    %c0_i32_1 = arith.constant 0 : i32
    %c0_i32_2 = arith.constant 0 : i32
    return %c0_i32, %c0_i32_0, %c0_i32_1 : i32, i32, i32
  }
  func.func @transform_9(%arg0: i32) -> (i32, i32) {
    %c0_i32 = arith.constant 0 : i32
    %c0_i32_0 = arith.constant 0 : i32
    %c0_i32_1 = arith.constant 0 : i32
    return %c0_i32, %c0_i32_0 : i32, i32
  }
  func.func @transform_10(%arg0: i32) -> (i32, i32) {
    %c0_i32 = arith.constant 0 : i32
    %c0_i32_0 = arith.constant 0 : i32
    %c0_i32_1 = arith.constant 0 : i32
    return %c0_i32, %c0_i32_0 : i32, i32
  }
  func.func @transform_11(%arg0: i32) -> (i32, i32) {
    %c0_i32 = arith.constant 0 : i32
    %c0_i32_0 = arith.constant 0 : i32
    %c0_i32_1 = arith.constant 0 : i32
    return %c0_i32, %c0_i32_0 : i32, i32
  }
  func.func @transform_12(%arg0: i32) -> (i32, i32) {
    %c0_i32 = arith.constant 0 : i32
    %c0_i32_0 = arith.constant 0 : i32
    %c0_i32_1 = arith.constant 0 : i32
    return %c0_i32, %c0_i32_0 : i32, i32
  }
  func.func @transform_13(%arg0: i32) -> (i32, i32, i32) {
    %c0_i32 = arith.constant 0 : i32
    %c0_i32_0 = arith.constant 0 : i32
    %c0_i32_1 = arith.constant 0 : i32
    return %arg0, %c0_i32, %c0_i32_0 : i32, i32, i32
  }
}

</mosaic_0001>

<llo_original>
// kernel: pallas_forward.1
$region0: #{pallas_forward.1}
  #allocation0 [shape = 'u32[]', space=smem, size = 0x4, offset = 0x4, fixed_abs, tag = 'smem constant byte address 0x4 - core index']
  #allocation1 [shape = 'u32[144,128]{1,0:T(1,128)}', space=vmem, size = 0x12000, scoped, tag = 'internal scratch']
  %s0 = inlined_call_operand.vmem [shape: f32[1,30,56], index: 0, kind: input, shape index: {}]
  %s1 = inlined_call_operand.vmem [shape: f32[1,1,32], index: 1, kind: input, shape index: {}]
  %s2 = inlined_call_operand.vmem [shape: bf16[56,64], index: 2, kind: input, shape index: {}]
  %s3 = inlined_call_operand.vmem [shape: bf16[5,320,64], index: 3, kind: input, shape index: {}]
  %s4 = inlined_call_operand.vmem [shape: bf16[256,64], index: 4, kind: input, shape index: {}]
  %s5 = inlined_call_operand.vmem [shape: bf16[10,19], index: 5, kind: input, shape index: {}]
  %s6 = inlined_call_operand.vmem [shape: f32[37,64], index: 6, kind: input, shape index: {}]
  %s7 = inlined_call_operand.vmem [shape: bf16[32,64], index: 7, kind: input, shape index: {}]
  %s8 = inlined_call_operand.vmem [shape: bf16[3,64,64], index: 8, kind: input, shape index: {}]
  %s9 = inlined_call_operand.vmem [shape: bf16[128,128], index: 9, kind: input, shape index: {}]
  %s10 = inlined_call_operand.vmem [shape: f32[3,128], index: 10, kind: input, shape index: {}]
  %s11 = inlined_call_operand.vmem [shape: bf16[128,128], index: 11, kind: input, shape index: {}]
  %s12 = inlined_call_operand.vmem [shape: f32[1,128], index: 12, kind: input, shape index: {}]
  %s13 = inlined_call_operand.vmem [shape: f32[1,1,128], index: 13, kind: output, shape index: {}]
  %s14 = sld [smem:[#allocation0]]
  $region62: #{pallas_forward.1} parent=0
    _
  %s16 = ssub.s32 1, %s14
  %s17 = scalar_select 0, %s16, %s14
  // Predicated region
  $region2: #{pallas_forward.1} parent=0 // pred_check
    _
  $region3: #{pallas_forward.1} parent=0 // pred_check_branch
    %19 = sbr.rel (0) target = $region5
  $region4: #{pallas_forward.1} parent=0 // pred_region
    _
  $region5: #{pallas_forward.1} parent=0 // pred_fallthru
    _
  // Predicated region
  $region6: #{pallas_forward.1} parent=0 // pred_check
    _
  $region7: #{pallas_forward.1} parent=0 // pred_check_branch
    %21 = sbr.rel (0) target = $region9
  $region8: #{pallas_forward.1} parent=0 // pred_region
    _
  $region9: #{pallas_forward.1} parent=0 // pred_fallthru
    _
  // Predicated region
  $region10: #{pallas_forward.1} parent=0 // pred_check
    _
  $region11: #{pallas_forward.1} parent=0 // pred_check_branch
    %23 = sbr.rel (0) target = $region13
  $region12: #{pallas_forward.1} parent=0 // pred_region
    _
  $region13: #{pallas_forward.1} parent=0 // pred_fallthru
    _
  // Predicated region
  $region14: #{pallas_forward.1} parent=0 // pred_check
    _
  $region15: #{pallas_forward.1} parent=0 // pred_check_branch
    %25 = sbr.rel (0) target = $region17
  $region16: #{pallas_forward.1} parent=0 // pred_region
    _
  $region17: #{pallas_forward.1} parent=0 // pred_fallthru
    _
  // Predicated region
  $region18: #{pallas_forward.1} parent=0 // pred_check
    _
  $region19: #{pallas_forward.1} parent=0 // pred_check_branch
    %27 = sbr.rel (0) target = $region21
  $region20: #{pallas_forward.1} parent=0 // pred_region
    _
  $region21: #{pallas_forward.1} parent=0 // pred_fallthru
    _
  // Predicated region
  $region22: #{pallas_forward.1} parent=0 // pred_check
    _
  $region23: #{pallas_forward.1} parent=0 // pred_check_branch
    %29 = sbr.rel (0) target = $region25
  $region24: #{pallas_forward.1} parent=0 // pred_region
    _
  $region25: #{pallas_forward.1} parent=0 // pred_fallthru
    _
  // Predicated region
  $region26: #{pallas_forward.1} parent=0 // pred_check
    _
  $region27: #{pallas_forward.1} parent=0 // pred_check_branch
    %31 = sbr.rel (0) target = $region29
  $region28: #{pallas_forward.1} parent=0 // pred_region
    _
  $region29: #{pallas_forward.1} parent=0 // pred_fallthru
    _
  // Predicated region
  $region30: #{pallas_forward.1} parent=0 // pred_check
    _
  $region31: #{pallas_forward.1} parent=0 // pred_check_branch
    %33 = sbr.rel (0) target = $region33
  $region32: #{pallas_forward.1} parent=0 // pred_region
    _
  $region33: #{pallas_forward.1} parent=0 // pred_fallthru
    _
  // Predicated region
  $region34: #{pallas_forward.1} parent=0 // pred_check
    _
  $region35: #{pallas_forward.1} parent=0 // pred_check_branch
    %35 = sbr.rel (0) target = $region37
  $region36: #{pallas_forward.1} parent=0 // pred_region
    _
  $region37: #{pallas_forward.1} parent=0 // pred_fallthru
    _
  // Predicated region
  $region38: #{pallas_forward.1} parent=0 // pred_check
    _
  $region39: #{pallas_forward.1} parent=0 // pred_check_branch
    %37 = sbr.rel (0) target = $region41
  $region40: #{pallas_forward.1} parent=0 // pred_region
    _
  $region41: #{pallas_forward.1} parent=0 // pred_fallthru
    _
  // Predicated region
  $region42: #{pallas_forward.1} parent=0 // pred_check
    _
  $region43: #{pallas_forward.1} parent=0 // pred_check_branch
    %39 = sbr.rel (0) target = $region45
  $region44: #{pallas_forward.1} parent=0 // pred_region
    _
  $region45: #{pallas_forward.1} parent=0 // pred_fallthru
    _
  // Predicated region
  $region46: #{pallas_forward.1} parent=0 // pred_check
    _
  $region47: #{pallas_forward.1} parent=0 // pred_check_branch
    %41 = sbr.rel (0) target = $region49
  $region48: #{pallas_forward.1} parent=0 // pred_region
    _
  $region49: #{pallas_forward.1} parent=0 // pred_fallthru
    _
  // Predicated region
  $region50: #{pallas_forward.1} parent=0 // pred_check
    _
  $region51: #{pallas_forward.1} parent=0 // pred_check_branch
    %43 = sbr.rel (0) target = $region53
  $region52: #{pallas_forward.1} parent=0 // pred_region
    _
  $region53: #{pallas_forward.1} parent=0 // pred_fallthru
    _
  %v45 = vld [vmem:[%s0] sm:$0xff]
  %v46 = vld [vmem:[%s0 + $0x8] sm:$0xff]
  %v47 = vld [vmem:[%s0 + $0x10] sm:$0xff]
  %v48 = vld [vmem:[%s0 + $0x18] sm:$0x3f]
  %v49 = vpack.c.bf16 %v46, %v45
  %v50 = vpack.c.bf16 %v48, %v47
  %v51 = vld [vmem:[%s2] sm:$0xf]
  %v52 = vld [vmem:[%s2 + $0x4] sm:$0xf]
  %v53 = vld [vmem:[%s2 + $0x8] sm:$0xf]
  %v54 = vld [vmem:[%s2 + $0xc] sm:$0xf]
  %v55 = vld [vmem:[%s2 + $0x10] sm:$0xf]
  %v56 = vld [vmem:[%s2 + $0x14] sm:$0xf]
  %v57 = vld [vmem:[%s2 + $0x18] sm:$0xf]
  %v58 = vld [vmem:[%s6] sm:$0x1]
  %v59 = vlaneseq
  %v60 = vshrl.u32 %v59, 7
  %v61 = vsub.s32 0, %v60
  %v62 = vrot.slane %v58, %v61
  %v70 = vunpack.c.l.b16 %v51
  %v71 = vunpack.c.l.b16 %v52
  %v72 = vunpack.c.l.b16 %v53
  %v73 = vunpack.c.l.b16 %v54
  %v74 = vunpack.c.l.b16 %v55
  %v75 = vunpack.c.l.b16 %v56
  %v76 = vunpack.c.l.b16 %v57
  %v77 = vpack.c.b16 %v71, %v70
  %v78 = vpack.c.b16 %v73, %v72
  %v79 = vpack.c.b16 %v75, %v74
  %v80 = vpack.c.b16 %v76, %v76
  %vm84 = vcmask 457728
  %v86 = vsel %vm84, %v49, 0
  %v89 = vsel %vm84, %v50, 0
  %vm91 = vcmask 1043456
  %v93 = vsel %vm91, %v80, 0
  %95 = vmatprep.subr.bf16.mxu0 0
  %96 = vmatpush1.bf16.msra.mxu0 0
  %97 = vmatprep.subr.bf16.mxu0 0
  %98 = vmatpush1.bf16.msra.mxu0 0
  %99 = vmatprep.subr.bf16.mxu0 0
  %100 = vmatpush1.bf16.msra.mxu0 0
  %101 = vmatprep.subr.bf16.mxu0 0
  %102 = vmatpush1.bf16.msra.mxu0 0
  %103 = vmatprep.subr.bf16.mxu0 0
  %104 = vmatpush1.bf16.msra.mxu0 %v93
  %105 = vmatprep.subr.bf16.mxu0 0
  %106 = vmatpush1.bf16.msra.mxu0 %v79
  %107 = vmatprep.subr.bf16.mxu0 0
  %108 = vmatpush1.bf16.msra.mxu0 %v78
  %109 = vmatprep.subr.bf16.mxu0 0
  %110 = vmatpush1.bf16.msra.mxu0 %v77
  %111 = vmatprep.subr.bf16.mxu0 0
  %112 = vmatpush2.bf16.msra.mxu0 0
  %113 = vmatprep.subr.bf16.mxu0 0
  %114 = vmatpush2.bf16.msra.mxu0 0
  %115 = vmatprep.subr.bf16.mxu0 0
  %116 = vmatpush2.bf16.msra.mxu0 0
  %117 = vmatprep.subr.bf16.mxu0 0
  %118 = vmatpush2.bf16.msra.mxu0 0
  %119 = vmatprep.subr.bf16.mxu0 0
  %120 = vmatpush2.bf16.msra.mxu0 0
  %121 = vmatprep.subr.bf16.mxu0 0
  %122 = vmatpush2.bf16.msra.mxu0 0
  %123 = vmatprep.subr.bf16.mxu0 0
  %124 = vmatpush2.bf16.msra.mxu0 0
  %125 = vmatprep.subr.bf16.mxu0 0
  %126 = vmatpush2.bf16.msra.mxu0 0
  %127 = vmatprep.mubr.bf16.mxu0 0
  %128 = vmatmul.mubr.bf16.gmra.mxu0 %v86
  %v129 = vpop.f32.mrf.mxu0
  %v130 = vadd.f32 %v62, %v129
  %v131 = vpop.f32.mrf.mxu0
  %v132 = vpop.f32.mrf.mxu0
  %v133 = vadd.f32 %v62, %v132
  %v134 = vpop.f32.mrf.mxu0
  %135 = vmatprep.mubr.bf16.mxu0 0
  %136 = vmatmul.mubr.bf16.gmra.mxu0 %v89
  %v137 = vpop.f32.mrf.mxu0
  %v138 = vadd.f32 %v62, %v137
  %v139 = vpop.f32.mrf.mxu0
  %v140 = vpop.f32.mrf.mxu0
  %v141 = vadd.f32 %v62, %v140
  %v142 = vpop.f32.mrf.mxu0
  %143 = vdwg.mxu0
  %v144 = vmax.f32 %v130, 0.0
  %v145 = vmax.f32 %v133, 0.0
  %v146 = vmax.f32 %v138, 0.0
  %v147 = vmax.f32 %v141, 0.0
  %v148 = vld [vmem:[%s6 + $0x7] sm:$0x1]
  %v149 = vlaneseq
  %v150 = vshrl.u32 %v149, 7
  %v151 = vsub.s32 0, %v150
  %v152 = vrot.slane %v148, %v151
  %v153 = vmul.f32 %v144, %v152
  %v154 = vmul.f32 %v145, %v152
  %v155 = vmul.f32 %v146, %v152
  %v156 = vmul.f32 %v147, %v152
  %v157 = vld [vmem:[%s6 + $0xe] sm:$0x1]
  %v158 = vlaneseq
  %v159 = vshrl.u32 %v158, 7
  %v160 = vsub.s32 0, %v159
  %v161 = vrot.slane %v157, %v160
  %v162 = vadd.f32 %v153, %v161
  %v163 = vadd.f32 %v154, %v161
  %v164 = vadd.f32 %v155, %v161
  %v165 = vadd.f32 %v156, %v161
  %vm170 = vcmask 1041408
  %v171 = vrot.slane %v162, 6
  %v172 = vrot.slane %v163, 6
  %v173 = vsel %vm170, %v171, %v172
  %v174 = vrot.slane %v164, 6
  %v175 = vsel %vm170, %v172, %v174
  %v176 = vrot.slane %v165, 6
  %v177 = vsel %vm170, %v174, %v176
  %v182 = vsel %vm170, 0.0, %v171
  %vm184 = vcmask 1046528
  %v185 = vrot.slane %v182, 1
  %v186 = vrot.slane %v173, 1
  %v187 = vsel %vm184, %v185, %v186
  %v188 = vrot.slane %v175, 1
  %v189 = vsel %vm184, %v186, %v188
  %v190 = vrot.slane %v177, 1
  %v191 = vsel %vm184, %v188, %v190
  %192 = vrot.lane.b32.xlu0 %v187, 64
  %v193 = vpop.permute.xlu0 %192
  %194 = vrot.lane.b32.xlu0 %v189, 64
  %v195 = vpop.permute.xlu0 %194
  %196 = vrot.lane.b32.xlu0 %v191, 64
  %v197 = vpop.permute.xlu0 %196
  %198 = vrot.lane.b32.xlu0 %v190, 64
  %v199 = vpop.permute.xlu0 %198
  %vm204 = vcmask 1045504
  %v205 = vrot.slane %v182, 2
  %v206 = vrot.slane %v173, 2
  %v207 = vsel %vm204, %v205, %v206
  %v208 = vrot.slane %v175, 2
  %v209 = vsel %vm204, %v206, %v208
  %v210 = vrot.slane %v177, 2
  %v211 = vsel %vm204, %v208, %v210
  %vm217 = vcmask 1044480
  %v218 = vrot.slane %v182, 3
  %v219 = vrot.slane %v173, 3
  %v220 = vsel %vm217, %v218, %v219
  %v221 = vrot.slane %v175, 3
  %v222 = vsel %vm217, %v219, %v221
  %v223 = vrot.slane %v177, 3
  %v224 = vsel %vm217, %v221, %v223
  %v225 = vrot.slane 0.0, 3
  %v226 = vsel %vm217, %v223, %v225
  %227 = vrot.lane.b32.xlu0 %v220, 64
  %v228 = vpop.permute.xlu0 %227
  %229 = vrot.lane.b32.xlu0 %v222, 64
  %v230 = vpop.permute.xlu0 %229
  %231 = vrot.lane.b32.xlu0 %v224, 64
  %v232 = vpop.permute.xlu0 %231
  %233 = vrot.lane.b32.xlu0 %v226, 64
  %v234 = vpop.permute.xlu0 %233
  %v239 = vrot.slane %v182, 4
  %v240 = vrot.slane %v173, 4
  %v241 = vsel %vm91, %v239, %v240
  %v242 = vrot.slane %v175, 4
  %v243 = vsel %vm91, %v240, %v242
  %v244 = vrot.slane %v177, 4
  %v245 = vsel %vm91, %v242, %v244
  %v246 = vrot.slane 0.0, 4
  %v247 = vsel %vm91, %v244, %v246
  %vm252 = vcmask 523264
  %v253 = vsel %vm252, %v182, %v193
  %v254 = vsel %vm252, %v173, %v195
  %v255 = vsel %vm252, %v175, %v197
  %v256 = vsel %vm252, %v177, %v199
  %v257 = vsel %vm252, %v207, %v228
  %v258 = vsel %vm252, %v209, %v230
  %v259 = vsel %vm252, %v211, %v232
  %v260 = vsel %vm252, %v210, %v234
  %v261 = vpack.c.bf16 %v254, %v253
  %v262 = vpack.c.bf16 %v258, %v257
  %v263 = vpack.c.bf16 %v243, %v241
  %v264 = vpack.c.bf16 %v256, %v255
  %v265 = vpack.c.bf16 %v260, %v259
  %v266 = vpack.c.bf16 %v247, %v245
  %v267 = vld [vmem:[%s3] sm:$0xf]
  %v268 = vld [vmem:[%s3 + $0x4] sm:$0xf]
  %v269 = vld [vmem:[%s3 + $0x8] sm:$0xf]
  %v270 = vld [vmem:[%s3 + $0xc] sm:$0xf]
  %v271 = vld [vmem:[%s3 + $0x10] sm:$0xf]
  %v272 = vld [vmem:[%s3 + $0x14] sm:$0xf]
  %v273 = vld [vmem:[%s3 + $0x18] sm:$0xf]
  %v274 = vld [vmem:[%s3 + $0x1c] sm:$0xf]
  %v275 = vld [vmem:[%s3 + $0x20] sm:$0xf]
  %v276 = vld [vmem:[%s3 + $0x24] sm:$0xf]
  %v277 = vld [vmem:[%s3 + $0x28] sm:$0xf]
  %v278 = vld [vmem:[%s3 + $0x2c] sm:$0xf]
  %v279 = vld [vmem:[%s3 + $0x30] sm:$0xf]
  %v280 = vld [vmem:[%s3 + $0x34] sm:$0xf]
  %v281 = vld [vmem:[%s3 + $0x38] sm:$0xf]
  %v282 = vld [vmem:[%s3 + $0x3c] sm:$0xf]
  %v283 = vld [vmem:[%s3 + $0x40] sm:$0xf]
  %v284 = vld [vmem:[%s3 + $0x44] sm:$0xf]
  %v285 = vld [vmem:[%s3 + $0x48] sm:$0xf]
  %v286 = vld [vmem:[%s3 + $0x4c] sm:$0xf]
  %v287 = vld [vmem:[%s3 + $0x50] sm:$0xf]
  %v288 = vld [vmem:[%s3 + $0x54] sm:$0xf]
  %v289 = vld [vmem:[%s3 + $0x58] sm:$0xf]
  %v290 = vld [vmem:[%s3 + $0x5c] sm:$0xf]
  %v291 = vld [vmem:[%s3 + $0x60] sm:$0xf]
  %v292 = vld [vmem:[%s3 + $0x64] sm:$0xf]
  %v293 = vld [vmem:[%s3 + $0x68] sm:$0xf]
  %v294 = vld [vmem:[%s3 + $0x6c] sm:$0xf]
  %v295 = vld [vmem:[%s3 + $0x70] sm:$0xf]
  %v296 = vld [vmem:[%s3 + $0x74] sm:$0xf]
  %v297 = vld [vmem:[%s3 + $0x78] sm:$0xf]
  %v298 = vld [vmem:[%s3 + $0x7c] sm:$0xf]
  %v299 = vld [vmem:[%s3 + $0x80] sm:$0xf]
  %v300 = vld [vmem:[%s3 + $0x84] sm:$0xf]
  %v301 = vld [vmem:[%s3 + $0x88] sm:$0xf]
  %v302 = vld [vmem:[%s3 + $0x8c] sm:$0xf]
  %v303 = vld [vmem:[%s3 + $0x90] sm:$0xf]
  %v304 = vld [vmem:[%s3 + $0x94] sm:$0xf]
  %v305 = vld [vmem:[%s3 + $0x98] sm:$0xf]
  %v306 = vld [vmem:[%s3 + $0x9c] sm:$0xf]
  %v307 = vld [vmem:[%s6 + $0x1] sm:$0x1]
  %v308 = vlaneseq
  %v309 = vshrl.u32 %v308, 7
  %v310 = vsub.s32 0, %v309
  %v311 = vrot.slane %v307, %v310
  %v352 = vunpack.c.l.b16 %v267
  %v353 = vunpack.c.l.b16 %v268
  %v354 = vunpack.c.l.b16 %v269
  %v355 = vunpack.c.l.b16 %v270
  %v356 = vunpack.c.l.b16 %v271
  %v357 = vunpack.c.l.b16 %v272
  %v358 = vunpack.c.l.b16 %v273
  %v359 = vunpack.c.l.b16 %v274
  %v360 = vunpack.c.l.b16 %v275
  %v361 = vunpack.c.l.b16 %v276
  %v362 = vunpack.c.l.b16 %v277
  %v363 = vunpack.c.l.b16 %v278
  %v364 = vunpack.c.l.b16 %v279
  %v365 = vunpack.c.l.b16 %v280
  %v366 = vunpack.c.l.b16 %v281
  %v367 = vunpack.c.l.b16 %v282
  %v368 = vunpack.c.l.b16 %v283
  %v369 = vunpack.c.l.b16 %v284
  %v370 = vunpack.c.l.b16 %v285
  %v371 = vunpack.c.l.b16 %v286
  %v372 = vunpack.c.l.b16 %v287
  %v373 = vunpack.c.l.b16 %v288
  %v374 = vunpack.c.l.b16 %v289
  %v375 = vunpack.c.l.b16 %v290
  %v376 = vunpack.c.l.b16 %v291
  %v377 = vunpack.c.l.b16 %v292
  %v378 = vunpack.c.l.b16 %v293
  %v379 = vunpack.c.l.b16 %v294
  %v380 = vunpack.c.l.b16 %v295
  %v381 = vunpack.c.l.b16 %v296
  %v382 = vunpack.c.l.b16 %v297
  %v383 = vunpack.c.l.b16 %v298
  %v384 = vunpack.c.l.b16 %v299
  %v385 = vunpack.c.l.b16 %v300
  %v386 = vunpack.c.l.b16 %v301
  %v387 = vunpack.c.l.b16 %v302
  %v388 = vunpack.c.l.b16 %v303
  %v389 = vunpack.c.l.b16 %v304
  %v390 = vunpack.c.l.b16 %v305
  %v391 = vunpack.c.l.b16 %v306
  %v392 = vpack.c.b16 %v353, %v352
  %v393 = vpack.c.b16 %v355, %v354
  %v394 = vpack.c.b16 %v357, %v356
  %v395 = vpack.c.b16 %v359, %v358
  %v396 = vpack.c.b16 %v361, %v360
  %v397 = vpack.c.b16 %v363, %v362
  %v398 = vpack.c.b16 %v365, %v364
  %v399 = vpack.c.b16 %v367, %v366
  %v400 = vpack.c.b16 %v369, %v368
  %v401 = vpack.c.b16 %v371, %v370
  %v402 = vpack.c.b16 %v373, %v372
  %v403 = vpack.c.b16 %v375, %v374
  %v404 = vpack.c.b16 %v377, %v376
  %v405 = vpack.c.b16 %v379, %v378
  %v406 = vpack.c.b16 %v381, %v380
  %v407 = vpack.c.b16 %v383, %v382
  %v408 = vpack.c.b16 %v385, %v384
  %v409 = vpack.c.b16 %v387, %v386
  %v410 = vpack.c.b16 %v389, %v388
  %v411 = vpack.c.b16 %v391, %v390
  %v433 = vsel %vm252, %v263, 0
  %v436 = vsel %vm252, %v266, 0
  %438 = vmatprep.subr.bf16.mxu0 0
  %439 = vmatpush1.bf16.msra.mxu0 %v399
  %440 = vmatprep.subr.bf16.mxu0 0
  %441 = vmatpush1.bf16.msra.mxu0 %v398
  %442 = vmatprep.subr.bf16.mxu0 0
  %443 = vmatpush1.bf16.msra.mxu0 %v397
  %444 = vmatprep.subr.bf16.mxu0 0
  %445 = vmatpush1.bf16.msra.mxu0 %v396
  %446 = vmatprep.subr.bf16.mxu0 0
  %447 = vmatpush1.bf16.msra.mxu0 %v395
  %448 = vmatprep.subr.bf16.mxu0 0
  %449 = vmatpush1.bf16.msra.mxu0 %v394
  %450 = vmatprep.subr.bf16.mxu0 0
  %451 = vmatpush1.bf16.msra.mxu0 %v393
  %452 = vmatprep.subr.bf16.mxu0 0
  %453 = vmatpush1.bf16.msra.mxu0 %v392
  %454 = vmatprep.subr.bf16.mxu0 0
  %455 = vmatpush2.bf16.msra.mxu0 %v407
  %456 = vmatprep.subr.bf16.mxu0 0
  %457 = vmatpush2.bf16.msra.mxu0 %v406
  %458 = vmatprep.subr.bf16.mxu0 0
  %459 = vmatpush2.bf16.msra.mxu0 %v405
  %460 = vmatprep.subr.bf16.mxu0 0
  %461 = vmatpush2.bf16.msra.mxu0 %v404
  %462 = vmatprep.subr.bf16.mxu0 0
  %463 = vmatpush2.bf16.msra.mxu0 %v403
  %464 = vmatprep.subr.bf16.mxu0 0
  %465 = vmatpush2.bf16.msra.mxu0 %v402
  %466 = vmatprep.subr.bf16.mxu0 0
  %467 = vmatpush2.bf16.msra.mxu0 %v401
  %468 = vmatprep.subr.bf16.mxu0 0
  %469 = vmatpush2.bf16.msra.mxu0 %v400
  %470 = vmatprep.mubr.bf16.mxu0 %v262
  %471 = vmatmul.mubr.bf16.gmra.mxu0 %v261
  %v472 = vpop.f32.mrf.mxu0
  %v473 = vadd.f32 %v311, %v472
  %v474 = vpop.f32.mrf.mxu0
  %v475 = vpop.f32.mrf.mxu0
  %v476 = vadd.f32 %v311, %v475
  %v477 = vpop.f32.mrf.mxu0
  %478 = vmatprep.mubr.bf16.mxu0 %v265
  %479 = vmatmul.mubr.bf16.gmra.mxu0 %v264
  %v480 = vpop.f32.mrf.mxu0
  %v481 = vadd.f32 %v311, %v480
  %v482 = vpop.f32.mrf.mxu0
  %v483 = vpop.f32.mrf.mxu0
  %v484 = vadd.f32 %v311, %v483
  %v485 = vpop.f32.mrf.mxu0
  %486 = vdwg.mxu0
  %487 = vmatprep.subr.bf16.mxu0 0
  %488 = vmatpush1.bf16.msra.mxu0 0
  %489 = vmatprep.subr.bf16.mxu0 0
  %490 = vmatpush1.bf16.msra.mxu0 0
  %491 = vmatprep.subr.bf16.mxu0 0
  %492 = vmatpush1.bf16.msra.mxu0 0
  %493 = vmatprep.subr.bf16.mxu0 0
  %494 = vmatpush1.bf16.msra.mxu0 0
  %495 = vmatprep.subr.bf16.mxu0 0
  %496 = vmatpush1.bf16.msra.mxu0 %v411
  %497 = vmatprep.subr.bf16.mxu0 0
  %498 = vmatpush1.bf16.msra.mxu0 %v410
  %499 = vmatprep.subr.bf16.mxu0 0
  %500 = vmatpush1.bf16.msra.mxu0 %v409
  %501 = vmatprep.subr.bf16.mxu0 0
  %502 = vmatpush1.bf16.msra.mxu0 %v408
  %503 = vmatprep.subr.bf16.mxu0 0
  %504 = vmatpush2.bf16.msra.mxu0 0
  %505 = vmatprep.subr.bf16.mxu0 0
  %506 = vmatpush2.bf16.msra.mxu0 0
  %507 = vmatprep.subr.bf16.mxu0 0
  %508 = vmatpush2.bf16.msra.mxu0 0
  %509 = vmatprep.subr.bf16.mxu0 0
  %510 = vmatpush2.bf16.msra.mxu0 0
  %511 = vmatprep.subr.bf16.mxu0 0
  %512 = vmatpush2.bf16.msra.mxu0 0
  %513 = vmatprep.subr.bf16.mxu0 0
  %514 = vmatpush2.bf16.msra.mxu0 0
  %515 = vmatprep.subr.bf16.mxu0 0
  %516 = vmatpush2.bf16.msra.mxu0 0
  %517 = vmatprep.subr.bf16.mxu0 0
  %518 = vmatpush2.bf16.msra.mxu0 0
  %519 = vmatprep.mubr.bf16.mxu0 0
  %520 = vmatmul.mubr.bf16.gmra.mxu0 %v433
  %v521 = vpop.f32.mrf.mxu0
  %v522 = vadd.f32 %v473, %v521
  %v523 = vpop.f32.mrf.mxu0
  %v524 = vpop.f32.mrf.mxu0
  %v525 = vadd.f32 %v476, %v524
  %v526 = vpop.f32.mrf.mxu0
  %527 = vmatprep.mubr.bf16.mxu0 0
  %528 = vmatmul.mubr.bf16.gmra.mxu0 %v436
  %v529 = vpop.f32.mrf.mxu0
  %v530 = vadd.f32 %v481, %v529
  %v531 = vpop.f32.mrf.mxu0
  %v532 = vpop.f32.mrf.mxu0
  %v533 = vadd.f32 %v484, %v532
  %v534 = vpop.f32.mrf.mxu0
  %535 = vdwg.mxu0
  %v536 = vmax.f32 %v522, 0.0
  %v537 = vmax.f32 %v525, 0.0
  %v538 = vmax.f32 %v530, 0.0
  %v539 = vmax.f32 %v533, 0.0
  %v540 = vld [vmem:[%s6 + $0x8] sm:$0x1]
  %v541 = vlaneseq
  %v542 = vshrl.u32 %v541, 7
  %v543 = vsub.s32 0, %v542
  %v544 = vrot.slane %v540, %v543
  %v545 = vmul.f32 %v536, %v544
  %v546 = vmul.f32 %v537, %v544
  %v547 = vmul.f32 %v538, %v544
  %v548 = vmul.f32 %v539, %v544
  %v549 = vld [vmem:[%s6 + $0xf] sm:$0x1]
  %v550 = vlaneseq
  %v551 = vshrl.u32 %v550, 7
  %v552 = vsub.s32 0, %v551
  %v553 = vrot.slane %v549, %v552
  %v554 = vadd.f32 %v545, %v553
  %v555 = vadd.f32 %v546, %v553
  %v556 = vadd.f32 %v547, %v553
  %v557 = vadd.f32 %v548, %v553
  %v562 = vrot.slane %v554, 6
  %v563 = vrot.slane %v555, 6
  %v564 = vsel %vm170, %v562, %v563
  %v565 = vrot.slane %v556, 6
  %v566 = vsel %vm170, %v563, %v565
  %v567 = vrot.slane %v557, 6
  %v568 = vsel %vm170, %v565, %v567
  %v573 = vsel %vm170, 0.0, %v562
  %v575 = vrot.slane %v573, 1
  %v576 = vrot.slane %v564, 1
  %v577 = vsel %vm184, %v575, %v576
  %v578 = vrot.slane %v566, 1
  %v579 = vsel %vm184, %v576, %v578
  %v580 = vrot.slane %v568, 1
  %v581 = vsel %vm184, %v578, %v580
  %582 = vrot.lane.b32.xlu0 %v577, 64
  %v583 = vpop.permute.xlu0 %582
  %584 = vrot.lane.b32.xlu0 %v579, 64
  %v585 = vpop.permute.xlu0 %584
  %586 = vrot.lane.b32.xlu0 %v581, 64
  %v587 = vpop.permute.xlu0 %586
  %588 = vrot.lane.b32.xlu0 %v580, 64
  %v589 = vpop.permute.xlu0 %588
  %v594 = vrot.slane %v573, 2
  %v595 = vrot.slane %v564, 2
  %v596 = vsel %vm204, %v594, %v595
  %v597 = vrot.slane %v566, 2
  %v598 = vsel %vm204, %v595, %v597
  %v599 = vrot.slane %v568, 2
  %v600 = vsel %vm204, %v597, %v599
  %v605 = vrot.slane %v573, 3
  %v606 = vrot.slane %v564, 3
  %v607 = vsel %vm217, %v605, %v606
  %v608 = vrot.slane %v566, 3
  %v609 = vsel %vm217, %v606, %v608
  %v610 = vrot.slane %v568, 3
  %v611 = vsel %vm217, %v608, %v610
  %v612 = vsel %vm217, %v610, %v225
  %613 = vrot.lane.b32.xlu0 %v607, 64
  %v614 = vpop.permute.xlu0 %613
  %615 = vrot.lane.b32.xlu0 %v609, 64
  %v616 = vpop.permute.xlu0 %615
  %617 = vrot.lane.b32.xlu0 %v611, 64
  %v618 = vpop.permute.xlu0 %617
  %619 = vrot.lane.b32.xlu0 %v612, 64
  %v620 = vpop.permute.xlu0 %619
  %v625 = vrot.slane %v573, 4
  %v626 = vrot.slane %v564, 4
  %v627 = vsel %vm91, %v625, %v626
  %v628 = vrot.slane %v566, 4
  %v629 = vsel %vm91, %v626, %v628
  %v630 = vrot.slane %v568, 4
  %v631 = vsel %vm91, %v628, %v630
  %v632 = vsel %vm91, %v630, %v246
  %v637 = vsel %vm252, %v573, %v583
  %v638 = vsel %vm252, %v564, %v585
  %v639 = vsel %vm252, %v566, %v587
  %v640 = vsel %vm252, %v568, %v589
  %v641 = vsel %vm252, %v596, %v614
  %v642 = vsel %vm252, %v598, %v616
  %v643 = vsel %vm252, %v600, %v618
  %v644 = vsel %vm252, %v599, %v620
  %v645 = vpack.c.bf16 %v638, %v637
  %v646 = vpack.c.bf16 %v642, %v641
  %v647 = vpack.c.bf16 %v629, %v627
  %v648 = vpack.c.bf16 %v640, %v639
  %v649 = vpack.c.bf16 %v644, %v643
  %v650 = vpack.c.bf16 %v632, %v631
  %s651 = scalar_lea.vmem %s3, 160
  %v652 = vld [vmem:[%s651] sm:$0xf]
  %v653 = vld [vmem:[%s651 + $0x4] sm:$0xf]
  %v654 = vld [vmem:[%s651 + $0x8] sm:$0xf]
  %v655 = vld [vmem:[%s651 + $0xc] sm:$0xf]
  %v656 = vld [vmem:[%s651 + $0x10] sm:$0xf]
  %v657 = vld [vmem:[%s651 + $0x14] sm:$0xf]
  %v658 = vld [vmem:[%s651 + $0x18] sm:$0xf]
  %v659 = vld [vmem:[%s651 + $0x1c] sm:$0xf]
  %v660 = vld [vmem:[%s651 + $0x20] sm:$0xf]
  %v661 = vld [vmem:[%s651 + $0x24] sm:$0xf]
  %v662 = vld [vmem:[%s651 + $0x28] sm:$0xf]
  %v663 = vld [vmem:[%s651 + $0x2c] sm:$0xf]
  %v664 = vld [vmem:[%s651 + $0x30] sm:$0xf]
  %v665 = vld [vmem:[%s651 + $0x34] sm:$0xf]
  %v666 = vld [vmem:[%s651 + $0x38] sm:$0xf]
  %v667 = vld [vmem:[%s651 + $0x3c] sm:$0xf]
  %v668 = vld [vmem:[%s651 + $0x40] sm:$0xf]
  %v669 = vld [vmem:[%s651 + $0x44] sm:$0xf]
  %v670 = vld [vmem:[%s651 + $0x48] sm:$0xf]
  %v671 = vld [vmem:[%s651 + $0x4c] sm:$0xf]
  %v672 = vld [vmem:[%s651 + $0x50] sm:$0xf]
  %v673 = vld [vmem:[%s651 + $0x54] sm:$0xf]
  %v674 = vld [vmem:[%s651 + $0x58] sm:$0xf]
  %v675 = vld [vmem:[%s651 + $0x5c] sm:$0xf]
  %v676 = vld [vmem:[%s651 + $0x60] sm:$0xf]
  %v677 = vld [vmem:[%s651 + $0x64] sm:$0xf]
  %v678 = vld [vmem:[%s651 + $0x68] sm:$0xf]
  %v679 = vld [vmem:[%s651 + $0x6c] sm:$0xf]
  %v680 = vld [vmem:[%s651 + $0x70] sm:$0xf]
  %v681 = vld [vmem:[%s651 + $0x74] sm:$0xf]
  %v682 = vld [vmem:[%s651 + $0x78] sm:$0xf]
  %v683 = vld [vmem:[%s651 + $0x7c] sm:$0xf]
  %v684 = vld [vmem:[%s651 + $0x80] sm:$0xf]
  %v685 = vld [vmem:[%s651 + $0x84] sm:$0xf]
  %v686 = vld [vmem:[%s651 + $0x88] sm:$0xf]
  %v687 = vld [vmem:[%s651 + $0x8c] sm:$0xf]
  %v688 = vld [vmem:[%s651 + $0x90] sm:$0xf]
  %v689 = vld [vmem:[%s651 + $0x94] sm:$0xf]
  %v690 = vld [vmem:[%s651 + $0x98] sm:$0xf]
  %v691 = vld [vmem:[%s651 + $0x9c] sm:$0xf]
  %v692 = vld [vmem:[%s6 + $0x2] sm:$0x1]
  %v693 = vlaneseq
  %v694 = vshrl.u32 %v693, 7
  %v695 = vsub.s32 0, %v694
  %v696 = vrot.slane %v692, %v695
  %v737 = vunpack.c.l.b16 %v652
  %v738 = vunpack.c.l.b16 %v653
  %v739 = vunpack.c.l.b16 %v654
  %v740 = vunpack.c.l.b16 %v655
  %v741 = vunpack.c.l.b16 %v656
  %v742 = vunpack.c.l.b16 %v657
  %v743 = vunpack.c.l.b16 %v658
  %v744 = vunpack.c.l.b16 %v659
  %v745 = vunpack.c.l.b16 %v660
  %v746 = vunpack.c.l.b16 %v661
  %v747 = vunpack.c.l.b16 %v662
  %v748 = vunpack.c.l.b16 %v663
  %v749 = vunpack.c.l.b16 %v664
  %v750 = vunpack.c.l.b16 %v665
  %v751 = vunpack.c.l.b16 %v666
  %v752 = vunpack.c.l.b16 %v667
  %v753 = vunpack.c.l.b16 %v668
  %v754 = vunpack.c.l.b16 %v669
  %v755 = vunpack.c.l.b16 %v670
  %v756 = vunpack.c.l.b16 %v671
  %v757 = vunpack.c.l.b16 %v672
  %v758 = vunpack.c.l.b16 %v673
  %v759 = vunpack.c.l.b16 %v674
  %v760 = vunpack.c.l.b16 %v675
  %v761 = vunpack.c.l.b16 %v676
  %v762 = vunpack.c.l.b16 %v677
  %v763 = vunpack.c.l.b16 %v678
  %v764 = vunpack.c.l.b16 %v679
  %v765 = vunpack.c.l.b16 %v680
  %v766 = vunpack.c.l.b16 %v681
  %v767 = vunpack.c.l.b16 %v682
  %v768 = vunpack.c.l.b16 %v683
  %v769 = vunpack.c.l.b16 %v684
  %v770 = vunpack.c.l.b16 %v685
  %v771 = vunpack.c.l.b16 %v686
  %v772 = vunpack.c.l.b16 %v687
  %v773 = vunpack.c.l.b16 %v688
  %v774 = vunpack.c.l.b16 %v689
  %v775 = vunpack.c.l.b16 %v690
  %v776 = vunpack.c.l.b16 %v691
  %v777 = vpack.c.b16 %v738, %v737
  %v778 = vpack.c.b16 %v740, %v739
  %v779 = vpack.c.b16 %v742, %v741
  %v780 = vpack.c.b16 %v744, %v743
  %v781 = vpack.c.b16 %v746, %v745
  %v782 = vpack.c.b16 %v748, %v747
  %v783 = vpack.c.b16 %v750, %v749
  %v784 = vpack.c.b16 %v752, %v751
  %v785 = vpack.c.b16 %v754, %v753
  %v786 = vpack.c.b16 %v756, %v755
  %v787 = vpack.c.b16 %v758, %v757
  %v788 = vpack.c.b16 %v760, %v759
  %v789 = vpack.c.b16 %v762, %v761
  %v790 = vpack.c.b16 %v764, %v763
  %v791 = vpack.c.b16 %v766, %v765
  %v792 = vpack.c.b16 %v768, %v767
  %v793 = vpack.c.b16 %v770, %v769
  %v794 = vpack.c.b16 %v772, %v771
  %v795 = vpack.c.b16 %v774, %v773
  %v796 = vpack.c.b16 %v776, %v775
  %v818 = vsel %vm252, %v647, 0
  %v821 = vsel %vm252, %v650, 0
  %823 = vmatprep.subr.bf16.mxu0 0
  %824 = vmatpush1.bf16.msra.mxu0 %v784
  %825 = vmatprep.subr.bf16.mxu0 0
  %826 = vmatpush1.bf16.msra.mxu0 %v783
  %827 = vmatprep.subr.bf16.mxu0 0
  %828 = vmatpush1.bf16.msra.mxu0 %v782
  %829 = vmatprep.subr.bf16.mxu0 0
  %830 = vmatpush1.bf16.msra.mxu0 %v781
  %831 = vmatprep.subr.bf16.mxu0 0
  %832 = vmatpush1.bf16.msra.mxu0 %v780
  %833 = vmatprep.subr.bf16.mxu0 0
  %834 = vmatpush1.bf16.msra.mxu0 %v779
  %835 = vmatprep.subr.bf16.mxu0 0
  %836 = vmatpush1.bf16.msra.mxu0 %v778
  %837 = vmatprep.subr.bf16.mxu0 0
  %838 = vmatpush1.bf16.msra.mxu0 %v777
  %839 = vmatprep.subr.bf16.mxu0 0
  %840 = vmatpush2.bf16.msra.mxu0 %v792
  %841 = vmatprep.subr.bf16.mxu0 0
  %842 = vmatpush2.bf16.msra.mxu0 %v791
  %843 = vmatprep.subr.bf16.mxu0 0
  %844 = vmatpush2.bf16.msra.mxu0 %v790
  %845 = vmatprep.subr.bf16.mxu0 0
  %846 = vmatpush2.bf16.msra.mxu0 %v789
  %847 = vmatprep.subr.bf16.mxu0 0
  %848 = vmatpush2.bf16.msra.mxu0 %v788
  %849 = vmatprep.subr.bf16.mxu0 0
  %850 = vmatpush2.bf16.msra.mxu0 %v787
  %851 = vmatprep.subr.bf16.mxu0 0
  %852 = vmatpush2.bf16.msra.mxu0 %v786
  %853 = vmatprep.subr.bf16.mxu0 0
  %854 = vmatpush2.bf16.msra.mxu0 %v785
  %855 = vmatprep.mubr.bf16.mxu0 %v646
  %856 = vmatmul.mubr.bf16.gmra.mxu0 %v645
  %v857 = vpop.f32.mrf.mxu0
  %v858 = vadd.f32 %v696, %v857
  %v859 = vpop.f32.mrf.mxu0
  %v860 = vpop.f32.mrf.mxu0
  %v861 = vadd.f32 %v696, %v860
  %v862 = vpop.f32.mrf.mxu0
  %863 = vmatprep.mubr.bf16.mxu0 %v649
  %864 = vmatmul.mubr.bf16.gmra.mxu0 %v648
  %v865 = vpop.f32.mrf.mxu0
  %v866 = vadd.f32 %v696, %v865
  %v867 = vpop.f32.mrf.mxu0
  %v868 = vpop.f32.mrf.mxu0
  %v869 = vadd.f32 %v696, %v868
  %v870 = vpop.f32.mrf.mxu0
  %871 = vdwg.mxu0
  %872 = vmatprep.subr.bf16.mxu0 0
  %873 = vmatpush1.bf16.msra.mxu0 0
  %874 = vmatprep.subr.bf16.mxu0 0
  %875 = vmatpush1.bf16.msra.mxu0 0
  %876 = vmatprep.subr.bf16.mxu0 0
  %877 = vmatpush1.bf16.msra.mxu0 0
  %878 = vmatprep.subr.bf16.mxu0 0
  %879 = vmatpush1.bf16.msra.mxu0 0
  %880 = vmatprep.subr.bf16.mxu0 0
  %881 = vmatpush1.bf16.msra.mxu0 %v796
  %882 = vmatprep.subr.bf16.mxu0 0
  %883 = vmatpush1.bf16.msra.mxu0 %v795
  %884 = vmatprep.subr.bf16.mxu0 0
  %885 = vmatpush1.bf16.msra.mxu0 %v794
  %886 = vmatprep.subr.bf16.mxu0 0
  %887 = vmatpush1.bf16.msra.mxu0 %v793
  %888 = vmatprep.subr.bf16.mxu0 0
  %889 = vmatpush2.bf16.msra.mxu0 0
  %890 = vmatprep.subr.bf16.mxu0 0
  %891 = vmatpush2.bf16.msra.mxu0 0
  %892 = vmatprep.subr.bf16.mxu0 0
  %893 = vmatpush2.bf16.msra.mxu0 0
  %894 = vmatprep.subr.bf16.mxu0 0
  %895 = vmatpush2.bf16.msra.mxu0 0
  %896 = vmatprep.subr.bf16.mxu0 0
  %897 = vmatpush2.bf16.msra.mxu0 0
  %898 = vmatprep.subr.bf16.mxu0 0
  %899 = vmatpush2.bf16.msra.mxu0 0
  %900 = vmatprep.subr.bf16.mxu0 0
  %901 = vmatpush2.bf16.msra.mxu0 0
  %902 = vmatprep.subr.bf16.mxu0 0
  %903 = vmatpush2.bf16.msra.mxu0 0
  %904 = vmatprep.mubr.bf16.mxu0 0
  %905 = vmatmul.mubr.bf16.gmra.mxu0 %v818
  %v906 = vpop.f32.mrf.mxu0
  %v907 = vadd.f32 %v858, %v906
  %v908 = vpop.f32.mrf.mxu0
  %v909 = vpop.f32.mrf.mxu0
  %v910 = vadd.f32 %v861, %v909
  %v911 = vpop.f32.mrf.mxu0
  %912 = vmatprep.mubr.bf16.mxu0 0
  %913 = vmatmul.mubr.bf16.gmra.mxu0 %v821
  %v914 = vpop.f32.mrf.mxu0
  %v915 = vadd.f32 %v866, %v914
  %v916 = vpop.f32.mrf.mxu0
  %v917 = vpop.f32.mrf.mxu0
  %v918 = vadd.f32 %v869, %v917
  %v919 = vpop.f32.mrf.mxu0
  %920 = vdwg.mxu0
  %v921 = vmax.f32 %v907, 0.0
  %v922 = vmax.f32 %v910, 0.0
  %v923 = vmax.f32 %v915, 0.0
  %v924 = vmax.f32 %v918, 0.0
  %v925 = vld [vmem:[%s6 + $0x9] sm:$0x1]
  %v926 = vlaneseq
  %v927 = vshrl.u32 %v926, 7
  %v928 = vsub.s32 0, %v927
  %v929 = vrot.slane %v925, %v928
  %v930 = vmul.f32 %v921, %v929
  %v931 = vmul.f32 %v922, %v929
  %v932 = vmul.f32 %v923, %v929
  %v933 = vmul.f32 %v924, %v929
  %v934 = vld [vmem:[%s6 + $0x10] sm:$0x1]
  %v935 = vlaneseq
  %v936 = vshrl.u32 %v935, 7
  %v937 = vsub.s32 0, %v936
  %v938 = vrot.slane %v934, %v937
  %v939 = vadd.f32 %v930, %v938
  %v940 = vadd.f32 %v931, %v938
  %v941 = vadd.f32 %v932, %v938
  %v942 = vadd.f32 %v933, %v938
  %v947 = vrot.slane %v939, 6
  %v948 = vrot.slane %v940, 6
  %v949 = vsel %vm170, %v947, %v948
  %v950 = vrot.slane %v941, 6
  %v951 = vsel %vm170, %v948, %v950
  %v952 = vrot.slane %v942, 6
  %v953 = vsel %vm170, %v950, %v952
  %v958 = vsel %vm170, 0.0, %v947
  %v960 = vrot.slane %v958, 1
  %v961 = vrot.slane %v949, 1
  %v962 = vsel %vm184, %v960, %v961
  %v963 = vrot.slane %v951, 1
  %v964 = vsel %vm184, %v961, %v963
  %v965 = vrot.slane %v953, 1
  %v966 = vsel %vm184, %v963, %v965
  %967 = vrot.lane.b32.xlu0 %v962, 64
  %v968 = vpop.permute.xlu0 %967
  %969 = vrot.lane.b32.xlu0 %v964, 64
  %v970 = vpop.permute.xlu0 %969
  %971 = vrot.lane.b32.xlu0 %v966, 64
  %v972 = vpop.permute.xlu0 %971
  %973 = vrot.lane.b32.xlu0 %v965, 64
  %v974 = vpop.permute.xlu0 %973
  %v979 = vrot.slane %v958, 2
  %v980 = vrot.slane %v949, 2
  %v981 = vsel %vm204, %v979, %v980
  %v982 = vrot.slane %v951, 2
  %v983 = vsel %vm204, %v980, %v982
  %v984 = vrot.slane %v953, 2
  %v985 = vsel %vm204, %v982, %v984
  %v990 = vrot.slane %v958, 3
  %v991 = vrot.slane %v949, 3
  %v992 = vsel %vm217, %v990, %v991
  %v993 = vrot.slane %v951, 3
  %v994 = vsel %vm217, %v991, %v993
  %v995 = vrot.slane %v953, 3
  %v996 = vsel %vm217, %v993, %v995
  %v997 = vsel %vm217, %v995, %v225
  %998 = vrot.lane.b32.xlu0 %v992, 64
  %v999 = vpop.permute.xlu0 %998
  %1000 = vrot.lane.b32.xlu0 %v994, 64
  %v1001 = vpop.permute.xlu0 %1000
  %1002 = vrot.lane.b32.xlu0 %v996, 64
  %v1003 = vpop.permute.xlu0 %1002
  %1004 = vrot.lane.b32.xlu0 %v997, 64
  %v1005 = vpop.permute.xlu0 %1004
  %v1010 = vrot.slane %v958, 4
  %v1011 = vrot.slane %v949, 4
  %v1012 = vsel %vm91, %v1010, %v1011
  %v1013 = vrot.slane %v951, 4
  %v1014 = vsel %vm91, %v1011, %v1013
  %v1015 = vrot.slane %v953, 4
  %v1016 = vsel %vm91, %v1013, %v1015
  %v1017 = vsel %vm91, %v1015, %v246
  %v1022 = vsel %vm252, %v958, %v968
  %v1023 = vsel %vm252, %v949, %v970
  %v1024 = vsel %vm252, %v951, %v972
  %v1025 = vsel %vm252, %v953, %v974
  %v1026 = vsel %vm252, %v981, %v999
  %v1027 = vsel %vm252, %v983, %v1001
  %v1028 = vsel %vm252, %v985, %v1003
  %v1029 = vsel %vm252, %v984, %v1005
  %v1030 = vpack.c.bf16 %v1023, %v1022
  %v1031 = vpack.c.bf16 %v1027, %v1026
  %v1032 = vpack.c.bf16 %v1014, %v1012
  %v1033 = vpack.c.bf16 %v1025, %v1024
  %v1034 = vpack.c.bf16 %v1029, %v1028
  %v1035 = vpack.c.bf16 %v1017, %v1016
  %s1036 = scalar_lea.vmem %s3, 320
  %v1037 = vld [vmem:[%s1036] sm:$0xf]
  %v1038 = vld [vmem:[%s1036 + $0x4] sm:$0xf]
  %v1039 = vld [vmem:[%s1036 + $0x8] sm:$0xf]
  %v1040 = vld [vmem:[%s1036 + $0xc] sm:$0xf]
  %v1041 = vld [vmem:[%s1036 + $0x10] sm:$0xf]
  %v1042 = vld [vmem:[%s1036 + $0x14] sm:$0xf]
  %v1043 = vld [vmem:[%s1036 + $0x18] sm:$0xf]
  %v1044 = vld [vmem:[%s1036 + $0x1c] sm:$0xf]
  %v1045 = vld [vmem:[%s1036 + $0x20] sm:$0xf]
  %v1046 = vld [vmem:[%s1036 + $0x24] sm:$0xf]
  %v1047 = vld [vmem:[%s1036 + $0x28] sm:$0xf]
  %v1048 = vld [vmem:[%s1036 + $0x2c] sm:$0xf]
  %v1049 = vld [vmem:[%s1036 + $0x30] sm:$0xf]
  %v1050 = vld [vmem:[%s1036 + $0x34] sm:$0xf]
  %v1051 = vld [vmem:[%s1036 + $0x38] sm:$0xf]
  %v1052 = vld [vmem:[%s1036 + $0x3c] sm:$0xf]
  %v1053 = vld [vmem:[%s1036 + $0x40] sm:$0xf]
  %v1054 = vld [vmem:[%s1036 + $0x44] sm:$0xf]
  %v1055 = vld [vmem:[%s1036 + $0x48] sm:$0xf]
  %v1056 = vld [vmem:[%s1036 + $0x4c] sm:$0xf]
  %v1057 = vld [vmem:[%s1036 + $0x50] sm:$0xf]
  %v1058 = vld [vmem:[%s1036 + $0x54] sm:$0xf]
  %v1059 = vld [vmem:[%s1036 + $0x58] sm:$0xf]
  %v1060 = vld [vmem:[%s1036 + $0x5c] sm:$0xf]
  %v1061 = vld [vmem:[%s1036 + $0x60] sm:$0xf]
  %v1062 = vld [vmem:[%s1036 + $0x64] sm:$0xf]
  %v1063 = vld [vmem:[%s1036 + $0x68] sm:$0xf]
  %v1064 = vld [vmem:[%s1036 + $0x6c] sm:$0xf]
  %v1065 = vld [vmem:[%s1036 + $0x70] sm:$0xf]
  %v1066 = vld [vmem:[%s1036 + $0x74] sm:$0xf]
  %v1067 = vld [vmem:[%s1036 + $0x78] sm:$0xf]
  %v1068 = vld [vmem:[%s1036 + $0x7c] sm:$0xf]
  %v1069 = vld [vmem:[%s1036 + $0x80] sm:$0xf]
  %v1070 = vld [vmem:[%s1036 + $0x84] sm:$0xf]
  %v1071 = vld [vmem:[%s1036 + $0x88] sm:$0xf]
  %v1072 = vld [vmem:[%s1036 + $0x8c] sm:$0xf]
  %v1073 = vld [vmem:[%s1036 + $0x90] sm:$0xf]
  %v1074 = vld [vmem:[%s1036 + $0x94] sm:$0xf]
  %v1075 = vld [vmem:[%s1036 + $0x98] sm:$0xf]
  %v1076 = vld [vmem:[%s1036 + $0x9c] sm:$0xf]
  %v1077 = vld [vmem:[%s6 + $0x3] sm:$0x1]
  %v1078 = vlaneseq
  %v1079 = vshrl.u32 %v1078, 7
  %v1080 = vsub.s32 0, %v1079
  %v1081 = vrot.slane %v1077, %v1080
  %v1122 = vunpack.c.l.b16 %v1037
  %v1123 = vunpack.c.l.b16 %v1038
  %v1124 = vunpack.c.l.b16 %v1039
  %v1125 = vunpack.c.l.b16 %v1040
  %v1126 = vunpack.c.l.b16 %v1041
  %v1127 = vunpack.c.l.b16 %v1042
  %v1128 = vunpack.c.l.b16 %v1043
  %v1129 = vunpack.c.l.b16 %v1044
  %v1130 = vunpack.c.l.b16 %v1045
  %v1131 = vunpack.c.l.b16 %v1046
  %v1132 = vunpack.c.l.b16 %v1047
  %v1133 = vunpack.c.l.b16 %v1048
  %v1134 = vunpack.c.l.b16 %v1049
  %v1135 = vunpack.c.l.b16 %v1050
  %v1136 = vunpack.c.l.b16 %v1051
  %v1137 = vunpack.c.l.b16 %v1052
  %v1138 = vunpack.c.l.b16 %v1053
  %v1139 = vunpack.c.l.b16 %v1054
  %v1140 = vunpack.c.l.b16 %v1055
  %v1141 = vunpack.c.l.b16 %v1056
  %v1142 = vunpack.c.l.b16 %v1057
  %v1143 = vunpack.c.l.b16 %v1058
  %v1144 = vunpack.c.l.b16 %v1059
  %v1145 = vunpack.c.l.b16 %v1060
  %v1146 = vunpack.c.l.b16 %v1061
  %v1147 = vunpack.c.l.b16 %v1062
  %v1148 = vunpack.c.l.b16 %v1063
  %v1149 = vunpack.c.l.b16 %v1064
  %v1150 = vunpack.c.l.b16 %v1065
  %v1151 = vunpack.c.l.b16 %v1066
  %v1152 = vunpack.c.l.b16 %v1067
  %v1153 = vunpack.c.l.b16 %v1068
  %v1154 = vunpack.c.l.b16 %v1069
  %v1155 = vunpack.c.l.b16 %v1070
  %v1156 = vunpack.c.l.b16 %v1071
  %v1157 = vunpack.c.l.b16 %v1072
  %v1158 = vunpack.c.l.b16 %v1073
  %v1159 = vunpack.c.l.b16 %v1074
  %v1160 = vunpack.c.l.b16 %v1075
  %v1161 = vunpack.c.l.b16 %v1076
  %v1162 = vpack.c.b16 %v1123, %v1122
  %v1163 = vpack.c.b16 %v1125, %v1124
  %v1164 = vpack.c.b16 %v1127, %v1126
  %v1165 = vpack.c.b16 %v1129, %v1128
  %v1166 = vpack.c.b16 %v1131, %v1130
  %v1167 = vpack.c.b16 %v1133, %v1132
  %v1168 = vpack.c.b16 %v1135, %v1134
  %v1169 = vpack.c.b16 %v1137, %v1136
  %v1170 = vpack.c.b16 %v1139, %v1138
  %v1171 = vpack.c.b16 %v1141, %v1140
  %v1172 = vpack.c.b16 %v1143, %v1142
  %v1173 = vpack.c.b16 %v1145, %v1144
  %v1174 = vpack.c.b16 %v1147, %v1146
  %v1175 = vpack.c.b16 %v1149, %v1148
  %v1176 = vpack.c.b16 %v1151, %v1150
  %v1177 = vpack.c.b16 %v1153, %v1152
  %v1178 = vpack.c.b16 %v1155, %v1154
  %v1179 = vpack.c.b16 %v1157, %v1156
  %v1180 = vpack.c.b16 %v1159, %v1158
  %v1181 = vpack.c.b16 %v1161, %v1160
  %v1203 = vsel %vm252, %v1032, 0
  %v1206 = vsel %vm252, %v1035, 0
  %1208 = vmatprep.subr.bf16.mxu0 0
  %1209 = vmatpush1.bf16.msra.mxu0 %v1169
  %1210 = vmatprep.subr.bf16.mxu0 0
  %1211 = vmatpush1.bf16.msra.mxu0 %v1168
  %1212 = vmatprep.subr.bf16.mxu0 0
  %1213 = vmatpush1.bf16.msra.mxu0 %v1167
  %1214 = vmatprep.subr.bf16.mxu0 0
  %1215 = vmatpush1.bf16.msra.mxu0 %v1166
  %1216 = vmatprep.subr.bf16.mxu0 0
  %1217 = vmatpush1.bf16.msra.mxu0 %v1165
  %1218 = vmatprep.subr.bf16.mxu0 0
  %1219 = vmatpush1.bf16.msra.mxu0 %v1164
  %1220 = vmatprep.subr.bf16.mxu0 0
  %1221 = vmatpush1.bf16.msra.mxu0 %v1163
  %1222 = vmatprep.subr.bf16.mxu0 0
  %1223 = vmatpush1.bf16.msra.mxu0 %v1162
  %1224 = vmatprep.subr.bf16.mxu0 0
  %1225 = vmatpush2.bf16.msra.mxu0 %v1177
  %1226 = vmatprep.subr.bf16.mxu0 0
  %1227 = vmatpush2.bf16.msra.mxu0 %v1176
  %1228 = vmatprep.subr.bf16.mxu0 0
  %1229 = vmatpush2.bf16.msra.mxu0 %v1175
  %1230 = vmatprep.subr.bf16.mxu0 0
  %1231 = vmatpush2.bf16.msra.mxu0 %v1174
  %1232 = vmatprep.subr.bf16.mxu0 0
  %1233 = vmatpush2.bf16.msra.mxu0 %v1173
  %1234 = vmatprep.subr.bf16.mxu0 0
  %1235 = vmatpush2.bf16.msra.mxu0 %v1172
  %1236 = vmatprep.subr.bf16.mxu0 0
  %1237 = vmatpush2.bf16.msra.mxu0 %v1171
  %1238 = vmatprep.subr.bf16.mxu0 0
  %1239 = vmatpush2.bf16.msra.mxu0 %v1170
  %1240 = vmatprep.mubr.bf16.mxu0 %v1031
  %1241 = vmatmul.mubr.bf16.gmra.mxu0 %v1030
  %v1242 = vpop.f32.mrf.mxu0
  %v1243 = vadd.f32 %v1081, %v1242
  %v1244 = vpop.f32.mrf.mxu0
  %v1245 = vpop.f32.mrf.mxu0
  %v1246 = vadd.f32 %v1081, %v1245
  %v1247 = vpop.f32.mrf.mxu0
  %1248 = vmatprep.mubr.bf16.mxu0 %v1034
  %1249 = vmatmul.mubr.bf16.gmra.mxu0 %v1033
  %v1250 = vpop.f32.mrf.mxu0
  %v1251 = vadd.f32 %v1081, %v1250
  %v1252 = vpop.f32.mrf.mxu0
  %v1253 = vpop.f32.mrf.mxu0
  %v1254 = vadd.f32 %v1081, %v1253
  %v1255 = vpop.f32.mrf.mxu0
  %1256 = vdwg.mxu0
  %1257 = vmatprep.subr.bf16.mxu0 0
  %1258 = vmatpush1.bf16.msra.mxu0 0
  %1259 = vmatprep.subr.bf16.mxu0 0
  %1260 = vmatpush1.bf16.msra.mxu0 0
  %1261 = vmatprep.subr.bf16.mxu0 0
  %1262 = vmatpush1.bf16.msra.mxu0 0
  %1263 = vmatprep.subr.bf16.mxu0 0
  %1264 = vmatpush1.bf16.msra.mxu0 0
  %1265 = vmatprep.subr.bf16.mxu0 0
  %1266 = vmatpush1.bf16.msra.mxu0 %v1181
  %1267 = vmatprep.subr.bf16.mxu0 0
  %1268 = vmatpush1.bf16.msra.mxu0 %v1180
  %1269 = vmatprep.subr.bf16.mxu0 0
  %1270 = vmatpush1.bf16.msra.mxu0 %v1179
  %1271 = vmatprep.subr.bf16.mxu0 0
  %1272 = vmatpush1.bf16.msra.mxu0 %v1178
  %1273 = vmatprep.subr.bf16.mxu0 0
  %1274 = vmatpush2.bf16.msra.mxu0 0
  %1275 = vmatprep.subr.bf16.mxu0 0
  %1276 = vmatpush2.bf16.msra.mxu0 0
  %1277 = vmatprep.subr.bf16.mxu0 0
  %1278 = vmatpush2.bf16.msra.mxu0 0
  %1279 = vmatprep.subr.bf16.mxu0 0
  %1280 = vmatpush2.bf16.msra.mxu0 0
  %1281 = vmatprep.subr.bf16.mxu0 0
  %1282 = vmatpush2.bf16.msra.mxu0 0
  %1283 = vmatprep.subr.bf16.mxu0 0
  %1284 = vmatpush2.bf16.msra.mxu0 0
  %1285 = vmatprep.subr.bf16.mxu0 0
  %1286 = vmatpush2.bf16.msra.mxu0 0
  %1287 = vmatprep.subr.bf16.mxu0 0
  %1288 = vmatpush2.bf16.msra.mxu0 0
  %1289 = vmatprep.mubr.bf16.mxu0 0
  %1290 = vmatmul.mubr.bf16.gmra.mxu0 %v1203
  %v1291 = vpop.f32.mrf.mxu0
  %v1292 = vadd.f32 %v1243, %v1291
  %v1293 = vpop.f32.mrf.mxu0
  %v1294 = vpop.f32.mrf.mxu0
  %v1295 = vadd.f32 %v1246, %v1294
  %v1296 = vpop.f32.mrf.mxu0
  %1297 = vmatprep.mubr.bf16.mxu0 0
  %1298 = vmatmul.mubr.bf16.gmra.mxu0 %v1206
  %v1299 = vpop.f32.mrf.mxu0
  %v1300 = vadd.f32 %v1251, %v1299
  %v1301 = vpop.f32.mrf.mxu0
  %v1302 = vpop.f32.mrf.mxu0
  %v1303 = vadd.f32 %v1254, %v1302
  %v1304 = vpop.f32.mrf.mxu0
  %1305 = vdwg.mxu0
  %v1306 = vmax.f32 %v1292, 0.0
  %v1307 = vmax.f32 %v1295, 0.0
  %v1308 = vmax.f32 %v1300, 0.0
  %v1309 = vmax.f32 %v1303, 0.0
  %v1310 = vld [vmem:[%s6 + $0xa] sm:$0x1]
  %v1311 = vlaneseq
  %v1312 = vshrl.u32 %v1311, 7
  %v1313 = vsub.s32 0, %v1312
  %v1314 = vrot.slane %v1310, %v1313
  %v1315 = vmul.f32 %v1306, %v1314
  %v1316 = vmul.f32 %v1307, %v1314
  %v1317 = vmul.f32 %v1308, %v1314
  %v1318 = vmul.f32 %v1309, %v1314
  %v1319 = vld [vmem:[%s6 + $0x11] sm:$0x1]
  %v1320 = vlaneseq
  %v1321 = vshrl.u32 %v1320, 7
  %v1322 = vsub.s32 0, %v1321
  %v1323 = vrot.slane %v1319, %v1322
  %v1324 = vadd.f32 %v1315, %v1323
  %v1325 = vadd.f32 %v1316, %v1323
  %v1326 = vadd.f32 %v1317, %v1323
  %v1327 = vadd.f32 %v1318, %v1323
  %v1332 = vrot.slane %v1324, 1
  %v1333 = vrot.slane %v1325, 1
  %v1334 = vsel %vm184, %v1332, %v1333
  %v1335 = vrot.slane %v1326, 1
  %v1336 = vsel %vm184, %v1333, %v1335
  %v1337 = vrot.slane %v1327, 1
  %v1338 = vsel %vm184, %v1335, %v1337
  %1339 = vrot.lane.b32.xlu0 %v1334, 64
  %v1340 = vpop.permute.xlu0 %1339
  %1341 = vrot.lane.b32.xlu0 %v1336, 64
  %v1342 = vpop.permute.xlu0 %1341
  %1343 = vrot.lane.b32.xlu0 %v1338, 64
  %v1344 = vpop.permute.xlu0 %1343
  %1345 = vrot.lane.b32.xlu0 %v1337, 64
  %v1346 = vpop.permute.xlu0 %1345
  %v1351 = vrot.slane %v1324, 2
  %v1352 = vrot.slane %v1325, 2
  %v1353 = vsel %vm204, %v1351, %v1352
  %v1354 = vrot.slane %v1326, 2
  %v1355 = vsel %vm204, %v1352, %v1354
  %v1356 = vrot.slane %v1327, 2
  %v1357 = vsel %vm204, %v1354, %v1356
  %v1362 = vrot.slane %v1324, 3
  %v1363 = vrot.slane %v1325, 3
  %v1364 = vsel %vm217, %v1362, %v1363
  %v1365 = vrot.slane %v1326, 3
  %v1366 = vsel %vm217, %v1363, %v1365
  %v1367 = vrot.slane %v1327, 3
  %v1368 = vsel %vm217, %v1365, %v1367
  %1369 = vrot.lane.b32.xlu0 %v1364, 64
  %v1370 = vpop.permute.xlu0 %1369
  %1371 = vrot.lane.b32.xlu0 %v1366, 64
  %v1372 = vpop.permute.xlu0 %1371
  %1373 = vrot.lane.b32.xlu0 %v1368, 64
  %v1374 = vpop.permute.xlu0 %1373
  %1375 = vrot.lane.b32.xlu0 %v1367, 64
  %v1376 = vpop.permute.xlu0 %1375
  %v1381 = vrot.slane %v1324, 4
  %v1382 = vrot.slane %v1325, 4
  %v1383 = vsel %vm91, %v1381, %v1382
  %v1384 = vrot.slane %v1326, 4
  %v1385 = vsel %vm91, %v1382, %v1384
  %v1386 = vrot.slane %v1327, 4
  %v1387 = vsel %vm91, %v1384, %v1386
  %v1392 = vsel %vm252, %v1324, %v1340
  %v1393 = vsel %vm252, %v1325, %v1342
  %v1394 = vsel %vm252, %v1326, %v1344
  %v1395 = vsel %vm252, %v1327, %v1346
  %v1396 = vsel %vm252, %v1353, %v1370
  %v1397 = vsel %vm252, %v1355, %v1372
  %v1398 = vsel %vm252, %v1357, %v1374
  %v1399 = vsel %vm252, %v1356, %v1376
  %v1400 = vpack.c.bf16 %v1393, %v1392
  %v1401 = vpack.c.bf16 %v1397, %v1396
  %v1402 = vpack.c.bf16 %v1385, %v1383
  %v1403 = vpack.c.bf16 %v1395, %v1394
  %v1404 = vpack.c.bf16 %v1399, %v1398
  %v1405 = vpack.c.bf16 %v1386, %v1387
  %s1406 = scalar_lea.vmem %s3, 480
  %v1407 = vld [vmem:[%s1406] sm:$0xf]
  %v1408 = vld [vmem:[%s1406 + $0x4] sm:$0xf]
  %v1409 = vld [vmem:[%s1406 + $0x8] sm:$0xf]
  %v1410 = vld [vmem:[%s1406 + $0xc] sm:$0xf]
  %v1411 = vld [vmem:[%s1406 + $0x10] sm:$0xf]
  %v1412 = vld [vmem:[%s1406 + $0x14] sm:$0xf]
  %v1413 = vld [vmem:[%s1406 + $0x18] sm:$0xf]
  %v1414 = vld [vmem:[%s1406 + $0x1c] sm:$0xf]
  %v1415 = vld [vmem:[%s1406 + $0x20] sm:$0xf]
  %v1416 = vld [vmem:[%s1406 + $0x24] sm:$0xf]
  %v1417 = vld [vmem:[%s1406 + $0x28] sm:$0xf]
  %v1418 = vld [vmem:[%s1406 + $0x2c] sm:$0xf]
  %v1419 = vld [vmem:[%s1406 + $0x30] sm:$0xf]
  %v1420 = vld [vmem:[%s1406 + $0x34] sm:$0xf]
  %v1421 = vld [vmem:[%s1406 + $0x38] sm:$0xf]
  %v1422 = vld [vmem:[%s1406 + $0x3c] sm:$0xf]
  %v1423 = vld [vmem:[%s1406 + $0x40] sm:$0xf]
  %v1424 = vld [vmem:[%s1406 + $0x44] sm:$0xf]
  %v1425 = vld [vmem:[%s1406 + $0x48] sm:$0xf]
  %v1426 = vld [vmem:[%s1406 + $0x4c] sm:$0xf]
  %v1427 = vld [vmem:[%s1406 + $0x50] sm:$0xf]
  %v1428 = vld [vmem:[%s1406 + $0x54] sm:$0xf]
  %v1429 = vld [vmem:[%s1406 + $0x58] sm:$0xf]
  %v1430 = vld [vmem:[%s1406 + $0x5c] sm:$0xf]
  %v1431 = vld [vmem:[%s1406 + $0x60] sm:$0xf]
  %v1432 = vld [vmem:[%s1406 + $0x64] sm:$0xf]
  %v1433 = vld [vmem:[%s1406 + $0x68] sm:$0xf]
  %v1434 = vld [vmem:[%s1406 + $0x6c] sm:$0xf]
  %v1435 = vld [vmem:[%s1406 + $0x70] sm:$0xf]
  %v1436 = vld [vmem:[%s1406 + $0x74] sm:$0xf]
  %v1437 = vld [vmem:[%s1406 + $0x78] sm:$0xf]
  %v1438 = vld [vmem:[%s1406 + $0x7c] sm:$0xf]
  %v1439 = vld [vmem:[%s1406 + $0x80] sm:$0xf]
  %v1440 = vld [vmem:[%s1406 + $0x84] sm:$0xf]
  %v1441 = vld [vmem:[%s1406 + $0x88] sm:$0xf]
  %v1442 = vld [vmem:[%s1406 + $0x8c] sm:$0xf]
  %v1443 = vld [vmem:[%s1406 + $0x90] sm:$0xf]
  %v1444 = vld [vmem:[%s1406 + $0x94] sm:$0xf]
  %v1445 = vld [vmem:[%s1406 + $0x98] sm:$0xf]
  %v1446 = vld [vmem:[%s1406 + $0x9c] sm:$0xf]
  %v1447 = vld [vmem:[%s6 + $0x4] sm:$0x1]
  %v1448 = vlaneseq
  %v1449 = vshrl.u32 %v1448, 7
  %v1450 = vsub.s32 0, %v1449
  %v1451 = vrot.slane %v1447, %v1450
  %v1492 = vunpack.c.l.b16 %v1407
  %v1493 = vunpack.c.l.b16 %v1408
  %v1494 = vunpack.c.l.b16 %v1409
  %v1495 = vunpack.c.l.b16 %v1410
  %v1496 = vunpack.c.l.b16 %v1411
  %v1497 = vunpack.c.l.b16 %v1412
  %v1498 = vunpack.c.l.b16 %v1413
  %v1499 = vunpack.c.l.b16 %v1414
  %v1500 = vunpack.c.l.b16 %v1415
  %v1501 = vunpack.c.l.b16 %v1416
  %v1502 = vunpack.c.l.b16 %v1417
  %v1503 = vunpack.c.l.b16 %v1418
  %v1504 = vunpack.c.l.b16 %v1419
  %v1505 = vunpack.c.l.b16 %v1420
  %v1506 = vunpack.c.l.b16 %v1421
  %v1507 = vunpack.c.l.b16 %v1422
  %v1508 = vunpack.c.l.b16 %v1423
  %v1509 = vunpack.c.l.b16 %v1424
  %v1510 = vunpack.c.l.b16 %v1425
  %v1511 = vunpack.c.l.b16 %v1426
  %v1512 = vunpack.c.l.b16 %v1427
  %v1513 = vunpack.c.l.b16 %v1428
  %v1514 = vunpack.c.l.b16 %v1429
  %v1515 = vunpack.c.l.b16 %v1430
  %v1516 = vunpack.c.l.b16 %v1431
  %v1517 = vunpack.c.l.b16 %v1432
  %v1518 = vunpack.c.l.b16 %v1433
  %v1519 = vunpack.c.l.b16 %v1434
  %v1520 = vunpack.c.l.b16 %v1435
  %v1521 = vunpack.c.l.b16 %v1436
  %v1522 = vunpack.c.l.b16 %v1437
  %v1523 = vunpack.c.l.b16 %v1438
  %v1524 = vunpack.c.l.b16 %v1439
  %v1525 = vunpack.c.l.b16 %v1440
  %v1526 = vunpack.c.l.b16 %v1441
  %v1527 = vunpack.c.l.b16 %v1442
  %v1528 = vunpack.c.l.b16 %v1443
  %v1529 = vunpack.c.l.b16 %v1444
  %v1530 = vunpack.c.l.b16 %v1445
  %v1531 = vunpack.c.l.b16 %v1446
  %v1532 = vpack.c.b16 %v1493, %v1492
  %v1533 = vpack.c.b16 %v1495, %v1494
  %v1534 = vpack.c.b16 %v1497, %v1496
  %v1535 = vpack.c.b16 %v1499, %v1498
  %v1536 = vpack.c.b16 %v1501, %v1500
  %v1537 = vpack.c.b16 %v1503, %v1502
  %v1538 = vpack.c.b16 %v1505, %v1504
  %v1539 = vpack.c.b16 %v1507, %v1506
  %v1540 = vpack.c.b16 %v1509, %v1508
  %v1541 = vpack.c.b16 %v1511, %v1510
  %v1542 = vpack.c.b16 %v1513, %v1512
  %v1543 = vpack.c.b16 %v1515, %v1514
  %v1544 = vpack.c.b16 %v1517, %v1516
  %v1545 = vpack.c.b16 %v1519, %v1518
  %v1546 = vpack.c.b16 %v1521, %v1520
  %v1547 = vpack.c.b16 %v1523, %v1522
  %v1548 = vpack.c.b16 %v1525, %v1524
  %v1549 = vpack.c.b16 %v1527, %v1526
  %v1550 = vpack.c.b16 %v1529, %v1528
  %v1551 = vpack.c.b16 %v1531, %v1530
  %v1573 = vsel %vm252, %v1402, 0
  %v1576 = vsel %vm252, %v1405, 0
  %1578 = vmatprep.subr.bf16.mxu0 0
  %1579 = vmatpush1.bf16.msra.mxu0 %v1539
  %1580 = vmatprep.subr.bf16.mxu0 0
  %1581 = vmatpush1.bf16.msra.mxu0 %v1538
  %1582 = vmatprep.subr.bf16.mxu0 0
  %1583 = vmatpush1.bf16.msra.mxu0 %v1537
  %1584 = vmatprep.subr.bf16.mxu0 0
  %1585 = vmatpush1.bf16.msra.mxu0 %v1536
  %1586 = vmatprep.subr.bf16.mxu0 0
  %1587 = vmatpush1.bf16.msra.mxu0 %v1535
  %1588 = vmatprep.subr.bf16.mxu0 0
  %1589 = vmatpush1.bf16.msra.mxu0 %v1534
  %1590 = vmatprep.subr.bf16.mxu0 0
  %1591 = vmatpush1.bf16.msra.mxu0 %v1533
  %1592 = vmatprep.subr.bf16.mxu0 0
  %1593 = vmatpush1.bf16.msra.mxu0 %v1532
  %1594 = vmatprep.subr.bf16.mxu0 0
  %1595 = vmatpush2.bf16.msra.mxu0 %v1547
  %1596 = vmatprep.subr.bf16.mxu0 0
  %1597 = vmatpush2.bf16.msra.mxu0 %v1546
  %1598 = vmatprep.subr.bf16.mxu0 0
  %1599 = vmatpush2.bf16.msra.mxu0 %v1545
  %1600 = vmatprep.subr.bf16.mxu0 0
  %1601 = vmatpush2.bf16.msra.mxu0 %v1544
  %1602 = vmatprep.subr.bf16.mxu0 0
  %1603 = vmatpush2.bf16.msra.mxu0 %v1543
  %1604 = vmatprep.subr.bf16.mxu0 0
  %1605 = vmatpush2.bf16.msra.mxu0 %v1542
  %1606 = vmatprep.subr.bf16.mxu0 0
  %1607 = vmatpush2.bf16.msra.mxu0 %v1541
  %1608 = vmatprep.subr.bf16.mxu0 0
  %1609 = vmatpush2.bf16.msra.mxu0 %v1540
  %1610 = vmatprep.mubr.bf16.mxu0 %v1401
  %1611 = vmatmul.mubr.bf16.gmra.mxu0 %v1400
  %v1612 = vpop.f32.mrf.mxu0
  %v1613 = vadd.f32 %v1451, %v1612
  %v1614 = vpop.f32.mrf.mxu0
  %v1615 = vpop.f32.mrf.mxu0
  %v1616 = vadd.f32 %v1451, %v1615
  %v1617 = vpop.f32.mrf.mxu0
  %1618 = vmatprep.mubr.bf16.mxu0 %v1404
  %1619 = vmatmul.mubr.bf16.gmra.mxu0 %v1403
  %v1620 = vpop.f32.mrf.mxu0
  %v1621 = vadd.f32 %v1451, %v1620
  %v1622 = vpop.f32.mrf.mxu0
  %v1623 = vpop.f32.mrf.mxu0
  %v1624 = vadd.f32 %v1451, %v1623
  %v1625 = vpop.f32.mrf.mxu0
  %1626 = vdwg.mxu0
  %1627 = vmatprep.subr.bf16.mxu0 0
  %1628 = vmatpush1.bf16.msra.mxu0 0
  %1629 = vmatprep.subr.bf16.mxu0 0
  %1630 = vmatpush1.bf16.msra.mxu0 0
  %1631 = vmatprep.subr.bf16.mxu0 0
  %1632 = vmatpush1.bf16.msra.mxu0 0
  %1633 = vmatprep.subr.bf16.mxu0 0
  %1634 = vmatpush1.bf16.msra.mxu0 0
  %1635 = vmatprep.subr.bf16.mxu0 0
  %1636 = vmatpush1.bf16.msra.mxu0 %v1551
  %1637 = vmatprep.subr.bf16.mxu0 0
  %1638 = vmatpush1.bf16.msra.mxu0 %v1550
  %1639 = vmatprep.subr.bf16.mxu0 0
  %1640 = vmatpush1.bf16.msra.mxu0 %v1549
  %1641 = vmatprep.subr.bf16.mxu0 0
  %1642 = vmatpush1.bf16.msra.mxu0 %v1548
  %1643 = vmatprep.subr.bf16.mxu0 0
  %1644 = vmatpush2.bf16.msra.mxu0 0
  %1645 = vmatprep.subr.bf16.mxu0 0
  %1646 = vmatpush2.bf16.msra.mxu0 0
  %1647 = vmatprep.subr.bf16.mxu0 0
  %1648 = vmatpush2.bf16.msra.mxu0 0
  %1649 = vmatprep.subr.bf16.mxu0 0
  %1650 = vmatpush2.bf16.msra.mxu0 0
  %1651 = vmatprep.subr.bf16.mxu0 0
  %1652 = vmatpush2.bf16.msra.mxu0 0
  %1653 = vmatprep.subr.bf16.mxu0 0
  %1654 = vmatpush2.bf16.msra.mxu0 0
  %1655 = vmatprep.subr.bf16.mxu0 0
  %1656 = vmatpush2.bf16.msra.mxu0 0
  %1657 = vmatprep.subr.bf16.mxu0 0
  %1658 = vmatpush2.bf16.msra.mxu0 0
  %1659 = vmatprep.mubr.bf16.mxu0 0
  %1660 = vmatmul.mubr.bf16.gmra.mxu0 %v1573
  %v1661 = vpop.f32.mrf.mxu0
  %v1662 = vadd.f32 %v1613, %v1661
  %v1663 = vpop.f32.mrf.mxu0
  %v1664 = vpop.f32.mrf.mxu0
  %v1665 = vadd.f32 %v1616, %v1664
  %v1666 = vpop.f32.mrf.mxu0
  %1667 = vmatprep.mubr.bf16.mxu0 0
  %1668 = vmatmul.mubr.bf16.gmra.mxu0 %v1576
  %v1669 = vpop.f32.mrf.mxu0
  %v1670 = vadd.f32 %v1621, %v1669
  %v1671 = vpop.f32.mrf.mxu0
  %v1672 = vpop.f32.mrf.mxu0
  %v1673 = vadd.f32 %v1624, %v1672
  %v1674 = vpop.f32.mrf.mxu0
  %1675 = vdwg.mxu0
  %v1676 = vmax.f32 %v1662, 0.0
  %v1677 = vmax.f32 %v1665, 0.0
  %v1678 = vmax.f32 %v1670, 0.0
  %v1679 = vmax.f32 %v1673, 0.0
  %v1680 = vld [vmem:[%s6 + $0xb] sm:$0x1]
  %v1681 = vlaneseq
  %v1682 = vshrl.u32 %v1681, 7
  %v1683 = vsub.s32 0, %v1682
  %v1684 = vrot.slane %v1680, %v1683
  %v1685 = vmul.f32 %v1676, %v1684
  %v1686 = vmul.f32 %v1677, %v1684
  %v1687 = vmul.f32 %v1678, %v1684
  %v1688 = vmul.f32 %v1679, %v1684
  %v1689 = vld [vmem:[%s6 + $0x12] sm:$0x1]
  %v1690 = vlaneseq
  %v1691 = vshrl.u32 %v1690, 7
  %v1692 = vsub.s32 0, %v1691
  %v1693 = vrot.slane %v1689, %v1692
  %v1694 = vadd.f32 %v1685, %v1693
  %v1695 = vadd.f32 %v1686, %v1693
  %v1696 = vadd.f32 %v1687, %v1693
  %v1697 = vadd.f32 %v1688, %v1693
  %v1701 = vrot.slane %v1694, 1
  %v1702 = vrot.slane %v1695, 1
  %v1703 = vsel %vm184, %v1701, %v1702
  %v1704 = vrot.slane %v1696, 1
  %v1705 = vsel %vm184, %v1702, %v1704
  %1706 = vrot.lane.b32.xlu0 %v1703, 64
  %v1707 = vpop.permute.xlu0 %1706
  %1708 = vrot.lane.b32.xlu0 %v1705, 64
  %v1709 = vpop.permute.xlu0 %1708
  %1710 = vrot.lane.b32.xlu0 %v1704, 64
  %v1711 = vpop.permute.xlu0 %1710
  %v1715 = vrot.slane %v1694, 2
  %v1716 = vrot.slane %v1695, 2
  %v1717 = vsel %vm204, %v1715, %v1716
  %v1718 = vrot.slane %v1696, 2
  %v1719 = vsel %vm204, %v1716, %v1718
  %v1724 = vrot.slane %v1694, 3
  %v1725 = vrot.slane %v1695, 3
  %v1726 = vsel %vm217, %v1724, %v1725
  %v1727 = vrot.slane %v1696, 3
  %v1728 = vsel %vm217, %v1725, %v1727
  %v1729 = vrot.slane %v1697, 3
  %v1730 = vsel %vm217, %v1727, %v1729
  %1731 = vrot.lane.b32.xlu0 %v1726, 64
  %v1732 = vpop.permute.xlu0 %1731
  %1733 = vrot.lane.b32.xlu0 %v1728, 64
  %v1734 = vpop.permute.xlu0 %1733
  %1735 = vrot.lane.b32.xlu0 %v1730, 64
  %v1736 = vpop.permute.xlu0 %1735
  %v1740 = vrot.slane %v1694, 4
  %v1741 = vrot.slane %v1695, 4
  %v1742 = vsel %vm91, %v1740, %v1741
  %v1743 = vrot.slane %v1696, 4
  %v1744 = vsel %vm91, %v1741, %v1743
  %v1745 = vrot.slane %v1697, 4
  %v1746 = vsel %vm91, %v1743, %v1745
  %v1750 = vsel %vm252, %v1694, %v1707
  %v1751 = vsel %vm252, %v1695, %v1709
  %v1752 = vsel %vm252, %v1696, %v1711
  %v1753 = vsel %vm252, %v1717, %v1732
  %v1754 = vsel %vm252, %v1719, %v1734
  %v1755 = vsel %vm252, %v1718, %v1736
  %v1756 = vpack.c.bf16 %v1751, %v1750
  %v1757 = vpack.c.bf16 %v1754, %v1753
  %v1758 = vpack.c.bf16 %v1744, %v1742
  %v1759 = vpack.c.bf16 %v1752, %v1752
  %v1760 = vpack.c.bf16 %v1755, %v1755
  %v1761 = vpack.c.bf16 %v1746, %v1746
  %s1762 = scalar_lea.vmem %s3, 640
  %v1763 = vld [vmem:[%s1762] sm:$0xf]
  %v1764 = vld [vmem:[%s1762 + $0x4] sm:$0xf]
  %v1765 = vld [vmem:[%s1762 + $0x8] sm:$0xf]
  %v1766 = vld [vmem:[%s1762 + $0xc] sm:$0xf]
  %v1767 = vld [vmem:[%s1762 + $0x10] sm:$0xf]
  %v1768 = vld [vmem:[%s1762 + $0x14] sm:$0xf]
  %v1769 = vld [vmem:[%s1762 + $0x18] sm:$0xf]
  %v1770 = vld [vmem:[%s1762 + $0x1c] sm:$0xf]
  %v1771 = vld [vmem:[%s1762 + $0x20] sm:$0xf]
  %v1772 = vld [vmem:[%s1762 + $0x24] sm:$0xf]
  %v1773 = vld [vmem:[%s1762 + $0x28] sm:$0xf]
  %v1774 = vld [vmem:[%s1762 + $0x2c] sm:$0xf]
  %v1775 = vld [vmem:[%s1762 + $0x30] sm:$0xf]
  %v1776 = vld [vmem:[%s1762 + $0x34] sm:$0xf]
  %v1777 = vld [vmem:[%s1762 + $0x38] sm:$0xf]
  %v1778 = vld [vmem:[%s1762 + $0x3c] sm:$0xf]
  %v1779 = vld [vmem:[%s1762 + $0x40] sm:$0xf]
  %v1780 = vld [vmem:[%s1762 + $0x44] sm:$0xf]
  %v1781 = vld [vmem:[%s1762 + $0x48] sm:$0xf]
  %v1782 = vld [vmem:[%s1762 + $0x4c] sm:$0xf]
  %v1783 = vld [vmem:[%s1762 + $0x50] sm:$0xf]
  %v1784 = vld [vmem:[%s1762 + $0x54] sm:$0xf]
  %v1785 = vld [vmem:[%s1762 + $0x58] sm:$0xf]
  %v1786 = vld [vmem:[%s1762 + $0x5c] sm:$0xf]
  %v1787 = vld [vmem:[%s1762 + $0x60] sm:$0xf]
  %v1788 = vld [vmem:[%s1762 + $0x64] sm:$0xf]
  %v1789 = vld [vmem:[%s1762 + $0x68] sm:$0xf]
  %v1790 = vld [vmem:[%s1762 + $0x6c] sm:$0xf]
  %v1791 = vld [vmem:[%s1762 + $0x70] sm:$0xf]
  %v1792 = vld [vmem:[%s1762 + $0x74] sm:$0xf]
  %v1793 = vld [vmem:[%s1762 + $0x78] sm:$0xf]
  %v1794 = vld [vmem:[%s1762 + $0x7c] sm:$0xf]
  %v1795 = vld [vmem:[%s1762 + $0x80] sm:$0xf]
  %v1796 = vld [vmem:[%s1762 + $0x84] sm:$0xf]
  %v1797 = vld [vmem:[%s1762 + $0x88] sm:$0xf]
  %v1798 = vld [vmem:[%s1762 + $0x8c] sm:$0xf]
  %v1799 = vld [vmem:[%s1762 + $0x90] sm:$0xf]
  %v1800 = vld [vmem:[%s1762 + $0x94] sm:$0xf]
  %v1801 = vld [vmem:[%s1762 + $0x98] sm:$0xf]
  %v1802 = vld [vmem:[%s1762 + $0x9c] sm:$0xf]
  %v1803 = vld [vmem:[%s6 + $0x5] sm:$0x1]
  %v1804 = vlaneseq
  %v1805 = vshrl.u32 %v1804, 7
  %v1806 = vsub.s32 0, %v1805
  %v1807 = vrot.slane %v1803, %v1806
  %v1848 = vunpack.c.l.b16 %v1763
  %v1849 = vunpack.c.l.b16 %v1764
  %v1850 = vunpack.c.l.b16 %v1765
  %v1851 = vunpack.c.l.b16 %v1766
  %v1852 = vunpack.c.l.b16 %v1767
  %v1853 = vunpack.c.l.b16 %v1768
  %v1854 = vunpack.c.l.b16 %v1769
  %v1855 = vunpack.c.l.b16 %v1770
  %v1856 = vunpack.c.l.b16 %v1771
  %v1857 = vunpack.c.l.b16 %v1772
  %v1858 = vunpack.c.l.b16 %v1773
  %v1859 = vunpack.c.l.b16 %v1774
  %v1860 = vunpack.c.l.b16 %v1775
  %v1861 = vunpack.c.l.b16 %v1776
  %v1862 = vunpack.c.l.b16 %v1777
  %v1863 = vunpack.c.l.b16 %v1778
  %v1864 = vunpack.c.l.b16 %v1779
  %v1865 = vunpack.c.l.b16 %v1780
  %v1866 = vunpack.c.l.b16 %v1781
  %v1867 = vunpack.c.l.b16 %v1782
  %v1868 = vunpack.c.l.b16 %v1783
  %v1869 = vunpack.c.l.b16 %v1784
  %v1870 = vunpack.c.l.b16 %v1785
  %v1871 = vunpack.c.l.b16 %v1786
  %v1872 = vunpack.c.l.b16 %v1787
  %v1873 = vunpack.c.l.b16 %v1788
  %v1874 = vunpack.c.l.b16 %v1789
  %v1875 = vunpack.c.l.b16 %v1790
  %v1876 = vunpack.c.l.b16 %v1791
  %v1877 = vunpack.c.l.b16 %v1792
  %v1878 = vunpack.c.l.b16 %v1793
  %v1879 = vunpack.c.l.b16 %v1794
  %v1880 = vunpack.c.l.b16 %v1795
  %v1881 = vunpack.c.l.b16 %v1796
  %v1882 = vunpack.c.l.b16 %v1797
  %v1883 = vunpack.c.l.b16 %v1798
  %v1884 = vunpack.c.l.b16 %v1799
  %v1885 = vunpack.c.l.b16 %v1800
  %v1886 = vunpack.c.l.b16 %v1801
  %v1887 = vunpack.c.l.b16 %v1802
  %v1888 = vpack.c.b16 %v1849, %v1848
  %v1889 = vpack.c.b16 %v1851, %v1850
  %v1890 = vpack.c.b16 %v1853, %v1852
  %v1891 = vpack.c.b16 %v1855, %v1854
  %v1892 = vpack.c.b16 %v1857, %v1856
  %v1893 = vpack.c.b16 %v1859, %v1858
  %v1894 = vpack.c.b16 %v1861, %v1860
  %v1895 = vpack.c.b16 %v1863, %v1862
  %v1896 = vpack.c.b16 %v1865, %v1864
  %v1897 = vpack.c.b16 %v1867, %v1866
  %v1898 = vpack.c.b16 %v1869, %v1868
  %v1899 = vpack.c.b16 %v1871, %v1870
  %v1900 = vpack.c.b16 %v1873, %v1872
  %v1901 = vpack.c.b16 %v1875, %v1874
  %v1902 = vpack.c.b16 %v1877, %v1876
  %v1903 = vpack.c.b16 %v1879, %v1878
  %v1904 = vpack.c.b16 %v1881, %v1880
  %v1905 = vpack.c.b16 %v1883, %v1882
  %v1906 = vpack.c.b16 %v1885, %v1884
  %v1907 = vpack.c.b16 %v1887, %v1886
  %v1929 = vsel %vm252, %v1758, 0
  %v1932 = vsel %vm252, %v1761, 0
  %1934 = vmatprep.subr.bf16.mxu0 0
  %1935 = vmatpush1.bf16.msra.mxu0 %v1895
  %1936 = vmatprep.subr.bf16.mxu0 0
  %1937 = vmatpush1.bf16.msra.mxu0 %v1894
  %1938 = vmatprep.subr.bf16.mxu0 0
  %1939 = vmatpush1.bf16.msra.mxu0 %v1893
  %1940 = vmatprep.subr.bf16.mxu0 0
  %1941 = vmatpush1.bf16.msra.mxu0 %v1892
  %1942 = vmatprep.subr.bf16.mxu0 0
  %1943 = vmatpush1.bf16.msra.mxu0 %v1891
  %1944 = vmatprep.subr.bf16.mxu0 0
  %1945 = vmatpush1.bf16.msra.mxu0 %v1890
  %1946 = vmatprep.subr.bf16.mxu0 0
  %1947 = vmatpush1.bf16.msra.mxu0 %v1889
  %1948 = vmatprep.subr.bf16.mxu0 0
  %1949 = vmatpush1.bf16.msra.mxu0 %v1888
  %1950 = vmatprep.subr.bf16.mxu0 0
  %1951 = vmatpush2.bf16.msra.mxu0 %v1903
  %1952 = vmatprep.subr.bf16.mxu0 0
  %1953 = vmatpush2.bf16.msra.mxu0 %v1902
  %1954 = vmatprep.subr.bf16.mxu0 0
  %1955 = vmatpush2.bf16.msra.mxu0 %v1901
  %1956 = vmatprep.subr.bf16.mxu0 0
  %1957 = vmatpush2.bf16.msra.mxu0 %v1900
  %1958 = vmatprep.subr.bf16.mxu0 0
  %1959 = vmatpush2.bf16.msra.mxu0 %v1899
  %1960 = vmatprep.subr.bf16.mxu0 0
  %1961 = vmatpush2.bf16.msra.mxu0 %v1898
  %1962 = vmatprep.subr.bf16.mxu0 0
  %1963 = vmatpush2.bf16.msra.mxu0 %v1897
  %1964 = vmatprep.subr.bf16.mxu0 0
  %1965 = vmatpush2.bf16.msra.mxu0 %v1896
  %1966 = vmatprep.mubr.bf16.mxu0 %v1757
  %1967 = vmatmul.mubr.bf16.gmra.mxu0 %v1756
  %v1968 = vpop.f32.mrf.mxu0
  %v1969 = vadd.f32 %v1807, %v1968
  %v1970 = vpop.f32.mrf.mxu0
  %v1971 = vpop.f32.mrf.mxu0
  %v1972 = vadd.f32 %v1807, %v1971
  %v1973 = vpop.f32.mrf.mxu0
  %1974 = vmatprep.mubr.bf16.mxu0 %v1760
  %1975 = vmatmul.mubr.bf16.gmra.mxu0 %v1759
  %v1976 = vpop.f32.mrf.mxu0
  %v1977 = vadd.f32 %v1807, %v1976
  %v1978 = vpop.f32.mrf.mxu0
  %v1979 = vpop.f32.mrf.mxu0
  %v1980 = vpop.f32.mrf.mxu0
  %1981 = vdwg.mxu0
  %1982 = vmatprep.subr.bf16.mxu0 0
  %1983 = vmatpush1.bf16.msra.mxu0 0
  %1984 = vmatprep.subr.bf16.mxu0 0
  %1985 = vmatpush1.bf16.msra.mxu0 0
  %1986 = vmatprep.subr.bf16.mxu0 0
  %1987 = vmatpush1.bf16.msra.mxu0 0
  %1988 = vmatprep.subr.bf16.mxu0 0
  %1989 = vmatpush1.bf16.msra.mxu0 0
  %1990 = vmatprep.subr.bf16.mxu0 0
  %1991 = vmatpush1.bf16.msra.mxu0 %v1907
  %1992 = vmatprep.subr.bf16.mxu0 0
  %1993 = vmatpush1.bf16.msra.mxu0 %v1906
  %1994 = vmatprep.subr.bf16.mxu0 0
  %1995 = vmatpush1.bf16.msra.mxu0 %v1905
  %1996 = vmatprep.subr.bf16.mxu0 0
  %1997 = vmatpush1.bf16.msra.mxu0 %v1904
  %1998 = vmatprep.subr.bf16.mxu0 0
  %1999 = vmatpush2.bf16.msra.mxu0 0
  %2000 = vmatprep.subr.bf16.mxu0 0
  %2001 = vmatpush2.bf16.msra.mxu0 0
  %2002 = vmatprep.subr.bf16.mxu0 0
  %2003 = vmatpush2.bf16.msra.mxu0 0
  %2004 = vmatprep.subr.bf16.mxu0 0
  %2005 = vmatpush2.bf16.msra.mxu0 0
  %2006 = vmatprep.subr.bf16.mxu0 0
  %2007 = vmatpush2.bf16.msra.mxu0 0
  %2008 = vmatprep.subr.bf16.mxu0 0
  %2009 = vmatpush2.bf16.msra.mxu0 0
  %2010 = vmatprep.subr.bf16.mxu0 0
  %2011 = vmatpush2.bf16.msra.mxu0 0
  %2012 = vmatprep.subr.bf16.mxu0 0
  %2013 = vmatpush2.bf16.msra.mxu0 0
  %2014 = vmatprep.mubr.bf16.mxu0 0
  %2015 = vmatmul.mubr.bf16.gmra.mxu0 %v1929
  %v2016 = vpop.f32.mrf.mxu0
  %v2017 = vadd.f32 %v1969, %v2016
  %v2018 = vpop.f32.mrf.mxu0
  %v2019 = vpop.f32.mrf.mxu0
  %v2020 = vadd.f32 %v1972, %v2019
  %v2021 = vpop.f32.mrf.mxu0
  %2022 = vmatprep.mubr.bf16.mxu0 0
  %2023 = vmatmul.mubr.bf16.gmra.mxu0 %v1932
  %v2024 = vpop.f32.mrf.mxu0
  %v2025 = vadd.f32 %v1977, %v2024
  %v2026 = vpop.f32.mrf.mxu0
  %v2027 = vpop.f32.mrf.mxu0
  %v2028 = vpop.f32.mrf.mxu0
  %2029 = vdwg.mxu0
  %v2030 = vmax.f32 %v2017, 0.0
  %v2031 = vmax.f32 %v2020, 0.0
  %v2032 = vmax.f32 %v2025, 0.0
  %v2033 = vld [vmem:[%s6 + $0xc] sm:$0x1]
  %v2034 = vlaneseq
  %v2035 = vshrl.u32 %v2034, 7
  %v2036 = vsub.s32 0, %v2035
  %v2037 = vrot.slane %v2033, %v2036
  %v2038 = vmul.f32 %v2030, %v2037
  %v2039 = vmul.f32 %v2031, %v2037
  %v2040 = vmul.f32 %v2032, %v2037
  %v2041 = vld [vmem:[%s6 + $0x13] sm:$0x1]
  %v2042 = vlaneseq
  %v2043 = vshrl.u32 %v2042, 7
  %v2044 = vsub.s32 0, %v2043
  %v2045 = vrot.slane %v2041, %v2044
  %v2046 = vadd.f32 %v2038, %v2045
  %v2047 = vadd.f32 %v2039, %v2045
  %v2048 = vadd.f32 %v2040, %v2045
  %v2052 = vrot.slane %v2046, 1
  %v2053 = vrot.slane %v2047, 1
  %v2054 = vsel %vm184, %v2052, %v2053
  %v2055 = vrot.slane %v2048, 1
  %v2056 = vsel %vm184, %v2053, %v2055
  %2057 = vrot.lane.b32.xlu0 %v2054, 64
  %v2058 = vpop.permute.xlu0 %2057
  %2059 = vrot.lane.b32.xlu0 %v2056, 64
  %v2060 = vpop.permute.xlu0 %2059
  %2061 = vrot.lane.b32.xlu0 %v2055, 64
  %v2062 = vpop.permute.xlu0 %2061
  %v2066 = vrot.slane %v2046, 2
  %v2067 = vrot.slane %v2047, 2
  %v2068 = vsel %vm204, %v2066, %v2067
  %v2069 = vrot.slane %v2048, 2
  %v2070 = vsel %vm204, %v2067, %v2069
  %v2074 = vrot.slane %v2046, 3
  %v2075 = vrot.slane %v2047, 3
  %v2076 = vsel %vm217, %v2074, %v2075
  %v2077 = vrot.slane %v2048, 3
  %v2078 = vsel %vm217, %v2075, %v2077
  %2079 = vrot.lane.b32.xlu0 %v2076, 64
  %v2080 = vpop.permute.xlu0 %2079
  %2081 = vrot.lane.b32.xlu0 %v2078, 64
  %v2082 = vpop.permute.xlu0 %2081
  %2083 = vrot.lane.b32.xlu0 %v2077, 64
  %v2084 = vpop.permute.xlu0 %2083
  %v2088 = vsel %vm252, %v2046, %v2058
  %v2089 = vsel %vm252, %v2047, %v2060
  %v2090 = vsel %vm252, %v2048, %v2062
  %v2091 = vsel %vm252, %v2068, %v2080
  %v2092 = vsel %vm252, %v2070, %v2082
  %v2093 = vsel %vm252, %v2069, %v2084
  %v2094 = vpack.c.bf16 %v2089, %v2088
  %v2095 = vpack.c.bf16 %v2092, %v2091
  %v2096 = vpack.c.bf16 %v2090, %v2090
  %v2097 = vpack.c.bf16 %v2093, %v2093
  %v2098 = vld [vmem:[%s5] sm:$0xf]
  %v2099 = vld [vmem:[%s5 + $0x4] sm:$0x1]
  %v2102 = vunpack.c.l.b16 %v2098
  %v2103 = vunpack.c.l.b16 %v2099
  %v2104 = vpack.c.b16 %v2103, %v2102
  %vm2105 = vcmask 154624
  %v2107 = vsel %vm2105, %v2104, 0
  %vm2109 = vcmask 1040384
  %v2110 = vsel %vm2109, 4294967295, 65535
  %v2111 = vsel %vm170, %v2110, 0
  %v2113 = vand.u32 %v2096, %v2111
  %v2116 = vand.u32 %v2097, %v2111
  %2118 = vmatprep.subr.bf16.mxu0 0
  %2119 = vmatpush1.bf16.msra.mxu0 0
  %2120 = vmatprep.subr.bf16.mxu0 0
  %2121 = vmatpush1.bf16.msra.mxu0 0
  %2122 = vmatprep.subr.bf16.mxu0 0
  %2123 = vmatpush1.bf16.msra.mxu0 0
  %2124 = vmatprep.subr.bf16.mxu0 0
  %2125 = vmatpush1.bf16.msra.mxu0 0
  %2126 = vmatprep.subr.bf16.mxu0 0
  %2127 = vmatpush1.bf16.msra.mxu0 0
  %2128 = vmatprep.subr.bf16.mxu0 0
  %2129 = vmatpush1.bf16.msra.mxu0 0
  %2130 = vmatprep.subr.bf16.mxu0 %v2116
  %2131 = vmatpush1.bf16.msra.mxu0 %v2113
  %2132 = vmatprep.subr.bf16.mxu0 %v2095
  %2133 = vmatpush1.bf16.msra.mxu0 %v2094
  %2134 = vmatprep.subr.bf16.mxu0 0
  %2135 = vmatpush2.bf16.msra.mxu0 0
  %2136 = vmatprep.subr.bf16.mxu0 0
  %2137 = vmatpush2.bf16.msra.mxu0 0
  %2138 = vmatprep.subr.bf16.mxu0 0
  %2139 = vmatpush2.bf16.msra.mxu0 0
  %2140 = vmatprep.subr.bf16.mxu0 0
  %2141 = vmatpush2.bf16.msra.mxu0 0
  %2142 = vmatprep.subr.bf16.mxu0 0
  %2143 = vmatpush2.bf16.msra.mxu0 0
  %2144 = vmatprep.subr.bf16.mxu0 0
  %2145 = vmatpush2.bf16.msra.mxu0 0
  %2146 = vmatprep.subr.bf16.mxu0 0
  %2147 = vmatpush2.bf16.msra.mxu0 0
  %2148 = vmatprep.subr.bf16.mxu0 0
  %2149 = vmatpush2.bf16.msra.mxu0 0
  %2150 = vmatprep.mubr.bf16.mxu0 0
  %2151 = vmatmul.mubr.bf16.gmra.mxu0 %v2107
  %v2152 = vpop.f32.mrf.mxu0
  %v2153 = vadd.f32 0.0, %v2152
  %v2154 = vpop.f32.mrf.mxu0
  %v2155 = vadd.f32 0.0, %v2154
  %v2156 = vpop.f32.mrf.mxu0
  %v2157 = vadd.f32 0.0, %v2156
  %v2158 = vpop.f32.mrf.mxu0
  %v2159 = vadd.f32 0.0, %v2158
  %2160 = vdwg.mxu0
  %v2161 = vpack.c.bf16 %v2157, %v2153
  %v2162 = vpack.c.bf16 %v2159, %v2155
  %v2163 = vld [vmem:[%s4] sm:$0xf]
  %v2164 = vld [vmem:[%s4 + $0x4] sm:$0xf]
  %v2165 = vld [vmem:[%s4 + $0x8] sm:$0xf]
  %v2166 = vld [vmem:[%s4 + $0xc] sm:$0xf]
  %v2167 = vld [vmem:[%s4 + $0x10] sm:$0xf]
  %v2168 = vld [vmem:[%s4 + $0x14] sm:$0xf]
  %v2169 = vld [vmem:[%s4 + $0x18] sm:$0xf]
  %v2170 = vld [vmem:[%s4 + $0x1c] sm:$0xf]
  %v2171 = vld [vmem:[%s4 + $0x20] sm:$0xf]
  %v2172 = vld [vmem:[%s4 + $0x24] sm:$0xf]
  %v2173 = vld [vmem:[%s4 + $0x28] sm:$0xf]
  %v2174 = vld [vmem:[%s4 + $0x2c] sm:$0xf]
  %v2175 = vld [vmem:[%s4 + $0x30] sm:$0xf]
  %v2176 = vld [vmem:[%s4 + $0x34] sm:$0xf]
  %v2177 = vld [vmem:[%s4 + $0x38] sm:$0xf]
  %v2178 = vld [vmem:[%s4 + $0x3c] sm:$0xf]
  %v2179 = vld [vmem:[%s4 + $0x40] sm:$0xf]
  %v2180 = vld [vmem:[%s4 + $0x44] sm:$0xf]
  %v2181 = vld [vmem:[%s4 + $0x48] sm:$0xf]
  %v2182 = vld [vmem:[%s4 + $0x4c] sm:$0xf]
  %v2183 = vld [vmem:[%s4 + $0x50] sm:$0xf]
  %v2184 = vld [vmem:[%s4 + $0x54] sm:$0xf]
  %v2185 = vld [vmem:[%s4 + $0x58] sm:$0xf]
  %v2186 = vld [vmem:[%s4 + $0x5c] sm:$0xf]
  %v2187 = vld [vmem:[%s4 + $0x60] sm:$0xf]
  %v2188 = vld [vmem:[%s4 + $0x64] sm:$0xf]
  %v2189 = vld [vmem:[%s4 + $0x68] sm:$0xf]
  %v2190 = vld [vmem:[%s4 + $0x6c] sm:$0xf]
  %v2191 = vld [vmem:[%s4 + $0x70] sm:$0xf]
  %v2192 = vld [vmem:[%s4 + $0x74] sm:$0xf]
  %v2193 = vld [vmem:[%s4 + $0x78] sm:$0xf]
  %v2194 = vld [vmem:[%s4 + $0x7c] sm:$0xf]
  %v2195 = vld [vmem:[%s6 + $0x6] sm:$0x1]
  %v2196 = vlaneseq
  %v2197 = vshrl.u32 %v2196, 7
  %v2198 = vsub.s32 0, %v2197
  %v2199 = vrot.slane %v2195, %v2198
  %v2232 = vunpack.c.l.b16 %v2163
  %v2233 = vunpack.c.l.b16 %v2164
  %v2234 = vunpack.c.l.b16 %v2165
  %v2235 = vunpack.c.l.b16 %v2166
  %v2236 = vunpack.c.l.b16 %v2167
  %v2237 = vunpack.c.l.b16 %v2168
  %v2238 = vunpack.c.l.b16 %v2169
  %v2239 = vunpack.c.l.b16 %v2170
  %v2240 = vunpack.c.l.b16 %v2171
  %v2241 = vunpack.c.l.b16 %v2172
  %v2242 = vunpack.c.l.b16 %v2173
  %v2243 = vunpack.c.l.b16 %v2174
  %v2244 = vunpack.c.l.b16 %v2175
  %v2245 = vunpack.c.l.b16 %v2176
  %v2246 = vunpack.c.l.b16 %v2177
  %v2247 = vunpack.c.l.b16 %v2178
  %v2248 = vunpack.c.l.b16 %v2179
  %v2249 = vunpack.c.l.b16 %v2180
  %v2250 = vunpack.c.l.b16 %v2181
  %v2251 = vunpack.c.l.b16 %v2182
  %v2252 = vunpack.c.l.b16 %v2183
  %v2253 = vunpack.c.l.b16 %v2184
  %v2254 = vunpack.c.l.b16 %v2185
  %v2255 = vunpack.c.l.b16 %v2186
  %v2256 = vunpack.c.l.b16 %v2187
  %v2257 = vunpack.c.l.b16 %v2188
  %v2258 = vunpack.c.l.b16 %v2189
  %v2259 = vunpack.c.l.b16 %v2190
  %v2260 = vunpack.c.l.b16 %v2191
  %v2261 = vunpack.c.l.b16 %v2192
  %v2262 = vunpack.c.l.b16 %v2193
  %v2263 = vunpack.c.l.b16 %v2194
  %v2264 = vpack.c.b16 %v2233, %v2232
  %v2265 = vpack.c.b16 %v2235, %v2234
  %v2266 = vpack.c.b16 %v2237, %v2236
  %v2267 = vpack.c.b16 %v2239, %v2238
  %v2268 = vpack.c.b16 %v2241, %v2240
  %v2269 = vpack.c.b16 %v2243, %v2242
  %v2270 = vpack.c.b16 %v2245, %v2244
  %v2271 = vpack.c.b16 %v2247, %v2246
  %v2272 = vpack.c.b16 %v2249, %v2248
  %v2273 = vpack.c.b16 %v2251, %v2250
  %v2274 = vpack.c.b16 %v2253, %v2252
  %v2275 = vpack.c.b16 %v2255, %v2254
  %v2276 = vpack.c.b16 %v2257, %v2256
  %v2277 = vpack.c.b16 %v2259, %v2258
  %v2278 = vpack.c.b16 %v2261, %v2260
  %v2279 = vpack.c.b16 %v2263, %v2262
  %2296 = vmatprep.subr.bf16.mxu0 0
  %2297 = vmatpush1.bf16.msra.mxu0 %v2271
  %2298 = vmatprep.subr.bf16.mxu0 0
  %2299 = vmatpush1.bf16.msra.mxu0 %v2270
  %2300 = vmatprep.subr.bf16.mxu0 0
  %2301 = vmatpush1.bf16.msra.mxu0 %v2269
  %2302 = vmatprep.subr.bf16.mxu0 0
  %2303 = vmatpush1.bf16.msra.mxu0 %v2268
  %2304 = vmatprep.subr.bf16.mxu0 0
  %2305 = vmatpush1.bf16.msra.mxu0 %v2267
  %2306 = vmatprep.subr.bf16.mxu0 0
  %2307 = vmatpush1.bf16.msra.mxu0 %v2266
  %2308 = vmatprep.subr.bf16.mxu0 0
  %2309 = vmatpush1.bf16.msra.mxu0 %v2265
  %2310 = vmatprep.subr.bf16.mxu0 0
  %2311 = vmatpush1.bf16.msra.mxu0 %v2264
  %2312 = vmatprep.subr.bf16.mxu0 0
  %2313 = vmatpush2.bf16.msra.mxu0 %v2279
  %2314 = vmatprep.subr.bf16.mxu0 0
  %2315 = vmatpush2.bf16.msra.mxu0 %v2278
  %2316 = vmatprep.subr.bf16.mxu0 0
  %2317 = vmatpush2.bf16.msra.mxu0 %v2277
  %2318 = vmatprep.subr.bf16.mxu0 0
  %2319 = vmatpush2.bf16.msra.mxu0 %v2276
  %2320 = vmatprep.subr.bf16.mxu0 0
  %2321 = vmatpush2.bf16.msra.mxu0 %v2275
  %2322 = vmatprep.subr.bf16.mxu0 0
  %2323 = vmatpush2.bf16.msra.mxu0 %v2274
  %2324 = vmatprep.subr.bf16.mxu0 0
  %2325 = vmatpush2.bf16.msra.mxu0 %v2273
  %2326 = vmatprep.subr.bf16.mxu0 0
  %2327 = vmatpush2.bf16.msra.mxu0 %v2272
  %2328 = vmatprep.mubr.bf16.mxu0 %v2162
  %2329 = vmatmul.mubr.bf16.gmra.mxu0 %v2161
  %v2330 = vpop.f32.mrf.mxu0
  %v2331 = vadd.f32 %v2199, %v2330
  %v2332 = vpop.f32.mrf.mxu0
  %v2333 = vpop.f32.mrf.mxu0
  %v2334 = vadd.f32 %v2199, %v2333
  %v2335 = vpop.f32.mrf.mxu0
  %2336 = vdwg.mxu0
  %v2337 = vmax.f32 %v2331, 0.0
  %v2338 = vmax.f32 %v2334, 0.0
  %v2339 = vmax.f32 %v2337, 1e-06
  %v2340 = vmax.f32 %v2338, 1e-06
  %v2341 = vlog2.pop %v2339
  %v2342 = vmul.f32 %v2341, 0.6931472
  %v2343 = vlog2.pop %v2340
  %v2344 = vmul.f32 %v2343, 0.6931472
  %v2345 = vld [vmem:[%s6 + $0x17] sm:$0x1]
  %v2346 = vlaneseq
  %v2347 = vshrl.u32 %v2346, 7
  %v2348 = vsub.s32 0, %v2347
  %v2349 = vrot.slane %v2345, %v2348
  %v2350 = vmul.f32 %v2342, %v2349
  %v2351 = vmul.f32 %v2344, %v2349
  %v2352 = vmul.f32 %v2350, 1.442695
  %v2353 = vpow.pop %v2352
  %v2354 = vmul.f32 %v2351, 1.442695
  %v2355 = vpow.pop %v2354
  %v2356 = vsel %vm252, %v2353, 0.0
  %vm2357 = vcmask 517120
  %v2358 = vsel %vm2357, %v2355, 0.0
  %v2359 = vadd.f32 %v2356, %v2358
  %v2360 = vrot.slane %v2359, 4
  %v2361 = vadd.f32 %v2359, %v2360
  %v2362 = vrot.slane %v2361, 2
  %v2363 = vadd.f32 %v2361, %v2362
  %v2364 = vrot.slane %v2363, 1
  %v2365 = vadd.f32 %v2363, %v2364
  %v2366 = vrcp.pop 10.0
  %v2367 = vmul.f32 %v2365, %v2366
  %v2368 = vlog2.pop %v2367
  %v2369 = vmul.f32 %v2368, 0.6931472
  %v2370 = vld [vmem:[%s6 + $0x18] sm:$0x1]
  %v2371 = vmul.f32 %v2369, %v2370
  %v2372 = vmul.f32 %v2371, 1.442695
  %v2373 = vpow.pop %v2372
  %v2374 = vld [vmem:[%s6 + $0x15] sm:$0x1]
  %v2375 = vmul.f32 %v2373, %v2374
  %v2376 = vld [vmem:[%s6 + $0x16] sm:$0x1]
  %v2377 = vadd.f32 %v2375, %v2376
  %v2378 = vld [vmem:[%s1] sm:$0x1]
  %v2379 = vld [vmem:[%s7] sm:$0xf]
  %v2380 = vld [vmem:[%s7 + $0x4] sm:$0xf]
  %v2381 = vld [vmem:[%s7 + $0x8] sm:$0xf]
  %v2382 = vld [vmem:[%s7 + $0xc] sm:$0xf]
  %v2383 = vpack.c.bf16 %v2378, %v2378
  %v2384 = vld [vmem:[%s6 + $0x19] sm:$0x1]
  %v2389 = vunpack.c.l.b16 %v2379
  %v2390 = vunpack.c.l.b16 %v2380
  %v2391 = vunpack.c.l.b16 %v2381
  %v2392 = vunpack.c.l.b16 %v2382
  %v2393 = vpack.c.b16 %v2390, %v2389
  %v2394 = vpack.c.b16 %v2392, %v2391
  %vm2397 = vcmask 261120
  %v2399 = vsel %vm2397, %v2383, 0
  %2401 = vmatprep.subr.bf16.mxu0 0
  %2402 = vmatpush1.bf16.msra.mxu0 0
  %2403 = vmatprep.subr.bf16.mxu0 0
  %2404 = vmatpush1.bf16.msra.mxu0 0
  %2405 = vmatprep.subr.bf16.mxu0 0
  %2406 = vmatpush1.bf16.msra.mxu0 0
  %2407 = vmatprep.subr.bf16.mxu0 0
  %2408 = vmatpush1.bf16.msra.mxu0 0
  %2409 = vmatprep.subr.bf16.mxu0 0
  %2410 = vmatpush1.bf16.msra.mxu0 0
  %2411 = vmatprep.subr.bf16.mxu0 0
  %2412 = vmatpush1.bf16.msra.mxu0 0
  %2413 = vmatprep.subr.bf16.mxu0 0
  %2414 = vmatpush1.bf16.msra.mxu0 %v2394
  %2415 = vmatprep.subr.bf16.mxu0 0
  %2416 = vmatpush1.bf16.msra.mxu0 %v2393
  %2417 = vmatprep.subr.bf16.mxu0 0
  %2418 = vmatpush2.bf16.msra.mxu0 0
  %2419 = vmatprep.subr.bf16.mxu0 0
  %2420 = vmatpush2.bf16.msra.mxu0 0
  %2421 = vmatprep.subr.bf16.mxu0 0
  %2422 = vmatpush2.bf16.msra.mxu0 0
  %2423 = vmatprep.subr.bf16.mxu0 0
  %2424 = vmatpush2.bf16.msra.mxu0 0
  %2425 = vmatprep.subr.bf16.mxu0 0
  %2426 = vmatpush2.bf16.msra.mxu0 0
  %2427 = vmatprep.subr.bf16.mxu0 0
  %2428 = vmatpush2.bf16.msra.mxu0 0
  %2429 = vmatprep.subr.bf16.mxu0 0
  %2430 = vmatpush2.bf16.msra.mxu0 0
  %2431 = vmatprep.subr.bf16.mxu0 0
  %2432 = vmatpush2.bf16.msra.mxu0 0
  %2433 = vmatprep.mubr.bf16.mxu0 0
  %2434 = vmatmul.mubr.bf16.gmra.mxu0 %v2399
  %v2435 = vpop.f32.mrf.mxu0
  %v2436 = vadd.f32 %v2384, %v2435
  %v2437 = vpop.f32.mrf.mxu0
  %v2438 = vpop.f32.mrf.mxu0
  %v2439 = vpop.f32.mrf.mxu0
  %2440 = vdwg.mxu0
  %v2441 = vmax.f32 %v2436, 0.0
  %v2442 = vld [vmem:[%s6 + $0x1d] sm:$0x1]
  %v2443 = vmul.f32 %v2441, %v2442
  %v2444 = vld [vmem:[%s6 + $0x21] sm:$0x1]
  %v2445 = vadd.f32 %v2443, %v2444
  %v2446 = vld [vmem:[%s8] sm:$0xf]
  %v2447 = vld [vmem:[%s8 + $0x4] sm:$0xf]
  %v2448 = vld [vmem:[%s8 + $0x8] sm:$0xf]
  %v2449 = vld [vmem:[%s8 + $0xc] sm:$0xf]
  %v2450 = vld [vmem:[%s8 + $0x10] sm:$0xf]
  %v2451 = vld [vmem:[%s8 + $0x14] sm:$0xf]
  %v2452 = vld [vmem:[%s8 + $0x18] sm:$0xf]
  %v2453 = vld [vmem:[%s8 + $0x1c] sm:$0xf]
  %v2454 = vpack.c.bf16 %v2445, %v2445
  %v2455 = vld [vmem:[%s6 + $0x1a] sm:$0x1]
  %v2464 = vunpack.c.l.b16 %v2446
  %v2465 = vunpack.c.l.b16 %v2447
  %v2466 = vunpack.c.l.b16 %v2448
  %v2467 = vunpack.c.l.b16 %v2449
  %v2468 = vunpack.c.l.b16 %v2450
  %v2469 = vunpack.c.l.b16 %v2451
  %v2470 = vunpack.c.l.b16 %v2452
  %v2471 = vunpack.c.l.b16 %v2453
  %v2472 = vpack.c.b16 %v2465, %v2464
  %v2473 = vpack.c.b16 %v2467, %v2466
  %v2474 = vpack.c.b16 %v2469, %v2468
  %v2475 = vpack.c.b16 %v2471, %v2470
  %v2481 = vsel %vm252, %v2454, 0
  %2483 = vmatprep.subr.bf16.mxu0 0
  %2484 = vmatpush1.bf16.msra.mxu0 0
  %2485 = vmatprep.subr.bf16.mxu0 0
  %2486 = vmatpush1.bf16.msra.mxu0 0
  %2487 = vmatprep.subr.bf16.mxu0 0
  %2488 = vmatpush1.bf16.msra.mxu0 0
  %2489 = vmatprep.subr.bf16.mxu0 0
  %2490 = vmatpush1.bf16.msra.mxu0 0
  %2491 = vmatprep.subr.bf16.mxu0 0
  %2492 = vmatpush1.bf16.msra.mxu0 %v2475
  %2493 = vmatprep.subr.bf16.mxu0 0
  %2494 = vmatpush1.bf16.msra.mxu0 %v2474
  %2495 = vmatprep.subr.bf16.mxu0 0
  %2496 = vmatpush1.bf16.msra.mxu0 %v2473
  %2497 = vmatprep.subr.bf16.mxu0 0
  %2498 = vmatpush1.bf16.msra.mxu0 %v2472
  %2499 = vmatprep.subr.bf16.mxu0 0
  %2500 = vmatpush2.bf16.msra.mxu0 0
  %2501 = vmatprep.subr.bf16.mxu0 0
  %2502 = vmatpush2.bf16.msra.mxu0 0
  %2503 = vmatprep.subr.bf16.mxu0 0
  %2504 = vmatpush2.bf16.msra.mxu0 0
  %2505 = vmatprep.subr.bf16.mxu0 0
  %2506 = vmatpush2.bf16.msra.mxu0 0
  %2507 = vmatprep.subr.bf16.mxu0 0
  %2508 = vmatpush2.bf16.msra.mxu0 0
  %2509 = vmatprep.subr.bf16.mxu0 0
  %2510 = vmatpush2.bf16.msra.mxu0 0
  %2511 = vmatprep.subr.bf16.mxu0 0
  %2512 = vmatpush2.bf16.msra.mxu0 0
  %2513 = vmatprep.subr.bf16.mxu0 0
  %2514 = vmatpush2.bf16.msra.mxu0 0
  %2515 = vmatprep.mubr.bf16.mxu0 0
  %2516 = vmatmul.mubr.bf16.gmra.mxu0 %v2481
  %v2517 = vpop.f32.mrf.mxu0
  %v2518 = vadd.f32 %v2455, %v2517
  %v2519 = vpop.f32.mrf.mxu0
  %v2520 = vpop.f32.mrf.mxu0
  %v2521 = vpop.f32.mrf.mxu0
  %2522 = vdwg.mxu0
  %v2523 = vmax.f32 %v2518, 0.0
  %v2524 = vld [vmem:[%s6 + $0x1e] sm:$0x1]
  %v2525 = vmul.f32 %v2523, %v2524
  %v2526 = vld [vmem:[%s6 + $0x22] sm:$0x1]
  %v2527 = vadd.f32 %v2525, %v2526
  %s2528 = scalar_lea.vmem %s8, 32
  %v2529 = vld [vmem:[%s2528] sm:$0xf]
  %v2530 = vld [vmem:[%s2528 + $0x4] sm:$0xf]
  %v2531 = vld [vmem:[%s2528 + $0x8] sm:$0xf]
  %v2532 = vld [vmem:[%s2528 + $0xc] sm:$0xf]
  %v2533 = vld [vmem:[%s2528 + $0x10] sm:$0xf]
  %v2534 = vld [vmem:[%s2528 + $0x14] sm:$0xf]
  %v2535 = vld [vmem:[%s2528 + $0x18] sm:$0xf]
  %v2536 = vld [vmem:[%s2528 + $0x1c] sm:$0xf]
  %v2537 = vpack.c.bf16 %v2527, %v2527
  %v2538 = vld [vmem:[%s6 + $0x1b] sm:$0x1]
  %v2547 = vunpack.c.l.b16 %v2529
  %v2548 = vunpack.c.l.b16 %v2530
  %v2549 = vunpack.c.l.b16 %v2531
  %v2550 = vunpack.c.l.b16 %v2532
  %v2551 = vunpack.c.l.b16 %v2533
  %v2552 = vunpack.c.l.b16 %v2534
  %v2553 = vunpack.c.l.b16 %v2535
  %v2554 = vunpack.c.l.b16 %v2536
  %v2555 = vpack.c.b16 %v2548, %v2547
  %v2556 = vpack.c.b16 %v2550, %v2549
  %v2557 = vpack.c.b16 %v2552, %v2551
  %v2558 = vpack.c.b16 %v2554, %v2553
  %v2564 = vsel %vm252, %v2537, 0
  %2566 = vmatprep.subr.bf16.mxu0 0
  %2567 = vmatpush1.bf16.msra.mxu0 0
  %2568 = vmatprep.subr.bf16.mxu0 0
  %2569 = vmatpush1.bf16.msra.mxu0 0
  %2570 = vmatprep.subr.bf16.mxu0 0
  %2571 = vmatpush1.bf16.msra.mxu0 0
  %2572 = vmatprep.subr.bf16.mxu0 0
  %2573 = vmatpush1.bf16.msra.mxu0 0
  %2574 = vmatprep.subr.bf16.mxu0 0
  %2575 = vmatpush1.bf16.msra.mxu0 %v2558
  %2576 = vmatprep.subr.bf16.mxu0 0
  %2577 = vmatpush1.bf16.msra.mxu0 %v2557
  %2578 = vmatprep.subr.bf16.mxu0 0
  %2579 = vmatpush1.bf16.msra.mxu0 %v2556
  %2580 = vmatprep.subr.bf16.mxu0 0
  %2581 = vmatpush1.bf16.msra.mxu0 %v2555
  %2582 = vmatprep.subr.bf16.mxu0 0
  %2583 = vmatpush2.bf16.msra.mxu0 0
  %2584 = vmatprep.subr.bf16.mxu0 0
  %2585 = vmatpush2.bf16.msra.mxu0 0
  %2586 = vmatprep.subr.bf16.mxu0 0
  %2587 = vmatpush2.bf16.msra.mxu0 0
  %2588 = vmatprep.subr.bf16.mxu0 0
  %2589 = vmatpush2.bf16.msra.mxu0 0
  %2590 = vmatprep.subr.bf16.mxu0 0
  %2591 = vmatpush2.bf16.msra.mxu0 0
  %2592 = vmatprep.subr.bf16.mxu0 0
  %2593 = vmatpush2.bf16.msra.mxu0 0
  %2594 = vmatprep.subr.bf16.mxu0 0
  %2595 = vmatpush2.bf16.msra.mxu0 0
  %2596 = vmatprep.subr.bf16.mxu0 0
  %2597 = vmatpush2.bf16.msra.mxu0 0
  %2598 = vmatprep.mubr.bf16.mxu0 0
  %2599 = vmatmul.mubr.bf16.gmra.mxu0 %v2564
  %v2600 = vpop.f32.mrf.mxu0
  %v2601 = vadd.f32 %v2538, %v2600
  %v2602 = vpop.f32.mrf.mxu0
  %v2603 = vpop.f32.mrf.mxu0
  %v2604 = vpop.f32.mrf.mxu0
  %2605 = vdwg.mxu0
  %v2606 = vmax.f32 %v2601, 0.0
  %v2607 = vld [vmem:[%s6 + $0x1f] sm:$0x1]
  %v2608 = vmul.f32 %v2606, %v2607
  %v2609 = vld [vmem:[%s6 + $0x23] sm:$0x1]
  %v2610 = vadd.f32 %v2608, %v2609
  %s2611 = scalar_lea.vmem %s8, 64
  %v2612 = vld [vmem:[%s2611] sm:$0xf]
  %v2613 = vld [vmem:[%s2611 + $0x4] sm:$0xf]
  %v2614 = vld [vmem:[%s2611 + $0x8] sm:$0xf]
  %v2615 = vld [vmem:[%s2611 + $0xc] sm:$0xf]
  %v2616 = vld [vmem:[%s2611 + $0x10] sm:$0xf]
  %v2617 = vld [vmem:[%s2611 + $0x14] sm:$0xf]
  %v2618 = vld [vmem:[%s2611 + $0x18] sm:$0xf]
  %v2619 = vld [vmem:[%s2611 + $0x1c] sm:$0xf]
  %v2620 = vpack.c.bf16 %v2610, %v2610
  %v2621 = vld [vmem:[%s6 + $0x1c] sm:$0x1]
  %v2630 = vunpack.c.l.b16 %v2612
  %v2631 = vunpack.c.l.b16 %v2613
  %v2632 = vunpack.c.l.b16 %v2614
  %v2633 = vunpack.c.l.b16 %v2615
  %v2634 = vunpack.c.l.b16 %v2616
  %v2635 = vunpack.c.l.b16 %v2617
  %v2636 = vunpack.c.l.b16 %v2618
  %v2637 = vunpack.c.l.b16 %v2619
  %v2638 = vpack.c.b16 %v2631, %v2630
  %v2639 = vpack.c.b16 %v2633, %v2632
  %v2640 = vpack.c.b16 %v2635, %v2634
  %v2641 = vpack.c.b16 %v2637, %v2636
  %v2647 = vsel %vm252, %v2620, 0
  %2649 = vmatprep.subr.bf16.mxu0 0
  %2650 = vmatpush1.bf16.msra.mxu0 0
  %2651 = vmatprep.subr.bf16.mxu0 0
  %2652 = vmatpush1.bf16.msra.mxu0 0
  %2653 = vmatprep.subr.bf16.mxu0 0
  %2654 = vmatpush1.bf16.msra.mxu0 0
  %2655 = vmatprep.subr.bf16.mxu0 0
  %2656 = vmatpush1.bf16.msra.mxu0 0
  %2657 = vmatprep.subr.bf16.mxu0 0
  %2658 = vmatpush1.bf16.msra.mxu0 %v2641
  %2659 = vmatprep.subr.bf16.mxu0 0
  %2660 = vmatpush1.bf16.msra.mxu0 %v2640
  %2661 = vmatprep.subr.bf16.mxu0 0
  %2662 = vmatpush1.bf16.msra.mxu0 %v2639
  %2663 = vmatprep.subr.bf16.mxu0 0
  %2664 = vmatpush1.bf16.msra.mxu0 %v2638
  %2665 = vmatprep.subr.bf16.mxu0 0
  %2666 = vmatpush2.bf16.msra.mxu0 0
  %2667 = vmatprep.subr.bf16.mxu0 0
  %2668 = vmatpush2.bf16.msra.mxu0 0
  %2669 = vmatprep.subr.bf16.mxu0 0
  %2670 = vmatpush2.bf16.msra.mxu0 0
  %2671 = vmatprep.subr.bf16.mxu0 0
  %2672 = vmatpush2.bf16.msra.mxu0 0
  %2673 = vmatprep.subr.bf16.mxu0 0
  %2674 = vmatpush2.bf16.msra.mxu0 0
  %2675 = vmatprep.subr.bf16.mxu0 0
  %2676 = vmatpush2.bf16.msra.mxu0 0
  %2677 = vmatprep.subr.bf16.mxu0 0
  %2678 = vmatpush2.bf16.msra.mxu0 0
  %2679 = vmatprep.subr.bf16.mxu0 0
  %2680 = vmatpush2.bf16.msra.mxu0 0
  %2681 = vmatprep.mubr.bf16.mxu0 0
  %2682 = vmatmul.mubr.bf16.gmra.mxu0 %v2647
  %v2683 = vpop.f32.mrf.mxu0
  %v2684 = vadd.f32 %v2621, %v2683
  %v2685 = vpop.f32.mrf.mxu0
  %v2686 = vpop.f32.mrf.mxu0
  %v2687 = vpop.f32.mrf.mxu0
  %2688 = vdwg.mxu0
  %v2689 = vmax.f32 %v2684, 0.0
  %v2690 = vld [vmem:[%s6 + $0x20] sm:$0x1]
  %v2691 = vmul.f32 %v2689, %v2690
  %v2692 = vld [vmem:[%s6 + $0x24] sm:$0x1]
  %v2693 = vadd.f32 %v2691, %v2692
  %2695 = vrot.lane.b32.xlu0 %v2693, 64
  %v2696 = vpop.permute.xlu0 %2695
  %v2698 = vsel %vm252, %v2377, %v2696
  %v2699 = vpack.c.bf16 %v2698, %v2698
  %v2700 = vld [vmem:[%s9] sm:$0xf]
  %v2701 = vld [vmem:[%s9 + $0x4] sm:$0xf]
  %v2702 = vld [vmem:[%s9 + $0x8] sm:$0xf]
  %v2703 = vld [vmem:[%s9 + $0xc] sm:$0xf]
  %v2704 = vld [vmem:[%s9 + $0x10] sm:$0xf]
  %v2705 = vld [vmem:[%s9 + $0x14] sm:$0xf]
  %v2706 = vld [vmem:[%s9 + $0x18] sm:$0xf]
  %v2707 = vld [vmem:[%s9 + $0x1c] sm:$0xf]
  %v2708 = vld [vmem:[%s9 + $0x20] sm:$0xf]
  %v2709 = vld [vmem:[%s9 + $0x24] sm:$0xf]
  %v2710 = vld [vmem:[%s9 + $0x28] sm:$0xf]
  %v2711 = vld [vmem:[%s9 + $0x2c] sm:$0xf]
  %v2712 = vld [vmem:[%s9 + $0x30] sm:$0xf]
  %v2713 = vld [vmem:[%s9 + $0x34] sm:$0xf]
  %v2714 = vld [vmem:[%s9 + $0x38] sm:$0xf]
  %v2715 = vld [vmem:[%s9 + $0x3c] sm:$0xf]
  %v2716 = vld [vmem:[%s10] sm:$0x1]
  %v2733 = vunpack.c.l.b16 %v2700
  %v2734 = vunpack.c.l.b16 %v2701
  %v2735 = vunpack.c.l.b16 %v2702
  %v2736 = vunpack.c.l.b16 %v2703
  %v2737 = vunpack.c.l.b16 %v2704
  %v2738 = vunpack.c.l.b16 %v2705
  %v2739 = vunpack.c.l.b16 %v2706
  %v2740 = vunpack.c.l.b16 %v2707
  %v2741 = vunpack.c.l.b16 %v2708
  %v2742 = vunpack.c.l.b16 %v2709
  %v2743 = vunpack.c.l.b16 %v2710
  %v2744 = vunpack.c.l.b16 %v2711
  %v2745 = vunpack.c.l.b16 %v2712
  %v2746 = vunpack.c.l.b16 %v2713
  %v2747 = vunpack.c.l.b16 %v2714
  %v2748 = vunpack.c.l.b16 %v2715
  %v2749 = vpack.c.b16 %v2734, %v2733
  %v2750 = vpack.c.b16 %v2736, %v2735
  %v2751 = vpack.c.b16 %v2738, %v2737
  %v2752 = vpack.c.b16 %v2740, %v2739
  %v2753 = vpack.c.b16 %v2742, %v2741
  %v2754 = vpack.c.b16 %v2744, %v2743
  %v2755 = vpack.c.b16 %v2746, %v2745
  %v2756 = vpack.c.b16 %v2748, %v2747
  %2765 = vmatprep.subr.bf16.mxu0 0
  %2766 = vmatpush1.bf16.msra.mxu0 %v2756
  %2767 = vmatprep.subr.bf16.mxu0 0
  %2768 = vmatpush1.bf16.msra.mxu0 %v2755
  %2769 = vmatprep.subr.bf16.mxu0 0
  %2770 = vmatpush1.bf16.msra.mxu0 %v2754
  %2771 = vmatprep.subr.bf16.mxu0 0
  %2772 = vmatpush1.bf16.msra.mxu0 %v2753
  %2773 = vmatprep.subr.bf16.mxu0 0
  %2774 = vmatpush1.bf16.msra.mxu0 %v2752
  %2775 = vmatprep.subr.bf16.mxu0 0
  %2776 = vmatpush1.bf16.msra.mxu0 %v2751
  %2777 = vmatprep.subr.bf16.mxu0 0
  %2778 = vmatpush1.bf16.msra.mxu0 %v2750
  %2779 = vmatprep.subr.bf16.mxu0 0
  %2780 = vmatpush1.bf16.msra.mxu0 %v2749
  %2781 = vmatprep.subr.bf16.mxu0 0
  %2782 = vmatpush2.bf16.msra.mxu0 0
  %2783 = vmatprep.subr.bf16.mxu0 0
  %2784 = vmatpush2.bf16.msra.mxu0 0
  %2785 = vmatprep.subr.bf16.mxu0 0
  %2786 = vmatpush2.bf16.msra.mxu0 0
  %2787 = vmatprep.subr.bf16.mxu0 0
  %2788 = vmatpush2.bf16.msra.mxu0 0
  %2789 = vmatprep.subr.bf16.mxu0 0
  %2790 = vmatpush2.bf16.msra.mxu0 0
  %2791 = vmatprep.subr.bf16.mxu0 0
  %2792 = vmatpush2.bf16.msra.mxu0 0
  %2793 = vmatprep.subr.bf16.mxu0 0
  %2794 = vmatpush2.bf16.msra.mxu0 0
  %2795 = vmatprep.subr.bf16.mxu0 0
  %2796 = vmatpush2.bf16.msra.mxu0 0
  %2797 = vmatprep.mubr.bf16.mxu0 0
  %2798 = vmatmul.mubr.bf16.gmra.mxu0 %v2699
  %v2799 = vpop.f32.mrf.mxu0
  %v2800 = vadd.f32 %v2716, %v2799
  %v2801 = vpop.f32.mrf.mxu0
  %v2802 = vpop.f32.mrf.mxu0
  %v2803 = vpop.f32.mrf.mxu0
  %2804 = vdwg.mxu0
  %v2805 = vmax.f32 %v2800, 0.0
  %v2806 = vld [vmem:[%s10 + $0x1] sm:$0x1]
  %v2807 = vmul.f32 %v2805, %v2806
  %v2808 = vld [vmem:[%s10 + $0x2] sm:$0x1]
  %v2809 = vadd.f32 %v2807, %v2808
  %v2810 = vpack.c.bf16 %v2809, %v2809
  %v2811 = vld [vmem:[%s11] sm:$0xf]
  %v2812 = vld [vmem:[%s11 + $0x4] sm:$0xf]
  %v2813 = vld [vmem:[%s11 + $0x8] sm:$0xf]
  %v2814 = vld [vmem:[%s11 + $0xc] sm:$0xf]
  %v2815 = vld [vmem:[%s11 + $0x10] sm:$0xf]
  %v2816 = vld [vmem:[%s11 + $0x14] sm:$0xf]
  %v2817 = vld [vmem:[%s11 + $0x18] sm:$0xf]
  %v2818 = vld [vmem:[%s11 + $0x1c] sm:$0xf]
  %v2819 = vld [vmem:[%s11 + $0x20] sm:$0xf]
  %v2820 = vld [vmem:[%s11 + $0x24] sm:$0xf]
  %v2821 = vld [vmem:[%s11 + $0x28] sm:$0xf]
  %v2822 = vld [vmem:[%s11 + $0x2c] sm:$0xf]
  %v2823 = vld [vmem:[%s11 + $0x30] sm:$0xf]
  %v2824 = vld [vmem:[%s11 + $0x34] sm:$0xf]
  %v2825 = vld [vmem:[%s11 + $0x38] sm:$0xf]
  %v2826 = vld [vmem:[%s11 + $0x3c] sm:$0xf]
  %v2827 = vld [vmem:[%s12] sm:$0x1]
  %v2844 = vunpack.c.l.b16 %v2811
  %v2845 = vunpack.c.l.b16 %v2812
  %v2846 = vunpack.c.l.b16 %v2813
  %v2847 = vunpack.c.l.b16 %v2814
  %v2848 = vunpack.c.l.b16 %v2815
  %v2849 = vunpack.c.l.b16 %v2816
  %v2850 = vunpack.c.l.b16 %v2817
  %v2851 = vunpack.c.l.b16 %v2818
  %v2852 = vunpack.c.l.b16 %v2819
  %v2853 = vunpack.c.l.b16 %v2820
  %v2854 = vunpack.c.l.b16 %v2821
  %v2855 = vunpack.c.l.b16 %v2822
  %v2856 = vunpack.c.l.b16 %v2823
  %v2857 = vunpack.c.l.b16 %v2824
  %v2858 = vunpack.c.l.b16 %v2825
  %v2859 = vunpack.c.l.b16 %v2826
  %v2860 = vpack.c.b16 %v2845, %v2844
  %v2861 = vpack.c.b16 %v2847, %v2846
  %v2862 = vpack.c.b16 %v2849, %v2848
  %v2863 = vpack.c.b16 %v2851, %v2850
  %v2864 = vpack.c.b16 %v2853, %v2852
  %v2865 = vpack.c.b16 %v2855, %v2854
  %v2866 = vpack.c.b16 %v2857, %v2856
  %v2867 = vpack.c.b16 %v2859, %v2858
  %2876 = vmatprep.subr.bf16.mxu0 0
  %2877 = vmatpush1.bf16.msra.mxu0 %v2867
  %2878 = vmatprep.subr.bf16.mxu0 0
  %2879 = vmatpush1.bf16.msra.mxu0 %v2866
  %2880 = vmatprep.subr.bf16.mxu0 0
  %2881 = vmatpush1.bf16.msra.mxu0 %v2865
  %2882 = vmatprep.subr.bf16.mxu0 0
  %2883 = vmatpush1.bf16.msra.mxu0 %v2864
  %2884 = vmatprep.subr.bf16.mxu0 0
  %2885 = vmatpush1.bf16.msra.mxu0 %v2863
  %2886 = vmatprep.subr.bf16.mxu0 0
  %2887 = vmatpush1.bf16.msra.mxu0 %v2862
  %2888 = vmatprep.subr.bf16.mxu0 0
  %2889 = vmatpush1.bf16.msra.mxu0 %v2861
  %2890 = vmatprep.subr.bf16.mxu0 0
  %2891 = vmatpush1.bf16.msra.mxu0 %v2860
  %2892 = vmatprep.subr.bf16.mxu0 0
  %2893 = vmatpush2.bf16.msra.mxu0 0
  %2894 = vmatprep.subr.bf16.mxu0 0
  %2895 = vmatpush2.bf16.msra.mxu0 0
  %2896 = vmatprep.subr.bf16.mxu0 0
  %2897 = vmatpush2.bf16.msra.mxu0 0
  %2898 = vmatprep.subr.bf16.mxu0 0
  %2899 = vmatpush2.bf16.msra.mxu0 0
  %2900 = vmatprep.subr.bf16.mxu0 0
  %2901 = vmatpush2.bf16.msra.mxu0 0
  %2902 = vmatprep.subr.bf16.mxu0 0
  %2903 = vmatpush2.bf16.msra.mxu0 0
  %2904 = vmatprep.subr.bf16.mxu0 0
  %2905 = vmatpush2.bf16.msra.mxu0 0
  %2906 = vmatprep.subr.bf16.mxu0 0
  %2907 = vmatpush2.bf16.msra.mxu0 0
  %2908 = vmatprep.mubr.bf16.mxu0 0
  %2909 = vmatmul.mubr.bf16.gmra.mxu0 %v2810
  %v2910 = vpop.f32.mrf.mxu0
  %v2911 = vadd.f32 %v2827, %v2910
  %v2912 = vpop.f32.mrf.mxu0
  %v2913 = vpop.f32.mrf.mxu0
  %v2914 = vpop.f32.mrf.mxu0
  %2915 = vdwg.mxu0
  %2916 = vst [vmem:[%s13] sm:$0x1] %v2911
  // Predicated region
  $region54: #{pallas_forward.1} parent=0 // pred_check
    _
  $region55: #{pallas_forward.1} parent=0 // pred_check_branch
    %2918 = sbr.rel (0) target = $region57
  $region56: #{pallas_forward.1} parent=0 // pred_region
    _
  $region57: #{pallas_forward.1} parent=0 // pred_fallthru
    _
  // Predicated region
  $region58: #{pallas_forward.1} parent=0 // pred_check
    _
  $region59: #{pallas_forward.1} parent=0 // pred_check_branch
    %2920 = sbr.rel (0) target = $region61
  $region60: #{pallas_forward.1} parent=0 // pred_region
    _
  $region61: #{pallas_forward.1} parent=0 // pred_fallthru
    _

</llo_original>
